<compile_context>
chip_gen: v7x
topology: tpu7x:2x2x1
jax: 0.10.0
libtpu: 0.0.40
codegen_flags: <defaults>
</compile_context>

<pallas_src>
import functools

import jax
import jax.numpy as jnp
from jax.experimental import pallas as pl
from jax.experimental.pallas import tpu as pltpu

_BN_EPS = 1e-5
_K = 5      # conv kernel size for both convs
_POOL = 5   # MaxPool2d window / stride


def _softplus(x):
    # nn.Softplus(beta=1, threshold=20): x if x > 20 else log(1 + exp(x))
    return jnp.where(x > 20.0, x, jnp.log1p(jnp.exp(jnp.minimum(x, 20.0))))


def _bn_scale_shift(y, gb, w_out, c, cnt):
    """Training-mode BatchNorm folded into a lane-tiled scale/shift.

    y  : (rows, w_out*c) lane-packed conv output (f32), cols = j*c + channel
    gb : (2, c)  row0 = gamma, row1 = beta
    cnt: number of elements per channel (n * h_out * w_out)
    Returns (scale, shift), each (1, w_out*c), so BN(y) = y*scale + shift.
    """
    cs = jnp.sum(y, axis=0, keepdims=True)        # (1, w_out*c)
    cq = jnp.sum(y * y, axis=0, keepdims=True)    # (1, w_out*c)
    # Per-channel sums: fold the w_out lane groups together (tiny VPU work,
    # replaces the old f32 selector-matrix matmuls).
    s = cs[:, 0:c]
    q = cq[:, 0:c]
    for j in range(1, w_out):
        s = s + cs[:, j * c:(j + 1) * c]
        q = q + cq[:, j * c:(j + 1) * c]
    mean = s / cnt
    var = jnp.maximum(q / cnt - mean * mean, 0.0)        # biased var, clamped
    scale = gb[0:1, :] * jax.lax.rsqrt(var + _BN_EPS)    # (1, c)
    shift = gb[1:2, :] - mean * scale                    # (1, c)
    tile = lambda v: jnp.concatenate([v] * w_out, axis=-1)
    return tile(scale), tile(shift)                      # (1, w_out*c) each


# ----------------------------------------------------------------------------
# Fused kernel: conv1+BN1+softplus -> conv2+BN2 -> maxpool+softplus
# ----------------------------------------------------------------------------
def _fused_kernel(xr_ref, m1_ref, gb1_ref, m2_ref, gb2_ref, out_ref,
                  *, n, h, w, k, pool):
    # xr_ref : (n*h,       w*cin)     f32   lane-packed input image rows
    # m1_ref : (k*w*cin,   w1*c1)     bf16  K-fused banded conv1 GEMM weights
    # m2_ref : (k*w1*c1,   w2*c2)     bf16  K-fused banded conv2 GEMM weights
    # gb*_ref: (2, c)                 f32   row0 = gamma, row1 = beta
    # out_ref: (n*hp,      wp*c2)     f32   pooled + softplus output
    c1 = gb1_ref.shape[1]
    c2 = gb2_ref.shape[1]
    h1, w1 = h - k + 1, w - k + 1
    h2, w2 = h1 - k + 1, w1 - k + 1
    hp, wp = h2 // pool, w2 // pool

    # ---- conv1: one fused-K GEMM over both images (M = n*h1) ---------------
    x_all = xr_ref[...]                                    # read HBM/VMEM once
    wins = []
    for ky in range(k):
        win = jnp.concatenate(
            [x_all[img * h + ky: img * h + ky + h1, :] for img in range(n)],
            axis=0)                                        # (n*h1, w*cin) f32
        wins.append(win.astype(jnp.bfloat16))
    lhs1 = jnp.concatenate(wins, axis=-1)                  # (n*h1, k*w*cin) bf16
    y1 = jnp.dot(lhs1, m1_ref[...],
                 preferred_element_type=jnp.float32)       # (n*h1, w1*c1) f32

    # ---- BatchNorm1 (training mode) + Softplus ------------------------------
    scale1, shift1 = _bn_scale_shift(y1, gb1_ref[...], w1, c1,
                                     float(n * h1 * w1))
    a1 = _softplus(y1 * scale1 + shift1)                   # (n*h1, w1*c1) f32

    # ---- conv2: one fused-K GEMM (M = n*h2) ---------------------------------
    wins2 = []
    for ky in range(k):
        win = jnp.concatenate(
            [a1[img * h1 + ky: img * h1 + ky + h2, :] for img in range(n)],
            axis=0)                                        # (n*h2, w1*c1) f32
        wins2.append(win.astype(jnp.bfloat16))
    lhs2 = jnp.concatenate(wins2, axis=-1)                 # (n*h2, k*w1*c1) bf16
    y2 = jnp.dot(lhs2, m2_ref[...],
                 preferred_element_type=jnp.float32)       # (n*h2, w2*c2) f32

    # ---- BatchNorm2 + MaxPool(pool, floor mode) + Softplus epilogue ---------
    scale2, shift2 = _bn_scale_shift(y2, gb2_ref[...], w2, c2,
                                     float(n * h2 * w2))
    z = y2 * scale2 + shift2                               # (n*h2, w2*c2) f32

    span = w2 - pool + 1        # number of valid horizontal window starts
    rows = []
    for img in range(n):
        for py in range(hp):
            blk = z[img * h2 + py * pool: img * h2 + (py + 1) * pool, :]
            rmax = jnp.max(blk, axis=0, keepdims=True)     # (1, w2*c2)
            # Sliding-window max over width: `pool` lane-shifted views of the
            # whole row (one lane rotate each), not per-(px,dj) sub-slices.
            win = rmax[:, 0: span * c2]
            for dj in range(1, pool):
                win = jnp.maximum(win, rmax[:, dj * c2: dj * c2 + span * c2])
            cols = [win[:, px * pool * c2: px * pool * c2 + c2]
                    for px in range(wp)]
            rows.append(_softplus(jnp.concatenate(cols, axis=-1)))
    # Single dense store of the whole pooled output.
    out_ref[...] = jnp.concatenate(rows, axis=0)           # (n*hp, wp*c2)


# ----------------------------------------------------------------------------
# One-time (per parameter update) weight preprocessing — NOT in the jit path.
# ----------------------------------------------------------------------------
def _band_weights_fused(wt, w_in, w_out):
    """wt: (K, K, Cin, Cout) HWIO -> (K*w_in*Cin, w_out*Cout) banded GEMM matrix.

    M[ky*w_in*Cin + (j+kx)*Cin + ci, j*Cout + co] = wt[ky, kx, ci, co]
    so that a lane-packed LHS row [x(row+ky, jcol, ci) for ky, jcol, ci]
    times M gives the valid-padding conv output row packed as (j, co).
    """
    kk, _, cin, cout = wt.shape
    jout = jnp.arange(w_out)
    mats = []
    for ky in range(kk):
        m = jnp.zeros((w_in, cin, w_out, cout), wt.dtype)
        for kx in range(kk):
            m = m.at[jout + kx, :, jout, :].set(
                jnp.broadcast_to(wt[ky, kx], (w_out, cin, cout)))
        mats.append(m.reshape(w_in * cin, w_out * cout))
    return jnp.concatenate(mats, axis=0)


def prepare_params(params, h, w):
    """Build fused banded conv-GEMM weights + packed BN params ONCE.

    Call this when parameters change, not every step: rebuilding the banded
    matrices per forward was pure HBM/dispatch overhead.
    """
    k = params["w1"].shape[0]
    w1 = w - k + 1
    w2 = w1 - k + 1
    del h  # only the width enters the banded layout
    return {
        "m1": _band_weights_fused(params["w1"], w, w1).astype(jnp.bfloat16),
        "m2": _band_weights_fused(params["w2"], w1, w2).astype(jnp.bfloat16),
        "gb1": jnp.concatenate([params["g1"], params["be1"]],
                               axis=0).astype(jnp.float32),
        "gb2": jnp.concatenate([params["g2"], params["be2"]],
                               axis=0).astype(jnp.float32),
    }


@jax.jit
def space_feature_forward(x_nchw, prep):
    # NCHW -> NHWC so channels ride the lane axis, then lane-pack width*C.
    x = jnp.transpose(x_nchw, (0, 2, 3, 1)).astype(jnp.float32)
    n, h, w, cin = x.shape
    k, pool = _K, _POOL
    h1, w1 = h - k + 1, w - k + 1
    h2, w2 = h1 - k + 1, w1 - k + 1
    hp, wp = h2 // pool, w2 // pool
    c2 = prep["gb2"].shape[1]

    xr = x.reshape(n * h, w * cin)                         # (N*H, W*Cin)

    out2d = pl.pallas_call(
        functools.partial(_fused_kernel, n=n, h=h, w=w, k=k, pool=pool),
        out_shape=jax.ShapeDtypeStruct((n * hp, wp * c2), jnp.float32),
        in_specs=[pl.BlockSpec(memory_space=pltpu.MemorySpace.VMEM)] * 5,
        out_specs=pl.BlockSpec(memory_space=pltpu.MemorySpace.VMEM),
        compiler_params=pltpu.CompilerParams(vmem_limit_bytes=32 * 1024 * 1024),
    )(xr, prep["m1"], prep["gb1"], prep["m2"], prep["gb2"])

    # Tiny relayout back to PyTorch NCHW.
    return jnp.transpose(out2d.reshape(n, hp, wp, c2), (0, 3, 1, 2))


# ----------------------------------------------------------------------------
# Pure-JAX reference of the same training-mode math (for self-check).
# ----------------------------------------------------------------------------
def _reference(x_nchw, params):
    x = jnp.transpose(x_nchw, (0, 2, 3, 1)).astype(jnp.float32)

    def conv(a, wt):
        return jax.lax.conv_general_dilated(
            a, wt, window_strides=(1, 1), padding="VALID",
            dimension_numbers=("NHWC", "HWIO", "NHWC"))

    def bn(a, gamma, beta):
        mean = jnp.mean(a, axis=(0, 1, 2))
        var = jnp.mean(jnp.square(a - mean), axis=(0, 1, 2))
        return ((a - mean) * jax.lax.rsqrt(var + _BN_EPS) * gamma.reshape(-1)
                + beta.reshape(-1))

    a = _softplus(bn(conv(x, params["w1"]), params["g1"], params["be1"]))
    a = bn(conv(a, params["w2"]), params["g2"], params["be2"])
    nb, hh, ww, c = a.shape
    hp, wp = hh // _POOL, ww // _POOL
    a = a[:, :hp * _POOL, :wp * _POOL, :].reshape(nb, hp, _POOL, wp, _POOL, c)
    a = _softplus(jnp.max(a, axis=(2, 4)))
    return jnp.transpose(a, (0, 3, 1, 2))


if __name__ == "__main__":
    key = jax.random.PRNGKey(0)
    ks = jax.random.split(key, 7)
    N, Cin, H, W = 2, 16, 16, 16                 # module requires Cin=16
    x = jax.random.normal(ks[0], (N, Cin, H, W), dtype=jnp.float32)

    # Weights kept as (KH, KW, Cin, Cout) HWIO; a PyTorch state_dict (OIHW)
    # would be converted with w.transpose(2, 3, 1, 0).  Conv biases are
    # omitted: they are exactly cancelled by training-mode BatchNorm.
    # TODO(synk): eval-mode BatchNorm (running mean/var, un-cancelled bias)
    # is not implemented; this kernel reproduces the training-mode forward.
    params = {
        "w1": 0.1 * jax.random.normal(ks[1], (5, 5, 16, 32), jnp.float32),
        "g1": 1.0 + 0.1 * jax.random.normal(ks[2], (1, 32), jnp.float32),
        "be1": 0.1 * jax.random.normal(ks[3], (1, 32), jnp.float32),
        "w2": 0.1 * jax.random.normal(ks[4], (5, 5, 32, 64), jnp.float32),
        "g2": 1.0 + 0.1 * jax.random.normal(ks[5], (1, 64), jnp.float32),
        "be2": 0.1 * jax.random.normal(ks[6], (1, 64), jnp.float32),
    }

    prep = prepare_params(params, H, W)          # one-time weight prep
    out = space_feature_forward(x, prep)
    jax.block_until_ready(out)

    assert out.shape == (N, 64, 1, 1), out.shape  # 16 -> 12 -> 8 conv, pool 5 -> 1
    assert bool(jnp.all(jnp.isfinite(out)))

    # Cross-check against the pure-JAX reference (bf16 MXU vs f32 reference).
    ref = _reference(x, params)
    err = float(jnp.max(jnp.abs(out - ref)))
    assert err < 0.15, f"max abs err {err}"

    print("KERNEL_OK")
</pallas_src>

<mosaic_0001>
module attributes {stable_mosaic.version = 11 : i64} {
  func.func @_fused_kernel(%arg0: memref<32x256xf32, #tpu.memory_space<vmem>>, %arg1: memref<1280x384xbf16, #tpu.memory_space<vmem>>, %arg2: memref<2x32xf32, #tpu.memory_space<vmem>>, %arg3: memref<1920x512xbf16, #tpu.memory_space<vmem>>, %arg4: memref<2x64xf32, #tpu.memory_space<vmem>>, %arg5: memref<2x64xf32, #tpu.memory_space<vmem>>) attributes {dimension_semantics = [], scalar_prefetch = 0 : i64, scratch_operands = 0 : i64, tpu.core_type = #tpu.core_type<tc>} {
    %c0 = arith.constant 0 : index
    %c0_0 = arith.constant 0 : index
    %0 = vector.load %arg0[%c0, %c0_0] : memref<32x256xf32, #tpu.memory_space<vmem>>, vector<32x256xf32>
    %1 = vector.extract_strided_slice %0 {offsets = [0, 0], sizes = [12, 256], strides = [1, 1]} : vector<32x256xf32> to vector<12x256xf32>
    %2 = vector.extract_strided_slice %0 {offsets = [16, 0], sizes = [12, 256], strides = [1, 1]} : vector<32x256xf32> to vector<12x256xf32>
    %3 = tpu.concatenate %1, %2 in 0 : vector<12x256xf32>, vector<12x256xf32> -> vector<24x256xf32>
    %4 = arith.truncf %3 : vector<24x256xf32> to vector<24x256xbf16>
    %5 = vector.extract_strided_slice %0 {offsets = [1, 0], sizes = [12, 256], strides = [1, 1]} : vector<32x256xf32> to vector<12x256xf32>
    %6 = vector.extract_strided_slice %0 {offsets = [17, 0], sizes = [12, 256], strides = [1, 1]} : vector<32x256xf32> to vector<12x256xf32>
    %7 = tpu.concatenate %5, %6 in 0 : vector<12x256xf32>, vector<12x256xf32> -> vector<24x256xf32>
    %8 = arith.truncf %7 : vector<24x256xf32> to vector<24x256xbf16>
    %9 = vector.extract_strided_slice %0 {offsets = [2, 0], sizes = [12, 256], strides = [1, 1]} : vector<32x256xf32> to vector<12x256xf32>
    %10 = vector.extract_strided_slice %0 {offsets = [18, 0], sizes = [12, 256], strides = [1, 1]} : vector<32x256xf32> to vector<12x256xf32>
    %11 = tpu.concatenate %9, %10 in 0 : vector<12x256xf32>, vector<12x256xf32> -> vector<24x256xf32>
    %12 = arith.truncf %11 : vector<24x256xf32> to vector<24x256xbf16>
    %13 = vector.extract_strided_slice %0 {offsets = [3, 0], sizes = [12, 256], strides = [1, 1]} : vector<32x256xf32> to vector<12x256xf32>
    %14 = vector.extract_strided_slice %0 {offsets = [19, 0], sizes = [12, 256], strides = [1, 1]} : vector<32x256xf32> to vector<12x256xf32>
    %15 = tpu.concatenate %13, %14 in 0 : vector<12x256xf32>, vector<12x256xf32> -> vector<24x256xf32>
    %16 = arith.truncf %15 : vector<24x256xf32> to vector<24x256xbf16>
    %17 = vector.extract_strided_slice %0 {offsets = [4, 0], sizes = [12, 256], strides = [1, 1]} : vector<32x256xf32> to vector<12x256xf32>
    %18 = vector.extract_strided_slice %0 {offsets = [20, 0], sizes = [12, 256], strides = [1, 1]} : vector<32x256xf32> to vector<12x256xf32>
    %19 = tpu.concatenate %17, %18 in 0 : vector<12x256xf32>, vector<12x256xf32> -> vector<24x256xf32>
    %20 = arith.truncf %19 : vector<24x256xf32> to vector<24x256xbf16>
    %21 = tpu.concatenate %4, %8, %12, %16, %20 in 1 : vector<24x256xbf16>, vector<24x256xbf16>, vector<24x256xbf16>, vector<24x256xbf16>, vector<24x256xbf16> -> vector<24x1280xbf16>
    %c0_1 = arith.constant 0 : index
    %c0_2 = arith.constant 0 : index
    %22 = vector.load %arg1[%c0_1, %c0_2] : memref<1280x384xbf16, #tpu.memory_space<vmem>>, vector<1280x384xbf16>
    %cst = arith.constant dense<0.000000e+00> : vector<24x384xf32>
    %23 = tpu.matmul %21, %22, %cst {dimension_numbers = #tpu.dot_dimension_numbers<[1], [0], [0], [1], [0, 0, 1, 1], [], []>} : vector<24x1280xbf16>, vector<1280x384xbf16>, vector<24x384xf32> -> vector<24x384xf32>
    %c0_3 = arith.constant 0 : index
    %c0_4 = arith.constant 0 : index
    %24 = vector.load %arg2[%c0_3, %c0_4] : memref<2x32xf32, #tpu.memory_space<vmem>>, vector<2x32xf32>
    %cst_5 = arith.constant dense<0.000000e+00> : vector<384xf32>
    %25 = vector.multi_reduction <add>, %23, %cst_5 [0] : vector<24x384xf32> to vector<384xf32>
    %26 = vector.shape_cast %25 : vector<384xf32> to vector<1x384xf32>
    %27 = arith.mulf %23, %23 : vector<24x384xf32>
    %cst_6 = arith.constant dense<0.000000e+00> : vector<384xf32>
    %28 = vector.multi_reduction <add>, %27, %cst_6 [0] : vector<24x384xf32> to vector<384xf32>
    %29 = vector.shape_cast %28 : vector<384xf32> to vector<1x384xf32>
    %30 = vector.extract_strided_slice %26 {offsets = [0, 0], sizes = [1, 32], strides = [1, 1]} : vector<1x384xf32> to vector<1x32xf32>
    %31 = vector.extract_strided_slice %29 {offsets = [0, 0], sizes = [1, 32], strides = [1, 1]} : vector<1x384xf32> to vector<1x32xf32>
    %32 = vector.extract_strided_slice %26 {offsets = [0, 32], sizes = [1, 32], strides = [1, 1]} : vector<1x384xf32> to vector<1x32xf32>
    %33 = arith.addf %30, %32 : vector<1x32xf32>
    %34 = vector.extract_strided_slice %29 {offsets = [0, 32], sizes = [1, 32], strides = [1, 1]} : vector<1x384xf32> to vector<1x32xf32>
    %35 = arith.addf %31, %34 : vector<1x32xf32>
    %36 = vector.extract_strided_slice %26 {offsets = [0, 64], sizes = [1, 32], strides = [1, 1]} : vector<1x384xf32> to vector<1x32xf32>
    %37 = arith.addf %33, %36 : vector<1x32xf32>
    %38 = vector.extract_strided_slice %29 {offsets = [0, 64], sizes = [1, 32], strides = [1, 1]} : vector<1x384xf32> to vector<1x32xf32>
    %39 = arith.addf %35, %38 : vector<1x32xf32>
    %40 = vector.extract_strided_slice %26 {offsets = [0, 96], sizes = [1, 32], strides = [1, 1]} : vector<1x384xf32> to vector<1x32xf32>
    %41 = arith.addf %37, %40 : vector<1x32xf32>
    %42 = vector.extract_strided_slice %29 {offsets = [0, 96], sizes = [1, 32], strides = [1, 1]} : vector<1x384xf32> to vector<1x32xf32>
    %43 = arith.addf %39, %42 : vector<1x32xf32>
    %44 = vector.extract_strided_slice %26 {offsets = [0, 128], sizes = [1, 32], strides = [1, 1]} : vector<1x384xf32> to vector<1x32xf32>
    %45 = arith.addf %41, %44 : vector<1x32xf32>
    %46 = vector.extract_strided_slice %29 {offsets = [0, 128], sizes = [1, 32], strides = [1, 1]} : vector<1x384xf32> to vector<1x32xf32>
    %47 = arith.addf %43, %46 : vector<1x32xf32>
    %48 = vector.extract_strided_slice %26 {offsets = [0, 160], sizes = [1, 32], strides = [1, 1]} : vector<1x384xf32> to vector<1x32xf32>
    %49 = arith.addf %45, %48 : vector<1x32xf32>
    %50 = vector.extract_strided_slice %29 {offsets = [0, 160], sizes = [1, 32], strides = [1, 1]} : vector<1x384xf32> to vector<1x32xf32>
    %51 = arith.addf %47, %50 : vector<1x32xf32>
    %52 = vector.extract_strided_slice %26 {offsets = [0, 192], sizes = [1, 32], strides = [1, 1]} : vector<1x384xf32> to vector<1x32xf32>
    %53 = arith.addf %49, %52 : vector<1x32xf32>
    %54 = vector.extract_strided_slice %29 {offsets = [0, 192], sizes = [1, 32], strides = [1, 1]} : vector<1x384xf32> to vector<1x32xf32>
    %55 = arith.addf %51, %54 : vector<1x32xf32>
    %56 = vector.extract_strided_slice %26 {offsets = [0, 224], sizes = [1, 32], strides = [1, 1]} : vector<1x384xf32> to vector<1x32xf32>
    %57 = arith.addf %53, %56 : vector<1x32xf32>
    %58 = vector.extract_strided_slice %29 {offsets = [0, 224], sizes = [1, 32], strides = [1, 1]} : vector<1x384xf32> to vector<1x32xf32>
    %59 = arith.addf %55, %58 : vector<1x32xf32>
    %60 = vector.extract_strided_slice %26 {offsets = [0, 256], sizes = [1, 32], strides = [1, 1]} : vector<1x384xf32> to vector<1x32xf32>
    %61 = arith.addf %57, %60 : vector<1x32xf32>
    %62 = vector.extract_strided_slice %29 {offsets = [0, 256], sizes = [1, 32], strides = [1, 1]} : vector<1x384xf32> to vector<1x32xf32>
    %63 = arith.addf %59, %62 : vector<1x32xf32>
    %64 = vector.extract_strided_slice %26 {offsets = [0, 288], sizes = [1, 32], strides = [1, 1]} : vector<1x384xf32> to vector<1x32xf32>
    %65 = arith.addf %61, %64 : vector<1x32xf32>
    %66 = vector.extract_strided_slice %29 {offsets = [0, 288], sizes = [1, 32], strides = [1, 1]} : vector<1x384xf32> to vector<1x32xf32>
    %67 = arith.addf %63, %66 : vector<1x32xf32>
    %68 = vector.extract_strided_slice %26 {offsets = [0, 320], sizes = [1, 32], strides = [1, 1]} : vector<1x384xf32> to vector<1x32xf32>
    %69 = arith.addf %65, %68 : vector<1x32xf32>
    %70 = vector.extract_strided_slice %29 {offsets = [0, 320], sizes = [1, 32], strides = [1, 1]} : vector<1x384xf32> to vector<1x32xf32>
    %71 = arith.addf %67, %70 : vector<1x32xf32>
    %72 = vector.extract_strided_slice %26 {offsets = [0, 352], sizes = [1, 32], strides = [1, 1]} : vector<1x384xf32> to vector<1x32xf32>
    %73 = arith.addf %69, %72 : vector<1x32xf32>
    %74 = vector.extract_strided_slice %29 {offsets = [0, 352], sizes = [1, 32], strides = [1, 1]} : vector<1x384xf32> to vector<1x32xf32>
    %75 = arith.addf %71, %74 : vector<1x32xf32>
    %cst_7 = arith.constant 2.880000e+02 : f32
    %76 = vector.broadcast %cst_7 : f32 to vector<1x32xf32>
    %77 = arith.divf %73, %76 : vector<1x32xf32>
    %cst_8 = arith.constant 2.880000e+02 : f32
    %78 = vector.broadcast %cst_8 : f32 to vector<1x32xf32>
    %79 = arith.divf %75, %78 : vector<1x32xf32>
    %80 = arith.mulf %77, %77 : vector<1x32xf32>
    %81 = arith.subf %79, %80 : vector<1x32xf32>
    %cst_9 = arith.constant 0.000000e+00 : f32
    %82 = vector.broadcast %cst_9 : f32 to vector<1x32xf32>
    %83 = arith.maximumf %81, %82 : vector<1x32xf32>
    %84 = vector.extract_strided_slice %24 {offsets = [0, 0], sizes = [1, 32], strides = [1, 1]} : vector<2x32xf32> to vector<1x32xf32>
    %cst_10 = arith.constant 9.99999974E-6 : f32
    %85 = vector.broadcast %cst_10 : f32 to vector<1x32xf32>
    %86 = arith.addf %83, %85 : vector<1x32xf32>
    %87 = math.rsqrt %86 : vector<1x32xf32>
    %88 = arith.mulf %84, %87 : vector<1x32xf32>
    %89 = vector.extract_strided_slice %24 {offsets = [1, 0], sizes = [1, 32], strides = [1, 1]} : vector<2x32xf32> to vector<1x32xf32>
    %90 = arith.mulf %77, %88 : vector<1x32xf32>
    %91 = arith.subf %89, %90 : vector<1x32xf32>
    %92 = tpu.concatenate %88, %88, %88, %88, %88, %88, %88, %88, %88, %88, %88, %88 in 1 : vector<1x32xf32>, vector<1x32xf32>, vector<1x32xf32>, vector<1x32xf32>, vector<1x32xf32>, vector<1x32xf32>, vector<1x32xf32>, vector<1x32xf32>, vector<1x32xf32>, vector<1x32xf32>, vector<1x32xf32>, vector<1x32xf32> -> vector<1x384xf32>
    %93 = tpu.concatenate %91, %91, %91, %91, %91, %91, %91, %91, %91, %91, %91, %91 in 1 : vector<1x32xf32>, vector<1x32xf32>, vector<1x32xf32>, vector<1x32xf32>, vector<1x32xf32>, vector<1x32xf32>, vector<1x32xf32>, vector<1x32xf32>, vector<1x32xf32>, vector<1x32xf32>, vector<1x32xf32>, vector<1x32xf32> -> vector<1x384xf32>
    %94 = vector.broadcast %92 : vector<1x384xf32> to vector<24x384xf32>
    %95 = arith.mulf %23, %94 : vector<24x384xf32>
    %96 = vector.broadcast %93 : vector<1x384xf32> to vector<24x384xf32>
    %97 = arith.addf %95, %96 : vector<24x384xf32>
    %cst_11 = arith.constant 2.000000e+01 : f32
    %98 = vector.broadcast %cst_11 : f32 to vector<24x384xf32>
    %99 = arith.cmpf ogt, %97, %98 : vector<24x384xf32>
    %cst_12 = arith.constant 2.000000e+01 : f32
    %100 = vector.broadcast %cst_12 : f32 to vector<24x384xf32>
    %101 = arith.minimumf %97, %100 : vector<24x384xf32>
    %102 = math.exp %101 : vector<24x384xf32>
    %103 = math.log1p %102 : vector<24x384xf32>
    %104 = arith.select %99, %97, %103 : vector<24x384xi1>, vector<24x384xf32>
    %105 = vector.extract_strided_slice %104 {offsets = [0, 0], sizes = [8, 384], strides = [1, 1]} : vector<24x384xf32> to vector<8x384xf32>
    %106 = vector.extract_strided_slice %104 {offsets = [12, 0], sizes = [8, 384], strides = [1, 1]} : vector<24x384xf32> to vector<8x384xf32>
    %107 = tpu.concatenate %105, %106 in 0 : vector<8x384xf32>, vector<8x384xf32> -> vector<16x384xf32>
    %108 = arith.truncf %107 : vector<16x384xf32> to vector<16x384xbf16>
    %109 = vector.extract_strided_slice %104 {offsets = [1, 0], sizes = [8, 384], strides = [1, 1]} : vector<24x384xf32> to vector<8x384xf32>
    %110 = vector.extract_strided_slice %104 {offsets = [13, 0], sizes = [8, 384], strides = [1, 1]} : vector<24x384xf32> to vector<8x384xf32>
    %111 = tpu.concatenate %109, %110 in 0 : vector<8x384xf32>, vector<8x384xf32> -> vector<16x384xf32>
    %112 = arith.truncf %111 : vector<16x384xf32> to vector<16x384xbf16>
    %113 = vector.extract_strided_slice %104 {offsets = [2, 0], sizes = [8, 384], strides = [1, 1]} : vector<24x384xf32> to vector<8x384xf32>
    %114 = vector.extract_strided_slice %104 {offsets = [14, 0], sizes = [8, 384], strides = [1, 1]} : vector<24x384xf32> to vector<8x384xf32>
    %115 = tpu.concatenate %113, %114 in 0 : vector<8x384xf32>, vector<8x384xf32> -> vector<16x384xf32>
    %116 = arith.truncf %115 : vector<16x384xf32> to vector<16x384xbf16>
    %117 = vector.extract_strided_slice %104 {offsets = [3, 0], sizes = [8, 384], strides = [1, 1]} : vector<24x384xf32> to vector<8x384xf32>
    %118 = vector.extract_strided_slice %104 {offsets = [15, 0], sizes = [8, 384], strides = [1, 1]} : vector<24x384xf32> to vector<8x384xf32>
    %119 = tpu.concatenate %117, %118 in 0 : vector<8x384xf32>, vector<8x384xf32> -> vector<16x384xf32>
    %120 = arith.truncf %119 : vector<16x384xf32> to vector<16x384xbf16>
    %121 = vector.extract_strided_slice %104 {offsets = [4, 0], sizes = [8, 384], strides = [1, 1]} : vector<24x384xf32> to vector<8x384xf32>
    %122 = vector.extract_strided_slice %104 {offsets = [16, 0], sizes = [8, 384], strides = [1, 1]} : vector<24x384xf32> to vector<8x384xf32>
    %123 = tpu.concatenate %121, %122 in 0 : vector<8x384xf32>, vector<8x384xf32> -> vector<16x384xf32>
    %124 = arith.truncf %123 : vector<16x384xf32> to vector<16x384xbf16>
    %125 = tpu.concatenate %108, %112, %116, %120, %124 in 1 : vector<16x384xbf16>, vector<16x384xbf16>, vector<16x384xbf16>, vector<16x384xbf16>, vector<16x384xbf16> -> vector<16x1920xbf16>
    %c0_13 = arith.constant 0 : index
    %c0_14 = arith.constant 0 : index
    %126 = vector.load %arg3[%c0_13, %c0_14] : memref<1920x512xbf16, #tpu.memory_space<vmem>>, vector<1920x512xbf16>
    %cst_15 = arith.constant dense<0.000000e+00> : vector<16x512xf32>
    %127 = tpu.matmul %125, %126, %cst_15 {dimension_numbers = #tpu.dot_dimension_numbers<[1], [0], [0], [1], [0, 0, 1, 1], [], []>} : vector<16x1920xbf16>, vector<1920x512xbf16>, vector<16x512xf32> -> vector<16x512xf32>
    %c0_16 = arith.constant 0 : index
    %c0_17 = arith.constant 0 : index
    %128 = vector.load %arg4[%c0_16, %c0_17] : memref<2x64xf32, #tpu.memory_space<vmem>>, vector<2x64xf32>
    %cst_18 = arith.constant dense<0.000000e+00> : vector<512xf32>
    %129 = vector.multi_reduction <add>, %127, %cst_18 [0] : vector<16x512xf32> to vector<512xf32>
    %130 = vector.shape_cast %129 : vector<512xf32> to vector<1x512xf32>
    %131 = arith.mulf %127, %127 : vector<16x512xf32>
    %cst_19 = arith.constant dense<0.000000e+00> : vector<512xf32>
    %132 = vector.multi_reduction <add>, %131, %cst_19 [0] : vector<16x512xf32> to vector<512xf32>
    %133 = vector.shape_cast %132 : vector<512xf32> to vector<1x512xf32>
    %134 = vector.extract_strided_slice %130 {offsets = [0, 0], sizes = [1, 64], strides = [1, 1]} : vector<1x512xf32> to vector<1x64xf32>
    %135 = vector.extract_strided_slice %133 {offsets = [0, 0], sizes = [1, 64], strides = [1, 1]} : vector<1x512xf32> to vector<1x64xf32>
    %136 = vector.extract_strided_slice %130 {offsets = [0, 64], sizes = [1, 64], strides = [1, 1]} : vector<1x512xf32> to vector<1x64xf32>
    %137 = arith.addf %134, %136 : vector<1x64xf32>
    %138 = vector.extract_strided_slice %133 {offsets = [0, 64], sizes = [1, 64], strides = [1, 1]} : vector<1x512xf32> to vector<1x64xf32>
    %139 = arith.addf %135, %138 : vector<1x64xf32>
    %140 = vector.extract_strided_slice %130 {offsets = [0, 128], sizes = [1, 64], strides = [1, 1]} : vector<1x512xf32> to vector<1x64xf32>
    %141 = arith.addf %137, %140 : vector<1x64xf32>
    %142 = vector.extract_strided_slice %133 {offsets = [0, 128], sizes = [1, 64], strides = [1, 1]} : vector<1x512xf32> to vector<1x64xf32>
    %143 = arith.addf %139, %142 : vector<1x64xf32>
    %144 = vector.extract_strided_slice %130 {offsets = [0, 192], sizes = [1, 64], strides = [1, 1]} : vector<1x512xf32> to vector<1x64xf32>
    %145 = arith.addf %141, %144 : vector<1x64xf32>
    %146 = vector.extract_strided_slice %133 {offsets = [0, 192], sizes = [1, 64], strides = [1, 1]} : vector<1x512xf32> to vector<1x64xf32>
    %147 = arith.addf %143, %146 : vector<1x64xf32>
    %148 = vector.extract_strided_slice %130 {offsets = [0, 256], sizes = [1, 64], strides = [1, 1]} : vector<1x512xf32> to vector<1x64xf32>
    %149 = arith.addf %145, %148 : vector<1x64xf32>
    %150 = vector.extract_strided_slice %133 {offsets = [0, 256], sizes = [1, 64], strides = [1, 1]} : vector<1x512xf32> to vector<1x64xf32>
    %151 = arith.addf %147, %150 : vector<1x64xf32>
    %152 = vector.extract_strided_slice %130 {offsets = [0, 320], sizes = [1, 64], strides = [1, 1]} : vector<1x512xf32> to vector<1x64xf32>
    %153 = arith.addf %149, %152 : vector<1x64xf32>
    %154 = vector.extract_strided_slice %133 {offsets = [0, 320], sizes = [1, 64], strides = [1, 1]} : vector<1x512xf32> to vector<1x64xf32>
    %155 = arith.addf %151, %154 : vector<1x64xf32>
    %156 = vector.extract_strided_slice %130 {offsets = [0, 384], sizes = [1, 64], strides = [1, 1]} : vector<1x512xf32> to vector<1x64xf32>
    %157 = arith.addf %153, %156 : vector<1x64xf32>
    %158 = vector.extract_strided_slice %133 {offsets = [0, 384], sizes = [1, 64], strides = [1, 1]} : vector<1x512xf32> to vector<1x64xf32>
    %159 = arith.addf %155, %158 : vector<1x64xf32>
    %160 = vector.extract_strided_slice %130 {offsets = [0, 448], sizes = [1, 64], strides = [1, 1]} : vector<1x512xf32> to vector<1x64xf32>
    %161 = arith.addf %157, %160 : vector<1x64xf32>
    %162 = vector.extract_strided_slice %133 {offsets = [0, 448], sizes = [1, 64], strides = [1, 1]} : vector<1x512xf32> to vector<1x64xf32>
    %163 = arith.addf %159, %162 : vector<1x64xf32>
    %cst_20 = arith.constant 1.280000e+02 : f32
    %164 = vector.broadcast %cst_20 : f32 to vector<1x64xf32>
    %165 = arith.divf %161, %164 : vector<1x64xf32>
    %cst_21 = arith.constant 1.280000e+02 : f32
    %166 = vector.broadcast %cst_21 : f32 to vector<1x64xf32>
    %167 = arith.divf %163, %166 : vector<1x64xf32>
    %168 = arith.mulf %165, %165 : vector<1x64xf32>
    %169 = arith.subf %167, %168 : vector<1x64xf32>
    %cst_22 = arith.constant 0.000000e+00 : f32
    %170 = vector.broadcast %cst_22 : f32 to vector<1x64xf32>
    %171 = arith.maximumf %169, %170 : vector<1x64xf32>
    %172 = vector.extract_strided_slice %128 {offsets = [0, 0], sizes = [1, 64], strides = [1, 1]} : vector<2x64xf32> to vector<1x64xf32>
    %cst_23 = arith.constant 9.99999974E-6 : f32
    %173 = vector.broadcast %cst_23 : f32 to vector<1x64xf32>
    %174 = arith.addf %171, %173 : vector<1x64xf32>
    %175 = math.rsqrt %174 : vector<1x64xf32>
    %176 = arith.mulf %172, %175 : vector<1x64xf32>
    %177 = vector.extract_strided_slice %128 {offsets = [1, 0], sizes = [1, 64], strides = [1, 1]} : vector<2x64xf32> to vector<1x64xf32>
    %178 = arith.mulf %165, %176 : vector<1x64xf32>
    %179 = arith.subf %177, %178 : vector<1x64xf32>
    %180 = tpu.concatenate %176, %176, %176, %176, %176, %176, %176, %176 in 1 : vector<1x64xf32>, vector<1x64xf32>, vector<1x64xf32>, vector<1x64xf32>, vector<1x64xf32>, vector<1x64xf32>, vector<1x64xf32>, vector<1x64xf32> -> vector<1x512xf32>
    %181 = tpu.concatenate %179, %179, %179, %179, %179, %179, %179, %179 in 1 : vector<1x64xf32>, vector<1x64xf32>, vector<1x64xf32>, vector<1x64xf32>, vector<1x64xf32>, vector<1x64xf32>, vector<1x64xf32>, vector<1x64xf32> -> vector<1x512xf32>
    %182 = vector.broadcast %180 : vector<1x512xf32> to vector<16x512xf32>
    %183 = arith.mulf %127, %182 : vector<16x512xf32>
    %184 = vector.broadcast %181 : vector<1x512xf32> to vector<16x512xf32>
    %185 = arith.addf %183, %184 : vector<16x512xf32>
    %186 = vector.extract_strided_slice %185 {offsets = [0, 0], sizes = [5, 512], strides = [1, 1]} : vector<16x512xf32> to vector<5x512xf32>
    %cst_24 = arith.constant dense<0xFF800000> : vector<512xf32>
    %187 = vector.multi_reduction <maximumf>, %186, %cst_24 [0] : vector<5x512xf32> to vector<512xf32>
    %188 = vector.shape_cast %187 : vector<512xf32> to vector<1x512xf32>
    %189 = vector.extract_strided_slice %188 {offsets = [0, 0], sizes = [1, 256], strides = [1, 1]} : vector<1x512xf32> to vector<1x256xf32>
    %190 = vector.extract_strided_slice %188 {offsets = [0, 64], sizes = [1, 256], strides = [1, 1]} : vector<1x512xf32> to vector<1x256xf32>
    %191 = arith.maximumf %189, %190 : vector<1x256xf32>
    %192 = vector.extract_strided_slice %188 {offsets = [0, 128], sizes = [1, 256], strides = [1, 1]} : vector<1x512xf32> to vector<1x256xf32>
    %193 = arith.maximumf %191, %192 : vector<1x256xf32>
    %194 = vector.extract_strided_slice %188 {offsets = [0, 192], sizes = [1, 256], strides = [1, 1]} : vector<1x512xf32> to vector<1x256xf32>
    %195 = arith.maximumf %193, %194 : vector<1x256xf32>
    %196 = vector.extract_strided_slice %188 {offsets = [0, 256], sizes = [1, 256], strides = [1, 1]} : vector<1x512xf32> to vector<1x256xf32>
    %197 = arith.maximumf %195, %196 : vector<1x256xf32>
    %198 = vector.extract_strided_slice %197 {offsets = [0, 0], sizes = [1, 64], strides = [1, 1]} : vector<1x256xf32> to vector<1x64xf32>
    %cst_25 = arith.constant 2.000000e+01 : f32
    %199 = vector.broadcast %cst_25 : f32 to vector<1x64xf32>
    %200 = arith.cmpf ogt, %198, %199 : vector<1x64xf32>
    %cst_26 = arith.constant 2.000000e+01 : f32
    %201 = vector.broadcast %cst_26 : f32 to vector<1x64xf32>
    %202 = arith.minimumf %198, %201 : vector<1x64xf32>
    %203 = math.exp %202 : vector<1x64xf32>
    %204 = math.log1p %203 : vector<1x64xf32>
    %205 = arith.select %200, %198, %204 : vector<1x64xi1>, vector<1x64xf32>
    %206 = vector.extract_strided_slice %185 {offsets = [8, 0], sizes = [5, 512], strides = [1, 1]} : vector<16x512xf32> to vector<5x512xf32>
    %cst_27 = arith.constant dense<0xFF800000> : vector<512xf32>
    %207 = vector.multi_reduction <maximumf>, %206, %cst_27 [0] : vector<5x512xf32> to vector<512xf32>
    %208 = vector.shape_cast %207 : vector<512xf32> to vector<1x512xf32>
    %209 = vector.extract_strided_slice %208 {offsets = [0, 0], sizes = [1, 256], strides = [1, 1]} : vector<1x512xf32> to vector<1x256xf32>
    %210 = vector.extract_strided_slice %208 {offsets = [0, 64], sizes = [1, 256], strides = [1, 1]} : vector<1x512xf32> to vector<1x256xf32>
    %211 = arith.maximumf %209, %210 : vector<1x256xf32>
    %212 = vector.extract_strided_slice %208 {offsets = [0, 128], sizes = [1, 256], strides = [1, 1]} : vector<1x512xf32> to vector<1x256xf32>
    %213 = arith.maximumf %211, %212 : vector<1x256xf32>
    %214 = vector.extract_strided_slice %208 {offsets = [0, 192], sizes = [1, 256], strides = [1, 1]} : vector<1x512xf32> to vector<1x256xf32>
    %215 = arith.maximumf %213, %214 : vector<1x256xf32>
    %216 = vector.extract_strided_slice %208 {offsets = [0, 256], sizes = [1, 256], strides = [1, 1]} : vector<1x512xf32> to vector<1x256xf32>
    %217 = arith.maximumf %215, %216 : vector<1x256xf32>
    %218 = vector.extract_strided_slice %217 {offsets = [0, 0], sizes = [1, 64], strides = [1, 1]} : vector<1x256xf32> to vector<1x64xf32>
    %cst_28 = arith.constant 2.000000e+01 : f32
    %219 = vector.broadcast %cst_28 : f32 to vector<1x64xf32>
    %220 = arith.cmpf ogt, %218, %219 : vector<1x64xf32>
    %cst_29 = arith.constant 2.000000e+01 : f32
    %221 = vector.broadcast %cst_29 : f32 to vector<1x64xf32>
    %222 = arith.minimumf %218, %221 : vector<1x64xf32>
    %223 = math.exp %222 : vector<1x64xf32>
    %224 = math.log1p %223 : vector<1x64xf32>
    %225 = arith.select %220, %218, %224 : vector<1x64xi1>, vector<1x64xf32>
    %226 = tpu.concatenate %205, %225 in 0 : vector<1x64xf32>, vector<1x64xf32> -> vector<2x64xf32>
    %c0_30 = arith.constant 0 : index
    %c0_31 = arith.constant 0 : index
    %227 = vector.load %arg5[%c0_30, %c0_31] : memref<2x64xf32, #tpu.memory_space<vmem>>, vector<2x64xf32>
    tpu.vector_store %arg5[%c0_30, %c0_31], %226 {strides = array<i32>} : memref<2x64xf32, #tpu.memory_space<vmem>>, vector<2x64xf32>,
    return
  }
}

</mosaic_0001>

<llo_original>
// kernel: space_feature_forward.1
$region0: #{space_feature_forward.1}
  #allocation0 [shape = 'u32[]', space=smem, size = 0x4, offset = 0x4, fixed_abs, tag = 'smem constant byte address 0x4 - core index']
  #allocation1 [shape = 'u32[144,128]{1,0:T(1,128)}', space=vmem, size = 0x12000, scoped, tag = 'internal scratch']
  %s0 = inlined_call_operand.vmem [shape: f32[32,256], index: 0, kind: input, shape index: {}]
  %s1 = inlined_call_operand.hbm [shape: bf16[1280,384], index: 1, kind: input, shape index: {}]
  %s2 = inlined_call_operand.hbm [shape: f32[2,32], index: 2, kind: input, shape index: {}]
  %s3 = inlined_call_operand.hbm [shape: bf16[1920,512], index: 3, kind: input, shape index: {}]
  %s4 = inlined_call_operand.hbm [shape: f32[2,64], index: 4, kind: input, shape index: {}]
  %s5 = inlined_call_operand.hbm [shape: f32[2,64], index: 5, kind: output, shape index: {}]
  %s6 = sld [smem:[#allocation0]]
  $region46: #{space_feature_forward.1} parent=0
    _
  %s8 = ssub.s32 1, %s6
  %s9 = scalar_select 0, %s8, %s6
  $region1: #{space_feature_forward.1} parent=0
    #allocation2 [shape = 'u8[983040]{0}', space=vmem, size = 0xf0000, scoped, tag = 'input window, operand 1, single buffered']
    #allocation3 [shape = 's32[1]{0}', space=sflag, size = 0x4, scoped, tag = 'scoped memory for space_feature_forward.1']
    #allocation4 [shape = 's32[1]{0}', space=sflag, size = 0x4, scoped, tag = 'scoped memory for space_feature_forward.1']
    #allocation5 [shape = 'u8[1024]{0}', space=vmem, size = 0x400, scoped, tag = 'input window, operand 2, single buffered']
    #allocation6 [shape = 's32[1]{0}', space=sflag, size = 0x4, scoped, tag = 'scoped memory for space_feature_forward.1']
    #allocation7 [shape = 'u8[1966080]{0}', space=vmem, size = 0x1e0000, scoped, tag = 'input window, operand 3, single buffered']
    #allocation8 [shape = 'u8[1024]{0}', space=vmem, size = 0x400, scoped, tag = 'input window, operand 4, single buffered']
    #allocation9 [shape = 's32[1]{0}', space=sflag, size = 0x4, scoped, tag = 'scoped memory for space_feature_forward.1']
    #allocation10 [shape = 'u8[1024]{0}', space=vmem, size = 0x400, scoped, tag = 'output window, operand 0, single buffered']
    %10 = vsyncpa [#allocation3], 0
    %11 = vsyncpa [#allocation6], 0
    %12 = vsyncpa [#allocation9], 0
    %13 = vsyncpa [#allocation4], 0
    // Predicated region
    $region2: #{space_feature_forward.1} parent=1 // pred_check
      _
    $region3: #{space_feature_forward.1} parent=1 // pred_check_branch
      %15 = sbr.rel (0) target = $region5
    $region4: #{space_feature_forward.1} parent=1 // pred_region
      _
    $region5: #{space_feature_forward.1} parent=1 // pred_fallthru
      _
    // Predicated region
    $region6: #{space_feature_forward.1} parent=1 // pred_check
      _
    $region7: #{space_feature_forward.1} parent=1 // pred_check_branch
      %17 = sbr.rel (0) target = $region9
    $region8: #{space_feature_forward.1} parent=1 // pred_region
      %s19 = ssub.s32 30720, 30720
      %20 = vsyncadd [#allocation3], %s19
      %s21 = sshll.u32 [#allocation2], 4
      %s22 = int_to_ptr.vmem [resolvable:$true] %s21
      %27 = dma.hbm_to_vmem [thread:$0]  %s1, 30720, %s22, [#allocation3], 192, 192, 12
    $region9: #{space_feature_forward.1} parent=1 // pred_fallthru
      _
    // Predicated region
    $region10: #{space_feature_forward.1} parent=1 // pred_check
      _
    $region11: #{space_feature_forward.1} parent=1 // pred_check_branch
      %29 = sbr.rel (0) target = $region13
    $region12: #{space_feature_forward.1} parent=1 // pred_region
      %s31 = ssub.s32 32, 32
      %32 = vsyncadd [#allocation6], %s31
      %s34 = sshll.u32 [#allocation5], 4
      %s35 = int_to_ptr.vmem [resolvable:$true] %s34
      %37 = dma.hbm_to_vmem [thread:$0]  %s2, 32, %s35, [#allocation6]
    $region13: #{space_feature_forward.1} parent=1 // pred_fallthru
      _
    // Predicated region
    $region14: #{space_feature_forward.1} parent=1 // pred_check
      _
    $region15: #{space_feature_forward.1} parent=1 // pred_check_branch
      %39 = sbr.rel (0) target = $region17
    $region16: #{space_feature_forward.1} parent=1 // pred_region
      %s41 = ssub.s32 61440, 61440
      %42 = vsyncadd [#allocation6], %s41
      %s43 = sshll.u32 [#allocation7], 4
      %s44 = int_to_ptr.vmem [resolvable:$true] %s43
      %49 = dma.hbm_to_vmem [thread:$0]  %s3, 61440, %s44, [#allocation6], 256, 256, 16
    $region17: #{space_feature_forward.1} parent=1 // pred_fallthru
      _
    // Predicated region
    $region18: #{space_feature_forward.1} parent=1 // pred_check
      _
    $region19: #{space_feature_forward.1} parent=1 // pred_check_branch
      %51 = sbr.rel (0) target = $region21
    $region20: #{space_feature_forward.1} parent=1 // pred_region
      %s53 = ssub.s32 32, 32
      %54 = vsyncadd [#allocation9], %s53
      %s56 = sshll.u32 [#allocation8], 4
      %s57 = int_to_ptr.vmem [resolvable:$true] %s56
      %59 = dma.hbm_to_vmem [thread:$0]  %s4, 32, %s57, [#allocation9]
    $region21: #{space_feature_forward.1} parent=1 // pred_fallthru
      _
    // Predicated region
    $region22: #{space_feature_forward.1} parent=1 // pred_check
      _
    $region23: #{space_feature_forward.1} parent=1 // pred_check_branch
      %61 = sbr.rel (0) target = $region25
    $region24: #{space_feature_forward.1} parent=1 // pred_region
      %62 = dma.done [#allocation3], 30720
    $region25: #{space_feature_forward.1} parent=1 // pred_fallthru
      _
    // Predicated region
    $region26: #{space_feature_forward.1} parent=1 // pred_check
      _
    $region27: #{space_feature_forward.1} parent=1 // pred_check_branch
      %64 = sbr.rel (0) target = $region29
    $region28: #{space_feature_forward.1} parent=1 // pred_region
      %65 = dma.done [#allocation6], 32
    $region29: #{space_feature_forward.1} parent=1 // pred_fallthru
      _
    // Predicated region
    $region30: #{space_feature_forward.1} parent=1 // pred_check
      _
    $region31: #{space_feature_forward.1} parent=1 // pred_check_branch
      %67 = sbr.rel (0) target = $region33
    $region32: #{space_feature_forward.1} parent=1 // pred_region
      %68 = dma.done [#allocation6], 61440
    $region33: #{space_feature_forward.1} parent=1 // pred_fallthru
      _
    // Predicated region
    $region34: #{space_feature_forward.1} parent=1 // pred_check
      _
    $region35: #{space_feature_forward.1} parent=1 // pred_check_branch
      %70 = sbr.rel (0) target = $region37
    $region36: #{space_feature_forward.1} parent=1 // pred_region
      %71 = dma.done [#allocation9], 32
    $region37: #{space_feature_forward.1} parent=1 // pred_fallthru
      _
    %v73 = vld [vmem:[%s0] sm:$0xff]
    %v74 = vld [vmem:[%s0 + $0x8] sm:$0xff]
    %v75 = vld [vmem:[%s0 + $0x10] sm:$0xff]
    %v76 = vld [vmem:[%s0 + $0x18] sm:$0xff]
    %v77 = vld [vmem:[%s0 + $0x20] sm:$0xff]
    %v78 = vld [vmem:[%s0 + $0x28] sm:$0xff]
    %v79 = vld [vmem:[%s0 + $0x30] sm:$0xff]
    %v80 = vld [vmem:[%s0 + $0x38] sm:$0xff]
    %vm85 = vcmask 1043456
    %v86 = vrot.slane %v77, 4
    %v87 = vrot.slane %v78, 4
    %v88 = vrot.slane %v79, 4
    %v89 = vsel %vm85, %v86, %v88
    %v90 = vrot.slane %v80, 4
    %v91 = vsel %vm85, %v87, %v90
    %v96 = vsel %vm85, %v75, %v86
    %v97 = vsel %vm85, %v76, %v87
    %v98 = vpack.c.bf16 %v96, %v73
    %v99 = vpack.c.bf16 %v97, %v74
    %v100 = vpack.c.bf16 %v89, %v89
    %v101 = vpack.c.bf16 %v91, %v91
    %vm106 = vcmask 1046528
    %v107 = vrot.slane %v73, 1
    %v108 = vrot.slane %v75, 1
    %v109 = vsel %vm106, %v107, %v108
    %v110 = vrot.slane %v74, 1
    %v111 = vrot.slane %v76, 1
    %v112 = vsel %vm106, %v110, %v111
    %vm117 = vcmask 1042432
    %v118 = vrot.slane %v77, 5
    %v119 = vrot.slane %v78, 5
    %v120 = vrot.slane %v79, 5
    %v121 = vsel %vm117, %v118, %v120
    %v122 = vrot.slane %v80, 5
    %v123 = vsel %vm117, %v119, %v122
    %v128 = vsel %vm85, %v108, %v118
    %v129 = vsel %vm85, %v111, %v119
    %v130 = vpack.c.bf16 %v128, %v109
    %v131 = vpack.c.bf16 %v129, %v112
    %v132 = vpack.c.bf16 %v121, %v121
    %v133 = vpack.c.bf16 %v123, %v123
    %vm134 = vcmask 1045504
    %v135 = vrot.slane %v73, 2
    %v136 = vrot.slane %v75, 2
    %v137 = vsel %vm134, %v135, %v136
    %v138 = vrot.slane %v74, 2
    %v139 = vrot.slane %v76, 2
    %v140 = vsel %vm134, %v138, %v139
    %vm145 = vcmask 1041408
    %v146 = vrot.slane %v77, 6
    %v147 = vrot.slane %v78, 6
    %v148 = vrot.slane %v79, 6
    %v149 = vsel %vm145, %v146, %v148
    %v150 = vrot.slane %v80, 6
    %v151 = vsel %vm145, %v147, %v150
    %v156 = vsel %vm85, %v136, %v146
    %v157 = vsel %vm85, %v139, %v147
    %v158 = vpack.c.bf16 %v156, %v137
    %v159 = vpack.c.bf16 %v157, %v140
    %v160 = vpack.c.bf16 %v149, %v149
    %v161 = vpack.c.bf16 %v151, %v151
    %vm162 = vcmask 1044480
    %v163 = vrot.slane %v73, 3
    %v164 = vrot.slane %v75, 3
    %v165 = vsel %vm162, %v163, %v164
    %v166 = vrot.slane %v74, 3
    %v167 = vrot.slane %v76, 3
    %v168 = vsel %vm162, %v166, %v167
    %vm173 = vcmask 1040384
    %v174 = vrot.slane %v77, 7
    %v175 = vrot.slane %v78, 7
    %v176 = vrot.slane %v79, 7
    %v177 = vsel %vm173, %v174, %v176
    %v178 = vrot.slane %v80, 7
    %v179 = vsel %vm173, %v175, %v178
    %v184 = vsel %vm85, %v164, %v174
    %v185 = vsel %vm85, %v167, %v175
    %v186 = vpack.c.bf16 %v184, %v165
    %v187 = vpack.c.bf16 %v185, %v168
    %v188 = vpack.c.bf16 %v177, %v177
    %v189 = vpack.c.bf16 %v179, %v179
    %v190 = vrot.slane %v73, 4
    %v191 = vrot.slane %v75, 4
    %v192 = vsel %vm85, %v190, %v191
    %v193 = vrot.slane %v74, 4
    %v194 = vrot.slane %v76, 4
    %v195 = vsel %vm85, %v193, %v194
    %v200 = vsel %vm85, %v191, %v77
    %v201 = vsel %vm85, %v194, %v78
    %v202 = vpack.c.bf16 %v200, %v192
    %v203 = vpack.c.bf16 %v201, %v195
    %v204 = vpack.c.bf16 %v79, %v79
    %v205 = vpack.c.bf16 %v80, %v80
    %v206 = vld [vmem:[#allocation2] sm:$0xff]
    %v207 = vld [vmem:[#allocation2 + $0x8] sm:$0xf]
    %v208 = vld [vmem:[#allocation2 + $0xc] sm:$0xff]
    %v209 = vld [vmem:[#allocation2 + $0x14] sm:$0xf]
    %v210 = vld [vmem:[#allocation2 + $0x18] sm:$0xff]
    %v211 = vld [vmem:[#allocation2 + $0x20] sm:$0xf]
    %v212 = vld [vmem:[#allocation2 + $0x24] sm:$0xff]
    %v213 = vld [vmem:[#allocation2 + $0x2c] sm:$0xf]
    %v214 = vld [vmem:[#allocation2 + $0x30] sm:$0xff]
    %v215 = vld [vmem:[#allocation2 + $0x38] sm:$0xf]
    %v216 = vld [vmem:[#allocation2 + $0x3c] sm:$0xff]
    %v217 = vld [vmem:[#allocation2 + $0x44] sm:$0xf]
    %v218 = vld [vmem:[#allocation2 + $0x48] sm:$0xff]
    %v219 = vld [vmem:[#allocation2 + $0x50] sm:$0xf]
    %v220 = vld [vmem:[#allocation2 + $0x54] sm:$0xff]
    %v221 = vld [vmem:[#allocation2 + $0x5c] sm:$0xf]
    %v222 = vld [vmem:[#allocation2 + $0x60] sm:$0xff]
    %v223 = vld [vmem:[#allocation2 + $0x68] sm:$0xf]
    %v224 = vld [vmem:[#allocation2 + $0x6c] sm:$0xff]
    %v225 = vld [vmem:[#allocation2 + $0x74] sm:$0xf]
    %v226 = vld [vmem:[#allocation2 + $0x78] sm:$0xff]
    %v227 = vld [vmem:[#allocation2 + $0x80] sm:$0xf]
    %v228 = vld [vmem:[#allocation2 + $0x84] sm:$0xff]
    %v229 = vld [vmem:[#allocation2 + $0x8c] sm:$0xf]
    %v230 = vld [vmem:[#allocation2 + $0x90] sm:$0xff]
    %v231 = vld [vmem:[#allocation2 + $0x98] sm:$0xf]
    %v232 = vld [vmem:[#allocation2 + $0x9c] sm:$0xff]
    %v233 = vld [vmem:[#allocation2 + $0xa4] sm:$0xf]
    %v234 = vld [vmem:[#allocation2 + $0xa8] sm:$0xff]
    %v235 = vld [vmem:[#allocation2 + $0xb0] sm:$0xf]
    %v236 = vld [vmem:[#allocation2 + $0xb4] sm:$0xff]
    %v237 = vld [vmem:[#allocation2 + $0xbc] sm:$0xf]
    %v238 = vld [vmem:[#allocation2 + $0xc0] sm:$0xff]
    %v239 = vld [vmem:[#allocation2 + $0xc8] sm:$0xf]
    %v240 = vld [vmem:[#allocation2 + $0xcc] sm:$0xff]
    %v241 = vld [vmem:[#allocation2 + $0xd4] sm:$0xf]
    %v242 = vld [vmem:[#allocation2 + $0xd8] sm:$0xff]
    %v243 = vld [vmem:[#allocation2 + $0xe0] sm:$0xf]
    %v244 = vld [vmem:[#allocation2 + $0xe4] sm:$0xff]
    %v245 = vld [vmem:[#allocation2 + $0xec] sm:$0xf]
    %v246 = vld [vmem:[#allocation2 + $0xf0] sm:$0xff]
    %v247 = vld [vmem:[#allocation2 + $0xf8] sm:$0xf]
    %v248 = vld [vmem:[#allocation2 + $0xfc] sm:$0xff]
    %v249 = vld [vmem:[#allocation2 + $0x104] sm:$0xf]
    %v250 = vld [vmem:[#allocation2 + $0x108] sm:$0xff]
    %v251 = vld [vmem:[#allocation2 + $0x110] sm:$0xf]
    %v252 = vld [vmem:[#allocation2 + $0x114] sm:$0xff]
    %v253 = vld [vmem:[#allocation2 + $0x11c] sm:$0xf]
    %v254 = vld [vmem:[#allocation2 + $0x120] sm:$0xff]
    %v255 = vld [vmem:[#allocation2 + $0x128] sm:$0xf]
    %v256 = vld [vmem:[#allocation2 + $0x12c] sm:$0xff]
    %v257 = vld [vmem:[#allocation2 + $0x134] sm:$0xf]
    %v258 = vld [vmem:[#allocation2 + $0x138] sm:$0xff]
    %v259 = vld [vmem:[#allocation2 + $0x140] sm:$0xf]
    %v260 = vld [vmem:[#allocation2 + $0x144] sm:$0xff]
    %v261 = vld [vmem:[#allocation2 + $0x14c] sm:$0xf]
    %v262 = vld [vmem:[#allocation2 + $0x150] sm:$0xff]
    %v263 = vld [vmem:[#allocation2 + $0x158] sm:$0xf]
    %v264 = vld [vmem:[#allocation2 + $0x15c] sm:$0xff]
    %v265 = vld [vmem:[#allocation2 + $0x164] sm:$0xf]
    %v266 = vld [vmem:[#allocation2 + $0x168] sm:$0xff]
    %v267 = vld [vmem:[#allocation2 + $0x170] sm:$0xf]
    %v268 = vld [vmem:[#allocation2 + $0x174] sm:$0xff]
    %v269 = vld [vmem:[#allocation2 + $0x17c] sm:$0xf]
    %v270 = vld [vmem:[#allocation2 + $0x180] sm:$0xff]
    %v271 = vld [vmem:[#allocation2 + $0x188] sm:$0xf]
    %v272 = vld [vmem:[#allocation2 + $0x18c] sm:$0xff]
    %v273 = vld [vmem:[#allocation2 + $0x194] sm:$0xf]
    %v274 = vld [vmem:[#allocation2 + $0x198] sm:$0xff]
    %v275 = vld [vmem:[#allocation2 + $0x1a0] sm:$0xf]
    %v276 = vld [vmem:[#allocation2 + $0x1a4] sm:$0xff]
    %v277 = vld [vmem:[#allocation2 + $0x1ac] sm:$0xf]
    %v278 = vld [vmem:[#allocation2 + $0x1b0] sm:$0xff]
    %v279 = vld [vmem:[#allocation2 + $0x1b8] sm:$0xf]
    %v280 = vld [vmem:[#allocation2 + $0x1bc] sm:$0xff]
    %v281 = vld [vmem:[#allocation2 + $0x1c4] sm:$0xf]
    %v282 = vld [vmem:[#allocation2 + $0x1c8] sm:$0xff]
    %v283 = vld [vmem:[#allocation2 + $0x1d0] sm:$0xf]
    %v284 = vld [vmem:[#allocation2 + $0x1d4] sm:$0xff]
    %v285 = vld [vmem:[#allocation2 + $0x1dc] sm:$0xf]
    %v286 = vld [vmem:[#allocation2 + $0x1e0] sm:$0xff]
    %v287 = vld [vmem:[#allocation2 + $0x1e8] sm:$0xf]
    %v288 = vld [vmem:[#allocation2 + $0x1ec] sm:$0xff]
    %v289 = vld [vmem:[#allocation2 + $0x1f4] sm:$0xf]
    %v290 = vld [vmem:[#allocation2 + $0x1f8] sm:$0xff]
    %v291 = vld [vmem:[#allocation2 + $0x200] sm:$0xf]
    %v292 = vld [vmem:[#allocation2 + $0x204] sm:$0xff]
    %v293 = vld [vmem:[#allocation2 + $0x20c] sm:$0xf]
    %v294 = vld [vmem:[#allocation2 + $0x210] sm:$0xff]
    %v295 = vld [vmem:[#allocation2 + $0x218] sm:$0xf]
    %v296 = vld [vmem:[#allocation2 + $0x21c] sm:$0xff]
    %v297 = vld [vmem:[#allocation2 + $0x224] sm:$0xf]
    %v298 = vld [vmem:[#allocation2 + $0x228] sm:$0xff]
    %v299 = vld [vmem:[#allocation2 + $0x230] sm:$0xf]
    %v300 = vld [vmem:[#allocation2 + $0x234] sm:$0xff]
    %v301 = vld [vmem:[#allocation2 + $0x23c] sm:$0xf]
    %v302 = vld [vmem:[#allocation2 + $0x240] sm:$0xff]
    %v303 = vld [vmem:[#allocation2 + $0x248] sm:$0xf]
    %v304 = vld [vmem:[#allocation2 + $0x24c] sm:$0xff]
    %v305 = vld [vmem:[#allocation2 + $0x254] sm:$0xf]
    %v306 = vld [vmem:[#allocation2 + $0x258] sm:$0xff]
    %v307 = vld [vmem:[#allocation2 + $0x260] sm:$0xf]
    %v308 = vld [vmem:[#allocation2 + $0x264] sm:$0xff]
    %v309 = vld [vmem:[#allocation2 + $0x26c] sm:$0xf]
    %v310 = vld [vmem:[#allocation2 + $0x270] sm:$0xff]
    %v311 = vld [vmem:[#allocation2 + $0x278] sm:$0xf]
    %v312 = vld [vmem:[#allocation2 + $0x27c] sm:$0xff]
    %v313 = vld [vmem:[#allocation2 + $0x284] sm:$0xf]
    %v314 = vld [vmem:[#allocation2 + $0x288] sm:$0xff]
    %v315 = vld [vmem:[#allocation2 + $0x290] sm:$0xf]
    %v316 = vld [vmem:[#allocation2 + $0x294] sm:$0xff]
    %v317 = vld [vmem:[#allocation2 + $0x29c] sm:$0xf]
    %v318 = vld [vmem:[#allocation2 + $0x2a0] sm:$0xff]
    %v319 = vld [vmem:[#allocation2 + $0x2a8] sm:$0xf]
    %v320 = vld [vmem:[#allocation2 + $0x2ac] sm:$0xff]
    %v321 = vld [vmem:[#allocation2 + $0x2b4] sm:$0xf]
    %v322 = vld [vmem:[#allocation2 + $0x2b8] sm:$0xff]
    %v323 = vld [vmem:[#allocation2 + $0x2c0] sm:$0xf]
    %v324 = vld [vmem:[#allocation2 + $0x2c4] sm:$0xff]
    %v325 = vld [vmem:[#allocation2 + $0x2cc] sm:$0xf]
    %v326 = vld [vmem:[#allocation2 + $0x2d0] sm:$0xff]
    %v327 = vld [vmem:[#allocation2 + $0x2d8] sm:$0xf]
    %v328 = vld [vmem:[#allocation2 + $0x2dc] sm:$0xff]
    %v329 = vld [vmem:[#allocation2 + $0x2e4] sm:$0xf]
    %v330 = vld [vmem:[#allocation2 + $0x2e8] sm:$0xff]
    %v331 = vld [vmem:[#allocation2 + $0x2f0] sm:$0xf]
    %v332 = vld [vmem:[#allocation2 + $0x2f4] sm:$0xff]
    %v333 = vld [vmem:[#allocation2 + $0x2fc] sm:$0xf]
    %v334 = vld [vmem:[#allocation2 + $0x300] sm:$0xff]
    %v335 = vld [vmem:[#allocation2 + $0x308] sm:$0xf]
    %v336 = vld [vmem:[#allocation2 + $0x30c] sm:$0xff]
    %v337 = vld [vmem:[#allocation2 + $0x314] sm:$0xf]
    %v338 = vld [vmem:[#allocation2 + $0x318] sm:$0xff]
    %v339 = vld [vmem:[#allocation2 + $0x320] sm:$0xf]
    %v340 = vld [vmem:[#allocation2 + $0x324] sm:$0xff]
    %v341 = vld [vmem:[#allocation2 + $0x32c] sm:$0xf]
    %v342 = vld [vmem:[#allocation2 + $0x330] sm:$0xff]
    %v343 = vld [vmem:[#allocation2 + $0x338] sm:$0xf]
    %v344 = vld [vmem:[#allocation2 + $0x33c] sm:$0xff]
    %v345 = vld [vmem:[#allocation2 + $0x344] sm:$0xf]
    %v346 = vld [vmem:[#allocation2 + $0x348] sm:$0xff]
    %v347 = vld [vmem:[#allocation2 + $0x350] sm:$0xf]
    %v348 = vld [vmem:[#allocation2 + $0x354] sm:$0xff]
    %v349 = vld [vmem:[#allocation2 + $0x35c] sm:$0xf]
    %v350 = vld [vmem:[#allocation2 + $0x360] sm:$0xff]
    %v351 = vld [vmem:[#allocation2 + $0x368] sm:$0xf]
    %v352 = vld [vmem:[#allocation2 + $0x36c] sm:$0xff]
    %v353 = vld [vmem:[#allocation2 + $0x374] sm:$0xf]
    %v354 = vld [vmem:[#allocation2 + $0x378] sm:$0xff]
    %v355 = vld [vmem:[#allocation2 + $0x380] sm:$0xf]
    %v356 = vld [vmem:[#allocation2 + $0x384] sm:$0xff]
    %v357 = vld [vmem:[#allocation2 + $0x38c] sm:$0xf]
    %v358 = vld [vmem:[#allocation2 + $0x390] sm:$0xff]
    %v359 = vld [vmem:[#allocation2 + $0x398] sm:$0xf]
    %v360 = vld [vmem:[#allocation2 + $0x39c] sm:$0xff]
    %v361 = vld [vmem:[#allocation2 + $0x3a4] sm:$0xf]
    %v362 = vld [vmem:[#allocation2 + $0x3a8] sm:$0xff]
    %v363 = vld [vmem:[#allocation2 + $0x3b0] sm:$0xf]
    %v364 = vld [vmem:[#allocation2 + $0x3b4] sm:$0xff]
    %v365 = vld [vmem:[#allocation2 + $0x3bc] sm:$0xf]
    %v366 = vld [vmem:[#allocation2 + $0x3c0] sm:$0xff]
    %v367 = vld [vmem:[#allocation2 + $0x3c8] sm:$0xf]
    %v368 = vld [vmem:[#allocation2 + $0x3cc] sm:$0xff]
    %v369 = vld [vmem:[#allocation2 + $0x3d4] sm:$0xf]
    %v370 = vld [vmem:[#allocation2 + $0x3d8] sm:$0xff]
    %v371 = vld [vmem:[#allocation2 + $0x3e0] sm:$0xf]
    %v372 = vld [vmem:[#allocation2 + $0x3e4] sm:$0xff]
    %v373 = vld [vmem:[#allocation2 + $0x3ec] sm:$0xf]
    %v374 = vld [vmem:[#allocation2 + $0x3f0] sm:$0xff]
    %v375 = vld [vmem:[#allocation2 + $0x3f8] sm:$0xf]
    %v376 = vld [vmem:[#allocation2 + $0x3fc] sm:$0xff]
    %v377 = vld [vmem:[#allocation2 + $0x404] sm:$0xf]
    %v378 = vld [vmem:[#allocation2 + $0x408] sm:$0xff]
    %v379 = vld [vmem:[#allocation2 + $0x410] sm:$0xf]
    %v380 = vld [vmem:[#allocation2 + $0x414] sm:$0xff]
    %v381 = vld [vmem:[#allocation2 + $0x41c] sm:$0xf]
    %v382 = vld [vmem:[#allocation2 + $0x420] sm:$0xff]
    %v383 = vld [vmem:[#allocation2 + $0x428] sm:$0xf]
    %v384 = vld [vmem:[#allocation2 + $0x42c] sm:$0xff]
    %v385 = vld [vmem:[#allocation2 + $0x434] sm:$0xf]
    %v386 = vld [vmem:[#allocation2 + $0x438] sm:$0xff]
    %v387 = vld [vmem:[#allocation2 + $0x440] sm:$0xf]
    %v388 = vld [vmem:[#allocation2 + $0x444] sm:$0xff]
    %v389 = vld [vmem:[#allocation2 + $0x44c] sm:$0xf]
    %v390 = vld [vmem:[#allocation2 + $0x450] sm:$0xff]
    %v391 = vld [vmem:[#allocation2 + $0x458] sm:$0xf]
    %v392 = vld [vmem:[#allocation2 + $0x45c] sm:$0xff]
    %v393 = vld [vmem:[#allocation2 + $0x464] sm:$0xf]
    %v394 = vld [vmem:[#allocation2 + $0x468] sm:$0xff]
    %v395 = vld [vmem:[#allocation2 + $0x470] sm:$0xf]
    %v396 = vld [vmem:[#allocation2 + $0x474] sm:$0xff]
    %v397 = vld [vmem:[#allocation2 + $0x47c] sm:$0xf]
    %v398 = vld [vmem:[#allocation2 + $0x480] sm:$0xff]
    %v399 = vld [vmem:[#allocation2 + $0x488] sm:$0xf]
    %v400 = vld [vmem:[#allocation2 + $0x48c] sm:$0xff]
    %v401 = vld [vmem:[#allocation2 + $0x494] sm:$0xf]
    %v402 = vld [vmem:[#allocation2 + $0x498] sm:$0xff]
    %v403 = vld [vmem:[#allocation2 + $0x4a0] sm:$0xf]
    %v404 = vld [vmem:[#allocation2 + $0x4a4] sm:$0xff]
    %v405 = vld [vmem:[#allocation2 + $0x4ac] sm:$0xf]
    %v406 = vld [vmem:[#allocation2 + $0x4b0] sm:$0xff]
    %v407 = vld [vmem:[#allocation2 + $0x4b8] sm:$0xf]
    %v408 = vld [vmem:[#allocation2 + $0x4bc] sm:$0xff]
    %v409 = vld [vmem:[#allocation2 + $0x4c4] sm:$0xf]
    %v410 = vld [vmem:[#allocation2 + $0x4c8] sm:$0xff]
    %v411 = vld [vmem:[#allocation2 + $0x4d0] sm:$0xf]
    %v412 = vld [vmem:[#allocation2 + $0x4d4] sm:$0xff]
    %v413 = vld [vmem:[#allocation2 + $0x4dc] sm:$0xf]
    %v414 = vld [vmem:[#allocation2 + $0x4e0] sm:$0xff]
    %v415 = vld [vmem:[#allocation2 + $0x4e8] sm:$0xf]
    %v416 = vld [vmem:[#allocation2 + $0x4ec] sm:$0xff]
    %v417 = vld [vmem:[#allocation2 + $0x4f4] sm:$0xf]
    %v418 = vld [vmem:[#allocation2 + $0x4f8] sm:$0xff]
    %v419 = vld [vmem:[#allocation2 + $0x500] sm:$0xf]
    %v420 = vld [vmem:[#allocation2 + $0x504] sm:$0xff]
    %v421 = vld [vmem:[#allocation2 + $0x50c] sm:$0xf]
    %v422 = vld [vmem:[#allocation2 + $0x510] sm:$0xff]
    %v423 = vld [vmem:[#allocation2 + $0x518] sm:$0xf]
    %v424 = vld [vmem:[#allocation2 + $0x51c] sm:$0xff]
    %v425 = vld [vmem:[#allocation2 + $0x524] sm:$0xf]
    %v426 = vld [vmem:[#allocation2 + $0x528] sm:$0xff]
    %v427 = vld [vmem:[#allocation2 + $0x530] sm:$0xf]
    %v428 = vld [vmem:[#allocation2 + $0x534] sm:$0xff]
    %v429 = vld [vmem:[#allocation2 + $0x53c] sm:$0xf]
    %v430 = vld [vmem:[#allocation2 + $0x540] sm:$0xff]
    %v431 = vld [vmem:[#allocation2 + $0x548] sm:$0xf]
    %v432 = vld [vmem:[#allocation2 + $0x54c] sm:$0xff]
    %v433 = vld [vmem:[#allocation2 + $0x554] sm:$0xf]
    %v434 = vld [vmem:[#allocation2 + $0x558] sm:$0xff]
    %v435 = vld [vmem:[#allocation2 + $0x560] sm:$0xf]
    %v436 = vld [vmem:[#allocation2 + $0x564] sm:$0xff]
    %v437 = vld [vmem:[#allocation2 + $0x56c] sm:$0xf]
    %v438 = vld [vmem:[#allocation2 + $0x570] sm:$0xff]
    %v439 = vld [vmem:[#allocation2 + $0x578] sm:$0xf]
    %v440 = vld [vmem:[#allocation2 + $0x57c] sm:$0xff]
    %v441 = vld [vmem:[#allocation2 + $0x584] sm:$0xf]
    %v442 = vld [vmem:[#allocation2 + $0x588] sm:$0xff]
    %v443 = vld [vmem:[#allocation2 + $0x590] sm:$0xf]
    %v444 = vld [vmem:[#allocation2 + $0x594] sm:$0xff]
    %v445 = vld [vmem:[#allocation2 + $0x59c] sm:$0xf]
    %v446 = vld [vmem:[#allocation2 + $0x5a0] sm:$0xff]
    %v447 = vld [vmem:[#allocation2 + $0x5a8] sm:$0xf]
    %v448 = vld [vmem:[#allocation2 + $0x5ac] sm:$0xff]
    %v449 = vld [vmem:[#allocation2 + $0x5b4] sm:$0xf]
    %v450 = vld [vmem:[#allocation2 + $0x5b8] sm:$0xff]
    %v451 = vld [vmem:[#allocation2 + $0x5c0] sm:$0xf]
    %v452 = vld [vmem:[#allocation2 + $0x5c4] sm:$0xff]
    %v453 = vld [vmem:[#allocation2 + $0x5cc] sm:$0xf]
    %v454 = vld [vmem:[#allocation2 + $0x5d0] sm:$0xff]
    %v455 = vld [vmem:[#allocation2 + $0x5d8] sm:$0xf]
    %v456 = vld [vmem:[#allocation2 + $0x5dc] sm:$0xff]
    %v457 = vld [vmem:[#allocation2 + $0x5e4] sm:$0xf]
    %v458 = vld [vmem:[#allocation2 + $0x5e8] sm:$0xff]
    %v459 = vld [vmem:[#allocation2 + $0x5f0] sm:$0xf]
    %v460 = vld [vmem:[#allocation2 + $0x5f4] sm:$0xff]
    %v461 = vld [vmem:[#allocation2 + $0x5fc] sm:$0xf]
    %v462 = vld [vmem:[#allocation2 + $0x600] sm:$0xff]
    %v463 = vld [vmem:[#allocation2 + $0x608] sm:$0xf]
    %v464 = vld [vmem:[#allocation2 + $0x60c] sm:$0xff]
    %v465 = vld [vmem:[#allocation2 + $0x614] sm:$0xf]
    %v466 = vld [vmem:[#allocation2 + $0x618] sm:$0xff]
    %v467 = vld [vmem:[#allocation2 + $0x620] sm:$0xf]
    %v468 = vld [vmem:[#allocation2 + $0x624] sm:$0xff]
    %v469 = vld [vmem:[#allocation2 + $0x62c] sm:$0xf]
    %v470 = vld [vmem:[#allocation2 + $0x630] sm:$0xff]
    %v471 = vld [vmem:[#allocation2 + $0x638] sm:$0xf]
    %v472 = vld [vmem:[#allocation2 + $0x63c] sm:$0xff]
    %v473 = vld [vmem:[#allocation2 + $0x644] sm:$0xf]
    %v474 = vld [vmem:[#allocation2 + $0x648] sm:$0xff]
    %v475 = vld [vmem:[#allocation2 + $0x650] sm:$0xf]
    %v476 = vld [vmem:[#allocation2 + $0x654] sm:$0xff]
    %v477 = vld [vmem:[#allocation2 + $0x65c] sm:$0xf]
    %v478 = vld [vmem:[#allocation2 + $0x660] sm:$0xff]
    %v479 = vld [vmem:[#allocation2 + $0x668] sm:$0xf]
    %v480 = vld [vmem:[#allocation2 + $0x66c] sm:$0xff]
    %v481 = vld [vmem:[#allocation2 + $0x674] sm:$0xf]
    %v482 = vld [vmem:[#allocation2 + $0x678] sm:$0xff]
    %v483 = vld [vmem:[#allocation2 + $0x680] sm:$0xf]
    %v484 = vld [vmem:[#allocation2 + $0x684] sm:$0xff]
    %v485 = vld [vmem:[#allocation2 + $0x68c] sm:$0xf]
    %v486 = vld [vmem:[#allocation2 + $0x690] sm:$0xff]
    %v487 = vld [vmem:[#allocation2 + $0x698] sm:$0xf]
    %v488 = vld [vmem:[#allocation2 + $0x69c] sm:$0xff]
    %v489 = vld [vmem:[#allocation2 + $0x6a4] sm:$0xf]
    %v490 = vld [vmem:[#allocation2 + $0x6a8] sm:$0xff]
    %v491 = vld [vmem:[#allocation2 + $0x6b0] sm:$0xf]
    %v492 = vld [vmem:[#allocation2 + $0x6b4] sm:$0xff]
    %v493 = vld [vmem:[#allocation2 + $0x6bc] sm:$0xf]
    %v494 = vld [vmem:[#allocation2 + $0x6c0] sm:$0xff]
    %v495 = vld [vmem:[#allocation2 + $0x6c8] sm:$0xf]
    %v496 = vld [vmem:[#allocation2 + $0x6cc] sm:$0xff]
    %v497 = vld [vmem:[#allocation2 + $0x6d4] sm:$0xf]
    %v498 = vld [vmem:[#allocation2 + $0x6d8] sm:$0xff]
    %v499 = vld [vmem:[#allocation2 + $0x6e0] sm:$0xf]
    %v500 = vld [vmem:[#allocation2 + $0x6e4] sm:$0xff]
    %v501 = vld [vmem:[#allocation2 + $0x6ec] sm:$0xf]
    %v502 = vld [vmem:[#allocation2 + $0x6f0] sm:$0xff]
    %v503 = vld [vmem:[#allocation2 + $0x6f8] sm:$0xf]
    %v504 = vld [vmem:[#allocation2 + $0x6fc] sm:$0xff]
    %v505 = vld [vmem:[#allocation2 + $0x704] sm:$0xf]
    %v506 = vld [vmem:[#allocation2 + $0x708] sm:$0xff]
    %v507 = vld [vmem:[#allocation2 + $0x710] sm:$0xf]
    %v508 = vld [vmem:[#allocation2 + $0x714] sm:$0xff]
    %v509 = vld [vmem:[#allocation2 + $0x71c] sm:$0xf]
    %v510 = vld [vmem:[#allocation2 + $0x720] sm:$0xff]
    %v511 = vld [vmem:[#allocation2 + $0x728] sm:$0xf]
    %v512 = vld [vmem:[#allocation2 + $0x72c] sm:$0xff]
    %v513 = vld [vmem:[#allocation2 + $0x734] sm:$0xf]
    %v514 = vld [vmem:[#allocation2 + $0x738] sm:$0xff]
    %v515 = vld [vmem:[#allocation2 + $0x740] sm:$0xf]
    %v516 = vld [vmem:[#allocation2 + $0x744] sm:$0xff]
    %v517 = vld [vmem:[#allocation2 + $0x74c] sm:$0xf]
    %v518 = vld [vmem:[#allocation2 + $0x750] sm:$0xff]
    %v519 = vld [vmem:[#allocation2 + $0x758] sm:$0xf]
    %v520 = vld [vmem:[#allocation2 + $0x75c] sm:$0xff]
    %v521 = vld [vmem:[#allocation2 + $0x764] sm:$0xf]
    %v522 = vld [vmem:[#allocation2 + $0x768] sm:$0xff]
    %v523 = vld [vmem:[#allocation2 + $0x770] sm:$0xf]
    %v524 = vld [vmem:[#allocation2 + $0x774] sm:$0xff]
    %v525 = vld [vmem:[#allocation2 + $0x77c] sm:$0xf]
    %v846 = vunpack.c.l.b16 %v206
    %v847 = vunpack.c.h.b16 %v206
    %v848 = vunpack.c.l.b16 %v207
    %v849 = vunpack.c.l.b16 %v208
    %v850 = vunpack.c.h.b16 %v208
    %v851 = vunpack.c.l.b16 %v209
    %v852 = vunpack.c.l.b16 %v210
    %v853 = vunpack.c.h.b16 %v210
    %v854 = vunpack.c.l.b16 %v211
    %v855 = vunpack.c.l.b16 %v212
    %v856 = vunpack.c.h.b16 %v212
    %v857 = vunpack.c.l.b16 %v213
    %v858 = vunpack.c.l.b16 %v214
    %v859 = vunpack.c.h.b16 %v214
    %v860 = vunpack.c.l.b16 %v215
    %v861 = vunpack.c.l.b16 %v216
    %v862 = vunpack.c.h.b16 %v216
    %v863 = vunpack.c.l.b16 %v217
    %v864 = vunpack.c.l.b16 %v218
    %v865 = vunpack.c.h.b16 %v218
    %v866 = vunpack.c.l.b16 %v219
    %v867 = vunpack.c.l.b16 %v220
    %v868 = vunpack.c.h.b16 %v220
    %v869 = vunpack.c.l.b16 %v221
    %v870 = vunpack.c.l.b16 %v222
    %v871 = vunpack.c.h.b16 %v222
    %v872 = vunpack.c.l.b16 %v223
    %v873 = vunpack.c.l.b16 %v224
    %v874 = vunpack.c.h.b16 %v224
    %v875 = vunpack.c.l.b16 %v225
    %v876 = vunpack.c.l.b16 %v226
    %v877 = vunpack.c.h.b16 %v226
    %v878 = vunpack.c.l.b16 %v227
    %v879 = vunpack.c.l.b16 %v228
    %v880 = vunpack.c.h.b16 %v228
    %v881 = vunpack.c.l.b16 %v229
    %v882 = vunpack.c.l.b16 %v230
    %v883 = vunpack.c.h.b16 %v230
    %v884 = vunpack.c.l.b16 %v231
    %v885 = vunpack.c.l.b16 %v232
    %v886 = vunpack.c.h.b16 %v232
    %v887 = vunpack.c.l.b16 %v233
    %v888 = vunpack.c.l.b16 %v234
    %v889 = vunpack.c.h.b16 %v234
    %v890 = vunpack.c.l.b16 %v235
    %v891 = vunpack.c.l.b16 %v236
    %v892 = vunpack.c.h.b16 %v236
    %v893 = vunpack.c.l.b16 %v237
    %v894 = vunpack.c.l.b16 %v238
    %v895 = vunpack.c.h.b16 %v238
    %v896 = vunpack.c.l.b16 %v239
    %v897 = vunpack.c.l.b16 %v240
    %v898 = vunpack.c.h.b16 %v240
    %v899 = vunpack.c.l.b16 %v241
    %v900 = vunpack.c.l.b16 %v242
    %v901 = vunpack.c.h.b16 %v242
    %v902 = vunpack.c.l.b16 %v243
    %v903 = vunpack.c.l.b16 %v244
    %v904 = vunpack.c.h.b16 %v244
    %v905 = vunpack.c.l.b16 %v245
    %v906 = vunpack.c.l.b16 %v246
    %v907 = vunpack.c.h.b16 %v246
    %v908 = vunpack.c.l.b16 %v247
    %v909 = vunpack.c.l.b16 %v248
    %v910 = vunpack.c.h.b16 %v248
    %v911 = vunpack.c.l.b16 %v249
    %v912 = vunpack.c.l.b16 %v250
    %v913 = vunpack.c.h.b16 %v250
    %v914 = vunpack.c.l.b16 %v251
    %v915 = vunpack.c.l.b16 %v252
    %v916 = vunpack.c.h.b16 %v252
    %v917 = vunpack.c.l.b16 %v253
    %v918 = vunpack.c.l.b16 %v254
    %v919 = vunpack.c.h.b16 %v254
    %v920 = vunpack.c.l.b16 %v255
    %v921 = vunpack.c.l.b16 %v256
    %v922 = vunpack.c.h.b16 %v256
    %v923 = vunpack.c.l.b16 %v257
    %v924 = vunpack.c.l.b16 %v258
    %v925 = vunpack.c.h.b16 %v258
    %v926 = vunpack.c.l.b16 %v259
    %v927 = vunpack.c.l.b16 %v260
    %v928 = vunpack.c.h.b16 %v260
    %v929 = vunpack.c.l.b16 %v261
    %v930 = vunpack.c.l.b16 %v262
    %v931 = vunpack.c.h.b16 %v262
    %v932 = vunpack.c.l.b16 %v263
    %v933 = vunpack.c.l.b16 %v264
    %v934 = vunpack.c.h.b16 %v264
    %v935 = vunpack.c.l.b16 %v265
    %v936 = vunpack.c.l.b16 %v266
    %v937 = vunpack.c.h.b16 %v266
    %v938 = vunpack.c.l.b16 %v267
    %v939 = vunpack.c.l.b16 %v268
    %v940 = vunpack.c.h.b16 %v268
    %v941 = vunpack.c.l.b16 %v269
    %v942 = vunpack.c.l.b16 %v270
    %v943 = vunpack.c.h.b16 %v270
    %v944 = vunpack.c.l.b16 %v271
    %v945 = vunpack.c.l.b16 %v272
    %v946 = vunpack.c.h.b16 %v272
    %v947 = vunpack.c.l.b16 %v273
    %v948 = vunpack.c.l.b16 %v274
    %v949 = vunpack.c.h.b16 %v274
    %v950 = vunpack.c.l.b16 %v275
    %v951 = vunpack.c.l.b16 %v276
    %v952 = vunpack.c.h.b16 %v276
    %v953 = vunpack.c.l.b16 %v277
    %v954 = vunpack.c.l.b16 %v278
    %v955 = vunpack.c.h.b16 %v278
    %v956 = vunpack.c.l.b16 %v279
    %v957 = vunpack.c.l.b16 %v280
    %v958 = vunpack.c.h.b16 %v280
    %v959 = vunpack.c.l.b16 %v281
    %v960 = vunpack.c.l.b16 %v282
    %v961 = vunpack.c.h.b16 %v282
    %v962 = vunpack.c.l.b16 %v283
    %v963 = vunpack.c.l.b16 %v284
    %v964 = vunpack.c.h.b16 %v284
    %v965 = vunpack.c.l.b16 %v285
    %v966 = vunpack.c.l.b16 %v286
    %v967 = vunpack.c.h.b16 %v286
    %v968 = vunpack.c.l.b16 %v287
    %v969 = vunpack.c.l.b16 %v288
    %v970 = vunpack.c.h.b16 %v288
    %v971 = vunpack.c.l.b16 %v289
    %v972 = vunpack.c.l.b16 %v290
    %v973 = vunpack.c.h.b16 %v290
    %v974 = vunpack.c.l.b16 %v291
    %v975 = vunpack.c.l.b16 %v292
    %v976 = vunpack.c.h.b16 %v292
    %v977 = vunpack.c.l.b16 %v293
    %v978 = vunpack.c.l.b16 %v294
    %v979 = vunpack.c.h.b16 %v294
    %v980 = vunpack.c.l.b16 %v295
    %v981 = vunpack.c.l.b16 %v296
    %v982 = vunpack.c.h.b16 %v296
    %v983 = vunpack.c.l.b16 %v297
    %v984 = vunpack.c.l.b16 %v298
    %v985 = vunpack.c.h.b16 %v298
    %v986 = vunpack.c.l.b16 %v299
    %v987 = vunpack.c.l.b16 %v300
    %v988 = vunpack.c.h.b16 %v300
    %v989 = vunpack.c.l.b16 %v301
    %v990 = vunpack.c.l.b16 %v302
    %v991 = vunpack.c.h.b16 %v302
    %v992 = vunpack.c.l.b16 %v303
    %v993 = vunpack.c.l.b16 %v304
    %v994 = vunpack.c.h.b16 %v304
    %v995 = vunpack.c.l.b16 %v305
    %v996 = vunpack.c.l.b16 %v306
    %v997 = vunpack.c.h.b16 %v306
    %v998 = vunpack.c.l.b16 %v307
    %v999 = vunpack.c.l.b16 %v308
    %v1000 = vunpack.c.h.b16 %v308
    %v1001 = vunpack.c.l.b16 %v309
    %v1002 = vunpack.c.l.b16 %v310
    %v1003 = vunpack.c.h.b16 %v310
    %v1004 = vunpack.c.l.b16 %v311
    %v1005 = vunpack.c.l.b16 %v312
    %v1006 = vunpack.c.h.b16 %v312
    %v1007 = vunpack.c.l.b16 %v313
    %v1008 = vunpack.c.l.b16 %v314
    %v1009 = vunpack.c.h.b16 %v314
    %v1010 = vunpack.c.l.b16 %v315
    %v1011 = vunpack.c.l.b16 %v316
    %v1012 = vunpack.c.h.b16 %v316
    %v1013 = vunpack.c.l.b16 %v317
    %v1014 = vunpack.c.l.b16 %v318
    %v1015 = vunpack.c.h.b16 %v318
    %v1016 = vunpack.c.l.b16 %v319
    %v1017 = vunpack.c.l.b16 %v320
    %v1018 = vunpack.c.h.b16 %v320
    %v1019 = vunpack.c.l.b16 %v321
    %v1020 = vunpack.c.l.b16 %v322
    %v1021 = vunpack.c.h.b16 %v322
    %v1022 = vunpack.c.l.b16 %v323
    %v1023 = vunpack.c.l.b16 %v324
    %v1024 = vunpack.c.h.b16 %v324
    %v1025 = vunpack.c.l.b16 %v325
    %v1026 = vunpack.c.l.b16 %v326
    %v1027 = vunpack.c.h.b16 %v326
    %v1028 = vunpack.c.l.b16 %v327
    %v1029 = vunpack.c.l.b16 %v328
    %v1030 = vunpack.c.h.b16 %v328
    %v1031 = vunpack.c.l.b16 %v329
    %v1032 = vunpack.c.l.b16 %v330
    %v1033 = vunpack.c.h.b16 %v330
    %v1034 = vunpack.c.l.b16 %v331
    %v1035 = vunpack.c.l.b16 %v332
    %v1036 = vunpack.c.h.b16 %v332
    %v1037 = vunpack.c.l.b16 %v333
    %v1038 = vunpack.c.l.b16 %v334
    %v1039 = vunpack.c.h.b16 %v334
    %v1040 = vunpack.c.l.b16 %v335
    %v1041 = vunpack.c.l.b16 %v336
    %v1042 = vunpack.c.h.b16 %v336
    %v1043 = vunpack.c.l.b16 %v337
    %v1044 = vunpack.c.l.b16 %v338
    %v1045 = vunpack.c.h.b16 %v338
    %v1046 = vunpack.c.l.b16 %v339
    %v1047 = vunpack.c.l.b16 %v340
    %v1048 = vunpack.c.h.b16 %v340
    %v1049 = vunpack.c.l.b16 %v341
    %v1050 = vunpack.c.l.b16 %v342
    %v1051 = vunpack.c.h.b16 %v342
    %v1052 = vunpack.c.l.b16 %v343
    %v1053 = vunpack.c.l.b16 %v344
    %v1054 = vunpack.c.h.b16 %v344
    %v1055 = vunpack.c.l.b16 %v345
    %v1056 = vunpack.c.l.b16 %v346
    %v1057 = vunpack.c.h.b16 %v346
    %v1058 = vunpack.c.l.b16 %v347
    %v1059 = vunpack.c.l.b16 %v348
    %v1060 = vunpack.c.h.b16 %v348
    %v1061 = vunpack.c.l.b16 %v349
    %v1062 = vunpack.c.l.b16 %v350
    %v1063 = vunpack.c.h.b16 %v350
    %v1064 = vunpack.c.l.b16 %v351
    %v1065 = vunpack.c.l.b16 %v352
    %v1066 = vunpack.c.h.b16 %v352
    %v1067 = vunpack.c.l.b16 %v353
    %v1068 = vunpack.c.l.b16 %v354
    %v1069 = vunpack.c.h.b16 %v354
    %v1070 = vunpack.c.l.b16 %v355
    %v1071 = vunpack.c.l.b16 %v356
    %v1072 = vunpack.c.h.b16 %v356
    %v1073 = vunpack.c.l.b16 %v357
    %v1074 = vunpack.c.l.b16 %v358
    %v1075 = vunpack.c.h.b16 %v358
    %v1076 = vunpack.c.l.b16 %v359
    %v1077 = vunpack.c.l.b16 %v360
    %v1078 = vunpack.c.h.b16 %v360
    %v1079 = vunpack.c.l.b16 %v361
    %v1080 = vunpack.c.l.b16 %v362
    %v1081 = vunpack.c.h.b16 %v362
    %v1082 = vunpack.c.l.b16 %v363
    %v1083 = vunpack.c.l.b16 %v364
    %v1084 = vunpack.c.h.b16 %v364
    %v1085 = vunpack.c.l.b16 %v365
    %v1086 = vunpack.c.l.b16 %v366
    %v1087 = vunpack.c.h.b16 %v366
    %v1088 = vunpack.c.l.b16 %v367
    %v1089 = vunpack.c.l.b16 %v368
    %v1090 = vunpack.c.h.b16 %v368
    %v1091 = vunpack.c.l.b16 %v369
    %v1092 = vunpack.c.l.b16 %v370
    %v1093 = vunpack.c.h.b16 %v370
    %v1094 = vunpack.c.l.b16 %v371
    %v1095 = vunpack.c.l.b16 %v372
    %v1096 = vunpack.c.h.b16 %v372
    %v1097 = vunpack.c.l.b16 %v373
    %v1098 = vunpack.c.l.b16 %v374
    %v1099 = vunpack.c.h.b16 %v374
    %v1100 = vunpack.c.l.b16 %v375
    %v1101 = vunpack.c.l.b16 %v376
    %v1102 = vunpack.c.h.b16 %v376
    %v1103 = vunpack.c.l.b16 %v377
    %v1104 = vunpack.c.l.b16 %v378
    %v1105 = vunpack.c.h.b16 %v378
    %v1106 = vunpack.c.l.b16 %v379
    %v1107 = vunpack.c.l.b16 %v380
    %v1108 = vunpack.c.h.b16 %v380
    %v1109 = vunpack.c.l.b16 %v381
    %v1110 = vunpack.c.l.b16 %v382
    %v1111 = vunpack.c.h.b16 %v382
    %v1112 = vunpack.c.l.b16 %v383
    %v1113 = vunpack.c.l.b16 %v384
    %v1114 = vunpack.c.h.b16 %v384
    %v1115 = vunpack.c.l.b16 %v385
    %v1116 = vunpack.c.l.b16 %v386
    %v1117 = vunpack.c.h.b16 %v386
    %v1118 = vunpack.c.l.b16 %v387
    %v1119 = vunpack.c.l.b16 %v388
    %v1120 = vunpack.c.h.b16 %v388
    %v1121 = vunpack.c.l.b16 %v389
    %v1122 = vunpack.c.l.b16 %v390
    %v1123 = vunpack.c.h.b16 %v390
    %v1124 = vunpack.c.l.b16 %v391
    %v1125 = vunpack.c.l.b16 %v392
    %v1126 = vunpack.c.h.b16 %v392
    %v1127 = vunpack.c.l.b16 %v393
    %v1128 = vunpack.c.l.b16 %v394
    %v1129 = vunpack.c.h.b16 %v394
    %v1130 = vunpack.c.l.b16 %v395
    %v1131 = vunpack.c.l.b16 %v396
    %v1132 = vunpack.c.h.b16 %v396
    %v1133 = vunpack.c.l.b16 %v397
    %v1134 = vunpack.c.l.b16 %v398
    %v1135 = vunpack.c.h.b16 %v398
    %v1136 = vunpack.c.l.b16 %v399
    %v1137 = vunpack.c.l.b16 %v400
    %v1138 = vunpack.c.h.b16 %v400
    %v1139 = vunpack.c.l.b16 %v401
    %v1140 = vunpack.c.l.b16 %v402
    %v1141 = vunpack.c.h.b16 %v402
    %v1142 = vunpack.c.l.b16 %v403
    %v1143 = vunpack.c.l.b16 %v404
    %v1144 = vunpack.c.h.b16 %v404
    %v1145 = vunpack.c.l.b16 %v405
    %v1146 = vunpack.c.l.b16 %v406
    %v1147 = vunpack.c.h.b16 %v406
    %v1148 = vunpack.c.l.b16 %v407
    %v1149 = vunpack.c.l.b16 %v408
    %v1150 = vunpack.c.h.b16 %v408
    %v1151 = vunpack.c.l.b16 %v409
    %v1152 = vunpack.c.l.b16 %v410
    %v1153 = vunpack.c.h.b16 %v410
    %v1154 = vunpack.c.l.b16 %v411
    %v1155 = vunpack.c.l.b16 %v412
    %v1156 = vunpack.c.h.b16 %v412
    %v1157 = vunpack.c.l.b16 %v413
    %v1158 = vunpack.c.l.b16 %v414
    %v1159 = vunpack.c.h.b16 %v414
    %v1160 = vunpack.c.l.b16 %v415
    %v1161 = vunpack.c.l.b16 %v416
    %v1162 = vunpack.c.h.b16 %v416
    %v1163 = vunpack.c.l.b16 %v417
    %v1164 = vunpack.c.l.b16 %v418
    %v1165 = vunpack.c.h.b16 %v418
    %v1166 = vunpack.c.l.b16 %v419
    %v1167 = vunpack.c.l.b16 %v420
    %v1168 = vunpack.c.h.b16 %v420
    %v1169 = vunpack.c.l.b16 %v421
    %v1170 = vunpack.c.l.b16 %v422
    %v1171 = vunpack.c.h.b16 %v422
    %v1172 = vunpack.c.l.b16 %v423
    %v1173 = vunpack.c.l.b16 %v424
    %v1174 = vunpack.c.h.b16 %v424
    %v1175 = vunpack.c.l.b16 %v425
    %v1176 = vunpack.c.l.b16 %v426
    %v1177 = vunpack.c.h.b16 %v426
    %v1178 = vunpack.c.l.b16 %v427
    %v1179 = vunpack.c.l.b16 %v428
    %v1180 = vunpack.c.h.b16 %v428
    %v1181 = vunpack.c.l.b16 %v429
    %v1182 = vunpack.c.l.b16 %v430
    %v1183 = vunpack.c.h.b16 %v430
    %v1184 = vunpack.c.l.b16 %v431
    %v1185 = vunpack.c.l.b16 %v432
    %v1186 = vunpack.c.h.b16 %v432
    %v1187 = vunpack.c.l.b16 %v433
    %v1188 = vunpack.c.l.b16 %v434
    %v1189 = vunpack.c.h.b16 %v434
    %v1190 = vunpack.c.l.b16 %v435
    %v1191 = vunpack.c.l.b16 %v436
    %v1192 = vunpack.c.h.b16 %v436
    %v1193 = vunpack.c.l.b16 %v437
    %v1194 = vunpack.c.l.b16 %v438
    %v1195 = vunpack.c.h.b16 %v438
    %v1196 = vunpack.c.l.b16 %v439
    %v1197 = vunpack.c.l.b16 %v440
    %v1198 = vunpack.c.h.b16 %v440
    %v1199 = vunpack.c.l.b16 %v441
    %v1200 = vunpack.c.l.b16 %v442
    %v1201 = vunpack.c.h.b16 %v442
    %v1202 = vunpack.c.l.b16 %v443
    %v1203 = vunpack.c.l.b16 %v444
    %v1204 = vunpack.c.h.b16 %v444
    %v1205 = vunpack.c.l.b16 %v445
    %v1206 = vunpack.c.l.b16 %v446
    %v1207 = vunpack.c.h.b16 %v446
    %v1208 = vunpack.c.l.b16 %v447
    %v1209 = vunpack.c.l.b16 %v448
    %v1210 = vunpack.c.h.b16 %v448
    %v1211 = vunpack.c.l.b16 %v449
    %v1212 = vunpack.c.l.b16 %v450
    %v1213 = vunpack.c.h.b16 %v450
    %v1214 = vunpack.c.l.b16 %v451
    %v1215 = vunpack.c.l.b16 %v452
    %v1216 = vunpack.c.h.b16 %v452
    %v1217 = vunpack.c.l.b16 %v453
    %v1218 = vunpack.c.l.b16 %v454
    %v1219 = vunpack.c.h.b16 %v454
    %v1220 = vunpack.c.l.b16 %v455
    %v1221 = vunpack.c.l.b16 %v456
    %v1222 = vunpack.c.h.b16 %v456
    %v1223 = vunpack.c.l.b16 %v457
    %v1224 = vunpack.c.l.b16 %v458
    %v1225 = vunpack.c.h.b16 %v458
    %v1226 = vunpack.c.l.b16 %v459
    %v1227 = vunpack.c.l.b16 %v460
    %v1228 = vunpack.c.h.b16 %v460
    %v1229 = vunpack.c.l.b16 %v461
    %v1230 = vunpack.c.l.b16 %v462
    %v1231 = vunpack.c.h.b16 %v462
    %v1232 = vunpack.c.l.b16 %v463
    %v1233 = vunpack.c.l.b16 %v464
    %v1234 = vunpack.c.h.b16 %v464
    %v1235 = vunpack.c.l.b16 %v465
    %v1236 = vunpack.c.l.b16 %v466
    %v1237 = vunpack.c.h.b16 %v466
    %v1238 = vunpack.c.l.b16 %v467
    %v1239 = vunpack.c.l.b16 %v468
    %v1240 = vunpack.c.h.b16 %v468
    %v1241 = vunpack.c.l.b16 %v469
    %v1242 = vunpack.c.l.b16 %v470
    %v1243 = vunpack.c.h.b16 %v470
    %v1244 = vunpack.c.l.b16 %v471
    %v1245 = vunpack.c.l.b16 %v472
    %v1246 = vunpack.c.h.b16 %v472
    %v1247 = vunpack.c.l.b16 %v473
    %v1248 = vunpack.c.l.b16 %v474
    %v1249 = vunpack.c.h.b16 %v474
    %v1250 = vunpack.c.l.b16 %v475
    %v1251 = vunpack.c.l.b16 %v476
    %v1252 = vunpack.c.h.b16 %v476
    %v1253 = vunpack.c.l.b16 %v477
    %v1254 = vunpack.c.l.b16 %v478
    %v1255 = vunpack.c.h.b16 %v478
    %v1256 = vunpack.c.l.b16 %v479
    %v1257 = vunpack.c.l.b16 %v480
    %v1258 = vunpack.c.h.b16 %v480
    %v1259 = vunpack.c.l.b16 %v481
    %v1260 = vunpack.c.l.b16 %v482
    %v1261 = vunpack.c.h.b16 %v482
    %v1262 = vunpack.c.l.b16 %v483
    %v1263 = vunpack.c.l.b16 %v484
    %v1264 = vunpack.c.h.b16 %v484
    %v1265 = vunpack.c.l.b16 %v485
    %v1266 = vunpack.c.l.b16 %v486
    %v1267 = vunpack.c.h.b16 %v486
    %v1268 = vunpack.c.l.b16 %v487
    %v1269 = vunpack.c.l.b16 %v488
    %v1270 = vunpack.c.h.b16 %v488
    %v1271 = vunpack.c.l.b16 %v489
    %v1272 = vunpack.c.l.b16 %v490
    %v1273 = vunpack.c.h.b16 %v490
    %v1274 = vunpack.c.l.b16 %v491
    %v1275 = vunpack.c.l.b16 %v492
    %v1276 = vunpack.c.h.b16 %v492
    %v1277 = vunpack.c.l.b16 %v493
    %v1278 = vunpack.c.l.b16 %v494
    %v1279 = vunpack.c.h.b16 %v494
    %v1280 = vunpack.c.l.b16 %v495
    %v1281 = vunpack.c.l.b16 %v496
    %v1282 = vunpack.c.h.b16 %v496
    %v1283 = vunpack.c.l.b16 %v497
    %v1284 = vunpack.c.l.b16 %v498
    %v1285 = vunpack.c.h.b16 %v498
    %v1286 = vunpack.c.l.b16 %v499
    %v1287 = vunpack.c.l.b16 %v500
    %v1288 = vunpack.c.h.b16 %v500
    %v1289 = vunpack.c.l.b16 %v501
    %v1290 = vunpack.c.l.b16 %v502
    %v1291 = vunpack.c.h.b16 %v502
    %v1292 = vunpack.c.l.b16 %v503
    %v1293 = vunpack.c.l.b16 %v504
    %v1294 = vunpack.c.h.b16 %v504
    %v1295 = vunpack.c.l.b16 %v505
    %v1296 = vunpack.c.l.b16 %v506
    %v1297 = vunpack.c.h.b16 %v506
    %v1298 = vunpack.c.l.b16 %v507
    %v1299 = vunpack.c.l.b16 %v508
    %v1300 = vunpack.c.h.b16 %v508
    %v1301 = vunpack.c.l.b16 %v509
    %v1302 = vunpack.c.l.b16 %v510
    %v1303 = vunpack.c.h.b16 %v510
    %v1304 = vunpack.c.l.b16 %v511
    %v1305 = vunpack.c.l.b16 %v512
    %v1306 = vunpack.c.h.b16 %v512
    %v1307 = vunpack.c.l.b16 %v513
    %v1308 = vunpack.c.l.b16 %v514
    %v1309 = vunpack.c.h.b16 %v514
    %v1310 = vunpack.c.l.b16 %v515
    %v1311 = vunpack.c.l.b16 %v516
    %v1312 = vunpack.c.h.b16 %v516
    %v1313 = vunpack.c.l.b16 %v517
    %v1314 = vunpack.c.l.b16 %v518
    %v1315 = vunpack.c.h.b16 %v518
    %v1316 = vunpack.c.l.b16 %v519
    %v1317 = vunpack.c.l.b16 %v520
    %v1318 = vunpack.c.h.b16 %v520
    %v1319 = vunpack.c.l.b16 %v521
    %v1320 = vunpack.c.l.b16 %v522
    %v1321 = vunpack.c.h.b16 %v522
    %v1322 = vunpack.c.l.b16 %v523
    %v1323 = vunpack.c.l.b16 %v524
    %v1324 = vunpack.c.h.b16 %v524
    %v1325 = vunpack.c.l.b16 %v525
    %v1326 = vpack.c.b16 %v849, %v846
    %v1327 = vpack.c.b16 %v850, %v847
    %v1328 = vpack.c.b16 %v851, %v848
    %v1329 = vpack.c.b16 %v855, %v852
    %v1330 = vpack.c.b16 %v856, %v853
    %v1331 = vpack.c.b16 %v857, %v854
    %v1332 = vpack.c.b16 %v861, %v858
    %v1333 = vpack.c.b16 %v862, %v859
    %v1334 = vpack.c.b16 %v863, %v860
    %v1335 = vpack.c.b16 %v867, %v864
    %v1336 = vpack.c.b16 %v868, %v865
    %v1337 = vpack.c.b16 %v869, %v866
    %v1338 = vpack.c.b16 %v873, %v870
    %v1339 = vpack.c.b16 %v874, %v871
    %v1340 = vpack.c.b16 %v875, %v872
    %v1341 = vpack.c.b16 %v879, %v876
    %v1342 = vpack.c.b16 %v880, %v877
    %v1343 = vpack.c.b16 %v881, %v878
    %v1344 = vpack.c.b16 %v885, %v882
    %v1345 = vpack.c.b16 %v886, %v883
    %v1346 = vpack.c.b16 %v887, %v884
    %v1347 = vpack.c.b16 %v891, %v888
    %v1348 = vpack.c.b16 %v892, %v889
    %v1349 = vpack.c.b16 %v893, %v890
    %v1350 = vpack.c.b16 %v897, %v894
    %v1351 = vpack.c.b16 %v898, %v895
    %v1352 = vpack.c.b16 %v899, %v896
    %v1353 = vpack.c.b16 %v903, %v900
    %v1354 = vpack.c.b16 %v904, %v901
    %v1355 = vpack.c.b16 %v905, %v902
    %v1356 = vpack.c.b16 %v909, %v906
    %v1357 = vpack.c.b16 %v910, %v907
    %v1358 = vpack.c.b16 %v911, %v908
    %v1359 = vpack.c.b16 %v915, %v912
    %v1360 = vpack.c.b16 %v916, %v913
    %v1361 = vpack.c.b16 %v917, %v914
    %v1362 = vpack.c.b16 %v921, %v918
    %v1363 = vpack.c.b16 %v922, %v919
    %v1364 = vpack.c.b16 %v923, %v920
    %v1365 = vpack.c.b16 %v927, %v924
    %v1366 = vpack.c.b16 %v928, %v925
    %v1367 = vpack.c.b16 %v929, %v926
    %v1368 = vpack.c.b16 %v933, %v930
    %v1369 = vpack.c.b16 %v934, %v931
    %v1370 = vpack.c.b16 %v935, %v932
    %v1371 = vpack.c.b16 %v939, %v936
    %v1372 = vpack.c.b16 %v940, %v937
    %v1373 = vpack.c.b16 %v941, %v938
    %v1374 = vpack.c.b16 %v945, %v942
    %v1375 = vpack.c.b16 %v946, %v943
    %v1376 = vpack.c.b16 %v947, %v944
    %v1377 = vpack.c.b16 %v951, %v948
    %v1378 = vpack.c.b16 %v952, %v949
    %v1379 = vpack.c.b16 %v953, %v950
    %v1380 = vpack.c.b16 %v957, %v954
    %v1381 = vpack.c.b16 %v958, %v955
    %v1382 = vpack.c.b16 %v959, %v956
    %v1383 = vpack.c.b16 %v963, %v960
    %v1384 = vpack.c.b16 %v964, %v961
    %v1385 = vpack.c.b16 %v965, %v962
    %v1386 = vpack.c.b16 %v969, %v966
    %v1387 = vpack.c.b16 %v970, %v967
    %v1388 = vpack.c.b16 %v971, %v968
    %v1389 = vpack.c.b16 %v975, %v972
    %v1390 = vpack.c.b16 %v976, %v973
    %v1391 = vpack.c.b16 %v977, %v974
    %v1392 = vpack.c.b16 %v981, %v978
    %v1393 = vpack.c.b16 %v982, %v979
    %v1394 = vpack.c.b16 %v983, %v980
    %v1395 = vpack.c.b16 %v987, %v984
    %v1396 = vpack.c.b16 %v988, %v985
    %v1397 = vpack.c.b16 %v989, %v986
    %v1398 = vpack.c.b16 %v993, %v990
    %v1399 = vpack.c.b16 %v994, %v991
    %v1400 = vpack.c.b16 %v995, %v992
    %v1401 = vpack.c.b16 %v999, %v996
    %v1402 = vpack.c.b16 %v1000, %v997
    %v1403 = vpack.c.b16 %v1001, %v998
    %v1404 = vpack.c.b16 %v1005, %v1002
    %v1405 = vpack.c.b16 %v1006, %v1003
    %v1406 = vpack.c.b16 %v1007, %v1004
    %v1407 = vpack.c.b16 %v1011, %v1008
    %v1408 = vpack.c.b16 %v1012, %v1009
    %v1409 = vpack.c.b16 %v1013, %v1010
    %v1410 = vpack.c.b16 %v1017, %v1014
    %v1411 = vpack.c.b16 %v1018, %v1015
    %v1412 = vpack.c.b16 %v1019, %v1016
    %v1413 = vpack.c.b16 %v1023, %v1020
    %v1414 = vpack.c.b16 %v1024, %v1021
    %v1415 = vpack.c.b16 %v1025, %v1022
    %v1416 = vpack.c.b16 %v1029, %v1026
    %v1417 = vpack.c.b16 %v1030, %v1027
    %v1418 = vpack.c.b16 %v1031, %v1028
    %v1419 = vpack.c.b16 %v1035, %v1032
    %v1420 = vpack.c.b16 %v1036, %v1033
    %v1421 = vpack.c.b16 %v1037, %v1034
    %v1422 = vpack.c.b16 %v1041, %v1038
    %v1423 = vpack.c.b16 %v1042, %v1039
    %v1424 = vpack.c.b16 %v1043, %v1040
    %v1425 = vpack.c.b16 %v1047, %v1044
    %v1426 = vpack.c.b16 %v1048, %v1045
    %v1427 = vpack.c.b16 %v1049, %v1046
    %v1428 = vpack.c.b16 %v1053, %v1050
    %v1429 = vpack.c.b16 %v1054, %v1051
    %v1430 = vpack.c.b16 %v1055, %v1052
    %v1431 = vpack.c.b16 %v1059, %v1056
    %v1432 = vpack.c.b16 %v1060, %v1057
    %v1433 = vpack.c.b16 %v1061, %v1058
    %v1434 = vpack.c.b16 %v1065, %v1062
    %v1435 = vpack.c.b16 %v1066, %v1063
    %v1436 = vpack.c.b16 %v1067, %v1064
    %v1437 = vpack.c.b16 %v1071, %v1068
    %v1438 = vpack.c.b16 %v1072, %v1069
    %v1439 = vpack.c.b16 %v1073, %v1070
    %v1440 = vpack.c.b16 %v1077, %v1074
    %v1441 = vpack.c.b16 %v1078, %v1075
    %v1442 = vpack.c.b16 %v1079, %v1076
    %v1443 = vpack.c.b16 %v1083, %v1080
    %v1444 = vpack.c.b16 %v1084, %v1081
    %v1445 = vpack.c.b16 %v1085, %v1082
    %v1446 = vpack.c.b16 %v1089, %v1086
    %v1447 = vpack.c.b16 %v1090, %v1087
    %v1448 = vpack.c.b16 %v1091, %v1088
    %v1449 = vpack.c.b16 %v1095, %v1092
    %v1450 = vpack.c.b16 %v1096, %v1093
    %v1451 = vpack.c.b16 %v1097, %v1094
    %v1452 = vpack.c.b16 %v1101, %v1098
    %v1453 = vpack.c.b16 %v1102, %v1099
    %v1454 = vpack.c.b16 %v1103, %v1100
    %v1455 = vpack.c.b16 %v1107, %v1104
    %v1456 = vpack.c.b16 %v1108, %v1105
    %v1457 = vpack.c.b16 %v1109, %v1106
    %v1458 = vpack.c.b16 %v1113, %v1110
    %v1459 = vpack.c.b16 %v1114, %v1111
    %v1460 = vpack.c.b16 %v1115, %v1112
    %v1461 = vpack.c.b16 %v1119, %v1116
    %v1462 = vpack.c.b16 %v1120, %v1117
    %v1463 = vpack.c.b16 %v1121, %v1118
    %v1464 = vpack.c.b16 %v1125, %v1122
    %v1465 = vpack.c.b16 %v1126, %v1123
    %v1466 = vpack.c.b16 %v1127, %v1124
    %v1467 = vpack.c.b16 %v1131, %v1128
    %v1468 = vpack.c.b16 %v1132, %v1129
    %v1469 = vpack.c.b16 %v1133, %v1130
    %v1470 = vpack.c.b16 %v1137, %v1134
    %v1471 = vpack.c.b16 %v1138, %v1135
    %v1472 = vpack.c.b16 %v1139, %v1136
    %v1473 = vpack.c.b16 %v1143, %v1140
    %v1474 = vpack.c.b16 %v1144, %v1141
    %v1475 = vpack.c.b16 %v1145, %v1142
    %v1476 = vpack.c.b16 %v1149, %v1146
    %v1477 = vpack.c.b16 %v1150, %v1147
    %v1478 = vpack.c.b16 %v1151, %v1148
    %v1479 = vpack.c.b16 %v1155, %v1152
    %v1480 = vpack.c.b16 %v1156, %v1153
    %v1481 = vpack.c.b16 %v1157, %v1154
    %v1482 = vpack.c.b16 %v1161, %v1158
    %v1483 = vpack.c.b16 %v1162, %v1159
    %v1484 = vpack.c.b16 %v1163, %v1160
    %v1485 = vpack.c.b16 %v1167, %v1164
    %v1486 = vpack.c.b16 %v1168, %v1165
    %v1487 = vpack.c.b16 %v1169, %v1166
    %v1488 = vpack.c.b16 %v1173, %v1170
    %v1489 = vpack.c.b16 %v1174, %v1171
    %v1490 = vpack.c.b16 %v1175, %v1172
    %v1491 = vpack.c.b16 %v1179, %v1176
    %v1492 = vpack.c.b16 %v1180, %v1177
    %v1493 = vpack.c.b16 %v1181, %v1178
    %v1494 = vpack.c.b16 %v1185, %v1182
    %v1495 = vpack.c.b16 %v1186, %v1183
    %v1496 = vpack.c.b16 %v1187, %v1184
    %v1497 = vpack.c.b16 %v1191, %v1188
    %v1498 = vpack.c.b16 %v1192, %v1189
    %v1499 = vpack.c.b16 %v1193, %v1190
    %v1500 = vpack.c.b16 %v1197, %v1194
    %v1501 = vpack.c.b16 %v1198, %v1195
    %v1502 = vpack.c.b16 %v1199, %v1196
    %v1503 = vpack.c.b16 %v1203, %v1200
    %v1504 = vpack.c.b16 %v1204, %v1201
    %v1505 = vpack.c.b16 %v1205, %v1202
    %v1506 = vpack.c.b16 %v1209, %v1206
    %v1507 = vpack.c.b16 %v1210, %v1207
    %v1508 = vpack.c.b16 %v1211, %v1208
    %v1509 = vpack.c.b16 %v1215, %v1212
    %v1510 = vpack.c.b16 %v1216, %v1213
    %v1511 = vpack.c.b16 %v1217, %v1214
    %v1512 = vpack.c.b16 %v1221, %v1218
    %v1513 = vpack.c.b16 %v1222, %v1219
    %v1514 = vpack.c.b16 %v1223, %v1220
    %v1515 = vpack.c.b16 %v1227, %v1224
    %v1516 = vpack.c.b16 %v1228, %v1225
    %v1517 = vpack.c.b16 %v1229, %v1226
    %v1518 = vpack.c.b16 %v1233, %v1230
    %v1519 = vpack.c.b16 %v1234, %v1231
    %v1520 = vpack.c.b16 %v1235, %v1232
    %v1521 = vpack.c.b16 %v1239, %v1236
    %v1522 = vpack.c.b16 %v1240, %v1237
    %v1523 = vpack.c.b16 %v1241, %v1238
    %v1524 = vpack.c.b16 %v1245, %v1242
    %v1525 = vpack.c.b16 %v1246, %v1243
    %v1526 = vpack.c.b16 %v1247, %v1244
    %v1527 = vpack.c.b16 %v1251, %v1248
    %v1528 = vpack.c.b16 %v1252, %v1249
    %v1529 = vpack.c.b16 %v1253, %v1250
    %v1530 = vpack.c.b16 %v1257, %v1254
    %v1531 = vpack.c.b16 %v1258, %v1255
    %v1532 = vpack.c.b16 %v1259, %v1256
    %v1533 = vpack.c.b16 %v1263, %v1260
    %v1534 = vpack.c.b16 %v1264, %v1261
    %v1535 = vpack.c.b16 %v1265, %v1262
    %v1536 = vpack.c.b16 %v1269, %v1266
    %v1537 = vpack.c.b16 %v1270, %v1267
    %v1538 = vpack.c.b16 %v1271, %v1268
    %v1539 = vpack.c.b16 %v1275, %v1272
    %v1540 = vpack.c.b16 %v1276, %v1273
    %v1541 = vpack.c.b16 %v1277, %v1274
    %v1542 = vpack.c.b16 %v1281, %v1278
    %v1543 = vpack.c.b16 %v1282, %v1279
    %v1544 = vpack.c.b16 %v1283, %v1280
    %v1545 = vpack.c.b16 %v1287, %v1284
    %v1546 = vpack.c.b16 %v1288, %v1285
    %v1547 = vpack.c.b16 %v1289, %v1286
    %v1548 = vpack.c.b16 %v1293, %v1290
    %v1549 = vpack.c.b16 %v1294, %v1291
    %v1550 = vpack.c.b16 %v1295, %v1292
    %v1551 = vpack.c.b16 %v1299, %v1296
    %v1552 = vpack.c.b16 %v1300, %v1297
    %v1553 = vpack.c.b16 %v1301, %v1298
    %v1554 = vpack.c.b16 %v1305, %v1302
    %v1555 = vpack.c.b16 %v1306, %v1303
    %v1556 = vpack.c.b16 %v1307, %v1304
    %v1557 = vpack.c.b16 %v1311, %v1308
    %v1558 = vpack.c.b16 %v1312, %v1309
    %v1559 = vpack.c.b16 %v1313, %v1310
    %v1560 = vpack.c.b16 %v1317, %v1314
    %v1561 = vpack.c.b16 %v1318, %v1315
    %v1562 = vpack.c.b16 %v1319, %v1316
    %v1563 = vpack.c.b16 %v1323, %v1320
    %v1564 = vpack.c.b16 %v1324, %v1321
    %v1565 = vpack.c.b16 %v1325, %v1322
    %1806 = vmatprep.subr.bf16.mxu0 %v1327
    %1807 = vmatpush1.bf16.msra.mxu0 %v1326
    %1808 = vmatprep.subr.bf16.mxu0 %v1330
    %1809 = vmatpush1.bf16.msra.mxu0 %v1329
    %1810 = vmatprep.subr.bf16.mxu0 %v1333
    %1811 = vmatpush1.bf16.msra.mxu0 %v1332
    %1812 = vmatprep.subr.bf16.mxu0 %v1336
    %1813 = vmatpush1.bf16.msra.mxu0 %v1335
    %1814 = vmatprep.subr.bf16.mxu0 %v1339
    %1815 = vmatpush1.bf16.msra.mxu0 %v1338
    %1816 = vmatprep.subr.bf16.mxu0 %v1342
    %1817 = vmatpush1.bf16.msra.mxu0 %v1341
    %1818 = vmatprep.subr.bf16.mxu0 %v1345
    %1819 = vmatpush1.bf16.msra.mxu0 %v1344
    %1820 = vmatprep.subr.bf16.mxu0 %v1348
    %1821 = vmatpush1.bf16.msra.mxu0 %v1347
    %1822 = vmatprep.subr.bf16.mxu0 %v1351
    %1823 = vmatpush1.bf16.msra.mxu0 %v1350
    %1824 = vmatprep.subr.bf16.mxu0 %v1354
    %1825 = vmatpush1.bf16.msra.mxu0 %v1353
    %1826 = vmatprep.subr.bf16.mxu0 %v1357
    %1827 = vmatpush1.bf16.msra.mxu0 %v1356
    %1828 = vmatprep.subr.bf16.mxu0 %v1360
    %1829 = vmatpush1.bf16.msra.mxu0 %v1359
    %1830 = vmatprep.subr.bf16.mxu0 %v1363
    %1831 = vmatpush1.bf16.msra.mxu0 %v1362
    %1832 = vmatprep.subr.bf16.mxu0 %v1366
    %1833 = vmatpush1.bf16.msra.mxu0 %v1365
    %1834 = vmatprep.subr.bf16.mxu0 %v1369
    %1835 = vmatpush1.bf16.msra.mxu0 %v1368
    %1836 = vmatprep.subr.bf16.mxu0 %v1372
    %1837 = vmatpush1.bf16.msra.mxu0 %v1371
    %1838 = vmatprep.mubr.bf16.mxu0 %v99
    %1839 = vmatmul.mubr.bf16.gmra.mrb[0].mxu0 %v98
    %v1840 = vpop.f32.mrb[0].mxu0
    %v1841 = vadd.f32 0.0, %v1840
    %v1842 = vpop.f32.mrb[0].mxu0
    %v1843 = vadd.f32 0.0, %v1842
    %v1844 = vpop.f32.mrb[0].mxu0
    %v1845 = vadd.f32 0.0, %v1844
    %v1846 = vpop.f32.mrb[0].mxu0
    %v1847 = vadd.f32 0.0, %v1846
    %1848 = vmatprep.mubr.bf16.mxu0 %v101
    %1849 = vmatmul.mubr.bf16.gmra.mrb[0].mxu0 %v100
    %v1850 = vpop.f32.mrb[0].mxu0
    %v1851 = vadd.f32 0.0, %v1850
    %v1852 = vpop.f32.mrb[0].mxu0
    %v1853 = vadd.f32 0.0, %v1852
    %v1854 = vpop.f32.mrb[0].mxu0
    %v1855 = vpop.f32.mrb[0].mxu0
    %1856 = vdwg.mxu0
    %1857 = vmatprep.subr.bf16.mxu0 %v1375
    %1858 = vmatpush1.bf16.msra.mxu0 %v1374
    %1859 = vmatprep.subr.bf16.mxu0 %v1378
    %1860 = vmatpush1.bf16.msra.mxu0 %v1377
    %1861 = vmatprep.subr.bf16.mxu0 %v1381
    %1862 = vmatpush1.bf16.msra.mxu0 %v1380
    %1863 = vmatprep.subr.bf16.mxu0 %v1384
    %1864 = vmatpush1.bf16.msra.mxu0 %v1383
    %1865 = vmatprep.subr.bf16.mxu0 %v1387
    %1866 = vmatpush1.bf16.msra.mxu0 %v1386
    %1867 = vmatprep.subr.bf16.mxu0 %v1390
    %1868 = vmatpush1.bf16.msra.mxu0 %v1389
    %1869 = vmatprep.subr.bf16.mxu0 %v1393
    %1870 = vmatpush1.bf16.msra.mxu0 %v1392
    %1871 = vmatprep.subr.bf16.mxu0 %v1396
    %1872 = vmatpush1.bf16.msra.mxu0 %v1395
    %1873 = vmatprep.subr.bf16.mxu0 %v1399
    %1874 = vmatpush1.bf16.msra.mxu0 %v1398
    %1875 = vmatprep.subr.bf16.mxu0 %v1402
    %1876 = vmatpush1.bf16.msra.mxu0 %v1401
    %1877 = vmatprep.subr.bf16.mxu0 %v1405
    %1878 = vmatpush1.bf16.msra.mxu0 %v1404
    %1879 = vmatprep.subr.bf16.mxu0 %v1408
    %1880 = vmatpush1.bf16.msra.mxu0 %v1407
    %1881 = vmatprep.subr.bf16.mxu0 %v1411
    %1882 = vmatpush1.bf16.msra.mxu0 %v1410
    %1883 = vmatprep.subr.bf16.mxu0 %v1414
    %1884 = vmatpush1.bf16.msra.mxu0 %v1413
    %1885 = vmatprep.subr.bf16.mxu0 %v1417
    %1886 = vmatpush1.bf16.msra.mxu0 %v1416
    %1887 = vmatprep.subr.bf16.mxu0 %v1420
    %1888 = vmatpush1.bf16.msra.mxu0 %v1419
    %1889 = vmatprep.mubr.bf16.mxu0 %v131
    %1890 = vmatmul.mubr.bf16.gmra.mrb[0].mxu0 %v130
    %v1891 = vpop.f32.mrb[0].mxu0
    %v1892 = vadd.f32 %v1841, %v1891
    %v1893 = vpop.f32.mrb[0].mxu0
    %v1894 = vadd.f32 %v1843, %v1893
    %v1895 = vpop.f32.mrb[0].mxu0
    %v1896 = vadd.f32 %v1845, %v1895
    %v1897 = vpop.f32.mrb[0].mxu0
    %v1898 = vadd.f32 %v1847, %v1897
    %1899 = vmatprep.mubr.bf16.mxu0 %v133
    %1900 = vmatmul.mubr.bf16.gmra.mrb[0].mxu0 %v132
    %v1901 = vpop.f32.mrb[0].mxu0
    %v1902 = vadd.f32 %v1851, %v1901
    %v1903 = vpop.f32.mrb[0].mxu0
    %v1904 = vadd.f32 %v1853, %v1903
    %v1905 = vpop.f32.mrb[0].mxu0
    %v1906 = vpop.f32.mrb[0].mxu0
    %1907 = vdwg.mxu0
    %1908 = vmatprep.subr.bf16.mxu0 %v1423
    %1909 = vmatpush1.bf16.msra.mxu0 %v1422
    %1910 = vmatprep.subr.bf16.mxu0 %v1426
    %1911 = vmatpush1.bf16.msra.mxu0 %v1425
    %1912 = vmatprep.subr.bf16.mxu0 %v1429
    %1913 = vmatpush1.bf16.msra.mxu0 %v1428
    %1914 = vmatprep.subr.bf16.mxu0 %v1432
    %1915 = vmatpush1.bf16.msra.mxu0 %v1431
    %1916 = vmatprep.subr.bf16.mxu0 %v1435
    %1917 = vmatpush1.bf16.msra.mxu0 %v1434
    %1918 = vmatprep.subr.bf16.mxu0 %v1438
    %1919 = vmatpush1.bf16.msra.mxu0 %v1437
    %1920 = vmatprep.subr.bf16.mxu0 %v1441
    %1921 = vmatpush1.bf16.msra.mxu0 %v1440
    %1922 = vmatprep.subr.bf16.mxu0 %v1444
    %1923 = vmatpush1.bf16.msra.mxu0 %v1443
    %1924 = vmatprep.subr.bf16.mxu0 %v1447
    %1925 = vmatpush1.bf16.msra.mxu0 %v1446
    %1926 = vmatprep.subr.bf16.mxu0 %v1450
    %1927 = vmatpush1.bf16.msra.mxu0 %v1449
    %1928 = vmatprep.subr.bf16.mxu0 %v1453
    %1929 = vmatpush1.bf16.msra.mxu0 %v1452
    %1930 = vmatprep.subr.bf16.mxu0 %v1456
    %1931 = vmatpush1.bf16.msra.mxu0 %v1455
    %1932 = vmatprep.subr.bf16.mxu0 %v1459
    %1933 = vmatpush1.bf16.msra.mxu0 %v1458
    %1934 = vmatprep.subr.bf16.mxu0 %v1462
    %1935 = vmatpush1.bf16.msra.mxu0 %v1461
    %1936 = vmatprep.subr.bf16.mxu0 %v1465
    %1937 = vmatpush1.bf16.msra.mxu0 %v1464
    %1938 = vmatprep.subr.bf16.mxu0 %v1468
    %1939 = vmatpush1.bf16.msra.mxu0 %v1467
    %1940 = vmatprep.mubr.bf16.mxu0 %v159
    %1941 = vmatmul.mubr.bf16.gmra.mrb[0].mxu0 %v158
    %v1942 = vpop.f32.mrb[0].mxu0
    %v1943 = vadd.f32 %v1892, %v1942
    %v1944 = vpop.f32.mrb[0].mxu0
    %v1945 = vadd.f32 %v1894, %v1944
    %v1946 = vpop.f32.mrb[0].mxu0
    %v1947 = vadd.f32 %v1896, %v1946
    %v1948 = vpop.f32.mrb[0].mxu0
    %v1949 = vadd.f32 %v1898, %v1948
    %1950 = vmatprep.mubr.bf16.mxu0 %v161
    %1951 = vmatmul.mubr.bf16.gmra.mrb[0].mxu0 %v160
    %v1952 = vpop.f32.mrb[0].mxu0
    %v1953 = vadd.f32 %v1902, %v1952
    %v1954 = vpop.f32.mrb[0].mxu0
    %v1955 = vadd.f32 %v1904, %v1954
    %v1956 = vpop.f32.mrb[0].mxu0
    %v1957 = vpop.f32.mrb[0].mxu0
    %1958 = vdwg.mxu0
    %1959 = vmatprep.subr.bf16.mxu0 %v1471
    %1960 = vmatpush1.bf16.msra.mxu0 %v1470
    %1961 = vmatprep.subr.bf16.mxu0 %v1474
    %1962 = vmatpush1.bf16.msra.mxu0 %v1473
    %1963 = vmatprep.subr.bf16.mxu0 %v1477
    %1964 = vmatpush1.bf16.msra.mxu0 %v1476
    %1965 = vmatprep.subr.bf16.mxu0 %v1480
    %1966 = vmatpush1.bf16.msra.mxu0 %v1479
    %1967 = vmatprep.subr.bf16.mxu0 %v1483
    %1968 = vmatpush1.bf16.msra.mxu0 %v1482
    %1969 = vmatprep.subr.bf16.mxu0 %v1486
    %1970 = vmatpush1.bf16.msra.mxu0 %v1485
    %1971 = vmatprep.subr.bf16.mxu0 %v1489
    %1972 = vmatpush1.bf16.msra.mxu0 %v1488
    %1973 = vmatprep.subr.bf16.mxu0 %v1492
    %1974 = vmatpush1.bf16.msra.mxu0 %v1491
    %1975 = vmatprep.subr.bf16.mxu0 %v1495
    %1976 = vmatpush1.bf16.msra.mxu0 %v1494
    %1977 = vmatprep.subr.bf16.mxu0 %v1498
    %1978 = vmatpush1.bf16.msra.mxu0 %v1497
    %1979 = vmatprep.subr.bf16.mxu0 %v1501
    %1980 = vmatpush1.bf16.msra.mxu0 %v1500
    %1981 = vmatprep.subr.bf16.mxu0 %v1504
    %1982 = vmatpush1.bf16.msra.mxu0 %v1503
    %1983 = vmatprep.subr.bf16.mxu0 %v1507
    %1984 = vmatpush1.bf16.msra.mxu0 %v1506
    %1985 = vmatprep.subr.bf16.mxu0 %v1510
    %1986 = vmatpush1.bf16.msra.mxu0 %v1509
    %1987 = vmatprep.subr.bf16.mxu0 %v1513
    %1988 = vmatpush1.bf16.msra.mxu0 %v1512
    %1989 = vmatprep.subr.bf16.mxu0 %v1516
    %1990 = vmatpush1.bf16.msra.mxu0 %v1515
    %1991 = vmatprep.mubr.bf16.mxu0 %v187
    %1992 = vmatmul.mubr.bf16.gmra.mrb[0].mxu0 %v186
    %v1993 = vpop.f32.mrb[0].mxu0
    %v1994 = vadd.f32 %v1943, %v1993
    %v1995 = vpop.f32.mrb[0].mxu0
    %v1996 = vadd.f32 %v1945, %v1995
    %v1997 = vpop.f32.mrb[0].mxu0
    %v1998 = vadd.f32 %v1947, %v1997
    %v1999 = vpop.f32.mrb[0].mxu0
    %v2000 = vadd.f32 %v1949, %v1999
    %2001 = vmatprep.mubr.bf16.mxu0 %v189
    %2002 = vmatmul.mubr.bf16.gmra.mrb[0].mxu0 %v188
    %v2003 = vpop.f32.mrb[0].mxu0
    %v2004 = vadd.f32 %v1953, %v2003
    %v2005 = vpop.f32.mrb[0].mxu0
    %v2006 = vadd.f32 %v1955, %v2005
    %v2007 = vpop.f32.mrb[0].mxu0
    %v2008 = vpop.f32.mrb[0].mxu0
    %2009 = vdwg.mxu0
    %2010 = vmatprep.subr.bf16.mxu0 %v1519
    %2011 = vmatpush1.bf16.msra.mxu0 %v1518
    %2012 = vmatprep.subr.bf16.mxu0 %v1522
    %2013 = vmatpush1.bf16.msra.mxu0 %v1521
    %2014 = vmatprep.subr.bf16.mxu0 %v1525
    %2015 = vmatpush1.bf16.msra.mxu0 %v1524
    %2016 = vmatprep.subr.bf16.mxu0 %v1528
    %2017 = vmatpush1.bf16.msra.mxu0 %v1527
    %2018 = vmatprep.subr.bf16.mxu0 %v1531
    %2019 = vmatpush1.bf16.msra.mxu0 %v1530
    %2020 = vmatprep.subr.bf16.mxu0 %v1534
    %2021 = vmatpush1.bf16.msra.mxu0 %v1533
    %2022 = vmatprep.subr.bf16.mxu0 %v1537
    %2023 = vmatpush1.bf16.msra.mxu0 %v1536
    %2024 = vmatprep.subr.bf16.mxu0 %v1540
    %2025 = vmatpush1.bf16.msra.mxu0 %v1539
    %2026 = vmatprep.subr.bf16.mxu0 %v1543
    %2027 = vmatpush1.bf16.msra.mxu0 %v1542
    %2028 = vmatprep.subr.bf16.mxu0 %v1546
    %2029 = vmatpush1.bf16.msra.mxu0 %v1545
    %2030 = vmatprep.subr.bf16.mxu0 %v1549
    %2031 = vmatpush1.bf16.msra.mxu0 %v1548
    %2032 = vmatprep.subr.bf16.mxu0 %v1552
    %2033 = vmatpush1.bf16.msra.mxu0 %v1551
    %2034 = vmatprep.subr.bf16.mxu0 %v1555
    %2035 = vmatpush1.bf16.msra.mxu0 %v1554
    %2036 = vmatprep.subr.bf16.mxu0 %v1558
    %2037 = vmatpush1.bf16.msra.mxu0 %v1557
    %2038 = vmatprep.subr.bf16.mxu0 %v1561
    %2039 = vmatpush1.bf16.msra.mxu0 %v1560
    %2040 = vmatprep.subr.bf16.mxu0 %v1564
    %2041 = vmatpush1.bf16.msra.mxu0 %v1563
    %2042 = vmatprep.mubr.bf16.mxu0 %v203
    %2043 = vmatmul.mubr.bf16.gmra.mrb[0].mxu0 %v202
    %v2044 = vpop.f32.mrb[0].mxu0
    %v2045 = vadd.f32 %v1994, %v2044
    %v2046 = vpop.f32.mrb[0].mxu0
    %v2047 = vadd.f32 %v1996, %v2046
    %v2048 = vpop.f32.mrb[0].mxu0
    %v2049 = vadd.f32 %v1998, %v2048
    %v2050 = vpop.f32.mrb[0].mxu0
    %v2051 = vadd.f32 %v2000, %v2050
    %2052 = vmatprep.mubr.bf16.mxu0 %v205
    %2053 = vmatmul.mubr.bf16.gmra.mrb[0].mxu0 %v204
    %v2054 = vpop.f32.mrb[0].mxu0
    %v2055 = vadd.f32 %v2004, %v2054
    %v2056 = vpop.f32.mrb[0].mxu0
    %v2057 = vadd.f32 %v2006, %v2056
    %v2058 = vpop.f32.mrb[0].mxu0
    %v2059 = vpop.f32.mrb[0].mxu0
    %2060 = vdwg.mxu0
    %2061 = vmatprep.subr.bf16.mxu0 0
    %2062 = vmatpush1.bf16.msra.mxu0 %v1328
    %2063 = vmatprep.subr.bf16.mxu0 0
    %2064 = vmatpush1.bf16.msra.mxu0 %v1331
    %2065 = vmatprep.subr.bf16.mxu0 0
    %2066 = vmatpush1.bf16.msra.mxu0 %v1334
    %2067 = vmatprep.subr.bf16.mxu0 0
    %2068 = vmatpush1.bf16.msra.mxu0 %v1337
    %2069 = vmatprep.subr.bf16.mxu0 0
    %2070 = vmatpush1.bf16.msra.mxu0 %v1340
    %2071 = vmatprep.subr.bf16.mxu0 0
    %2072 = vmatpush1.bf16.msra.mxu0 %v1343
    %2073 = vmatprep.subr.bf16.mxu0 0
    %2074 = vmatpush1.bf16.msra.mxu0 %v1346
    %2075 = vmatprep.subr.bf16.mxu0 0
    %2076 = vmatpush1.bf16.msra.mxu0 %v1349
    %2077 = vmatprep.subr.bf16.mxu0 0
    %2078 = vmatpush1.bf16.msra.mxu0 %v1352
    %2079 = vmatprep.subr.bf16.mxu0 0
    %2080 = vmatpush1.bf16.msra.mxu0 %v1355
    %2081 = vmatprep.subr.bf16.mxu0 0
    %2082 = vmatpush1.bf16.msra.mxu0 %v1358
    %2083 = vmatprep.subr.bf16.mxu0 0
    %2084 = vmatpush1.bf16.msra.mxu0 %v1361
    %2085 = vmatprep.subr.bf16.mxu0 0
    %2086 = vmatpush1.bf16.msra.mxu0 %v1364
    %2087 = vmatprep.subr.bf16.mxu0 0
    %2088 = vmatpush1.bf16.msra.mxu0 %v1367
    %2089 = vmatprep.subr.bf16.mxu0 0
    %2090 = vmatpush1.bf16.msra.mxu0 %v1370
    %2091 = vmatprep.subr.bf16.mxu0 0
    %2092 = vmatpush1.bf16.msra.mxu0 %v1373
    %2093 = vmatprep.mubr.bf16.mxu0 %v99
    %2094 = vmatmul.mubr.bf16.gmra.mrb[0].mxu0 %v98
    %v2095 = vpop.f32.mrb[0].mxu0
    %v2096 = vadd.f32 0.0, %v2095
    %v2097 = vpop.f32.mrb[0].mxu0
    %v2098 = vpop.f32.mrb[0].mxu0
    %v2099 = vadd.f32 0.0, %v2098
    %v2100 = vpop.f32.mrb[0].mxu0
    %2101 = vmatprep.mubr.bf16.mxu0 %v101
    %2102 = vmatmul.mubr.bf16.gmra.mrb[0].mxu0 %v100
    %v2103 = vpop.f32.mrb[0].mxu0
    %v2104 = vadd.f32 0.0, %v2103
    %v2105 = vpop.f32.mrb[0].mxu0
    %v2106 = vpop.f32.mrb[0].mxu0
    %v2107 = vpop.f32.mrb[0].mxu0
    %2108 = vdwg.mxu0
    %2109 = vmatprep.subr.bf16.mxu0 0
    %2110 = vmatpush1.bf16.msra.mxu0 %v1376
    %2111 = vmatprep.subr.bf16.mxu0 0
    %2112 = vmatpush1.bf16.msra.mxu0 %v1379
    %2113 = vmatprep.subr.bf16.mxu0 0
    %2114 = vmatpush1.bf16.msra.mxu0 %v1382
    %2115 = vmatprep.subr.bf16.mxu0 0
    %2116 = vmatpush1.bf16.msra.mxu0 %v1385
    %2117 = vmatprep.subr.bf16.mxu0 0
    %2118 = vmatpush1.bf16.msra.mxu0 %v1388
    %2119 = vmatprep.subr.bf16.mxu0 0
    %2120 = vmatpush1.bf16.msra.mxu0 %v1391
    %2121 = vmatprep.subr.bf16.mxu0 0
    %2122 = vmatpush1.bf16.msra.mxu0 %v1394
    %2123 = vmatprep.subr.bf16.mxu0 0
    %2124 = vmatpush1.bf16.msra.mxu0 %v1397
    %2125 = vmatprep.subr.bf16.mxu0 0
    %2126 = vmatpush1.bf16.msra.mxu0 %v1400
    %2127 = vmatprep.subr.bf16.mxu0 0
    %2128 = vmatpush1.bf16.msra.mxu0 %v1403
    %2129 = vmatprep.subr.bf16.mxu0 0
    %2130 = vmatpush1.bf16.msra.mxu0 %v1406
    %2131 = vmatprep.subr.bf16.mxu0 0
    %2132 = vmatpush1.bf16.msra.mxu0 %v1409
    %2133 = vmatprep.subr.bf16.mxu0 0
    %2134 = vmatpush1.bf16.msra.mxu0 %v1412
    %2135 = vmatprep.subr.bf16.mxu0 0
    %2136 = vmatpush1.bf16.msra.mxu0 %v1415
    %2137 = vmatprep.subr.bf16.mxu0 0
    %2138 = vmatpush1.bf16.msra.mxu0 %v1418
    %2139 = vmatprep.subr.bf16.mxu0 0
    %2140 = vmatpush1.bf16.msra.mxu0 %v1421
    %2141 = vmatprep.mubr.bf16.mxu0 %v131
    %2142 = vmatmul.mubr.bf16.gmra.mrb[0].mxu0 %v130
    %v2143 = vpop.f32.mrb[0].mxu0
    %v2144 = vadd.f32 %v2096, %v2143
    %v2145 = vpop.f32.mrb[0].mxu0
    %v2146 = vpop.f32.mrb[0].mxu0
    %v2147 = vadd.f32 %v2099, %v2146
    %v2148 = vpop.f32.mrb[0].mxu0
    %2149 = vmatprep.mubr.bf16.mxu0 %v133
    %2150 = vmatmul.mubr.bf16.gmra.mrb[0].mxu0 %v132
    %v2151 = vpop.f32.mrb[0].mxu0
    %v2152 = vadd.f32 %v2104, %v2151
    %v2153 = vpop.f32.mrb[0].mxu0
    %v2154 = vpop.f32.mrb[0].mxu0
    %v2155 = vpop.f32.mrb[0].mxu0
    %2156 = vdwg.mxu0
    %2157 = vmatprep.subr.bf16.mxu0 0
    %2158 = vmatpush1.bf16.msra.mxu0 %v1424
    %2159 = vmatprep.subr.bf16.mxu0 0
    %2160 = vmatpush1.bf16.msra.mxu0 %v1427
    %2161 = vmatprep.subr.bf16.mxu0 0
    %2162 = vmatpush1.bf16.msra.mxu0 %v1430
    %2163 = vmatprep.subr.bf16.mxu0 0
    %2164 = vmatpush1.bf16.msra.mxu0 %v1433
    %2165 = vmatprep.subr.bf16.mxu0 0
    %2166 = vmatpush1.bf16.msra.mxu0 %v1436
    %2167 = vmatprep.subr.bf16.mxu0 0
    %2168 = vmatpush1.bf16.msra.mxu0 %v1439
    %2169 = vmatprep.subr.bf16.mxu0 0
    %2170 = vmatpush1.bf16.msra.mxu0 %v1442
    %2171 = vmatprep.subr.bf16.mxu0 0
    %2172 = vmatpush1.bf16.msra.mxu0 %v1445
    %2173 = vmatprep.subr.bf16.mxu0 0
    %2174 = vmatpush1.bf16.msra.mxu0 %v1448
    %2175 = vmatprep.subr.bf16.mxu0 0
    %2176 = vmatpush1.bf16.msra.mxu0 %v1451
    %2177 = vmatprep.subr.bf16.mxu0 0
    %2178 = vmatpush1.bf16.msra.mxu0 %v1454
    %2179 = vmatprep.subr.bf16.mxu0 0
    %2180 = vmatpush1.bf16.msra.mxu0 %v1457
    %2181 = vmatprep.subr.bf16.mxu0 0
    %2182 = vmatpush1.bf16.msra.mxu0 %v1460
    %2183 = vmatprep.subr.bf16.mxu0 0
    %2184 = vmatpush1.bf16.msra.mxu0 %v1463
    %2185 = vmatprep.subr.bf16.mxu0 0
    %2186 = vmatpush1.bf16.msra.mxu0 %v1466
    %2187 = vmatprep.subr.bf16.mxu0 0
    %2188 = vmatpush1.bf16.msra.mxu0 %v1469
    %2189 = vmatprep.mubr.bf16.mxu0 %v159
    %2190 = vmatmul.mubr.bf16.gmra.mrb[0].mxu0 %v158
    %v2191 = vpop.f32.mrb[0].mxu0
    %v2192 = vadd.f32 %v2144, %v2191
    %v2193 = vpop.f32.mrb[0].mxu0
    %v2194 = vpop.f32.mrb[0].mxu0
    %v2195 = vadd.f32 %v2147, %v2194
    %v2196 = vpop.f32.mrb[0].mxu0
    %2197 = vmatprep.mubr.bf16.mxu0 %v161
    %2198 = vmatmul.mubr.bf16.gmra.mrb[0].mxu0 %v160
    %v2199 = vpop.f32.mrb[0].mxu0
    %v2200 = vadd.f32 %v2152, %v2199
    %v2201 = vpop.f32.mrb[0].mxu0
    %v2202 = vpop.f32.mrb[0].mxu0
    %v2203 = vpop.f32.mrb[0].mxu0
    %2204 = vdwg.mxu0
    %2205 = vmatprep.subr.bf16.mxu0 0
    %2206 = vmatpush1.bf16.msra.mxu0 %v1472
    %2207 = vmatprep.subr.bf16.mxu0 0
    %2208 = vmatpush1.bf16.msra.mxu0 %v1475
    %2209 = vmatprep.subr.bf16.mxu0 0
    %2210 = vmatpush1.bf16.msra.mxu0 %v1478
    %2211 = vmatprep.subr.bf16.mxu0 0
    %2212 = vmatpush1.bf16.msra.mxu0 %v1481
    %2213 = vmatprep.subr.bf16.mxu0 0
    %2214 = vmatpush1.bf16.msra.mxu0 %v1484
    %2215 = vmatprep.subr.bf16.mxu0 0
    %2216 = vmatpush1.bf16.msra.mxu0 %v1487
    %2217 = vmatprep.subr.bf16.mxu0 0
    %2218 = vmatpush1.bf16.msra.mxu0 %v1490
    %2219 = vmatprep.subr.bf16.mxu0 0
    %2220 = vmatpush1.bf16.msra.mxu0 %v1493
    %2221 = vmatprep.subr.bf16.mxu0 0
    %2222 = vmatpush1.bf16.msra.mxu0 %v1496
    %2223 = vmatprep.subr.bf16.mxu0 0
    %2224 = vmatpush1.bf16.msra.mxu0 %v1499
    %2225 = vmatprep.subr.bf16.mxu0 0
    %2226 = vmatpush1.bf16.msra.mxu0 %v1502
    %2227 = vmatprep.subr.bf16.mxu0 0
    %2228 = vmatpush1.bf16.msra.mxu0 %v1505
    %2229 = vmatprep.subr.bf16.mxu0 0
    %2230 = vmatpush1.bf16.msra.mxu0 %v1508
    %2231 = vmatprep.subr.bf16.mxu0 0
    %2232 = vmatpush1.bf16.msra.mxu0 %v1511
    %2233 = vmatprep.subr.bf16.mxu0 0
    %2234 = vmatpush1.bf16.msra.mxu0 %v1514
    %2235 = vmatprep.subr.bf16.mxu0 0
    %2236 = vmatpush1.bf16.msra.mxu0 %v1517
    %2237 = vmatprep.mubr.bf16.mxu0 %v187
    %2238 = vmatmul.mubr.bf16.gmra.mrb[0].mxu0 %v186
    %v2239 = vpop.f32.mrb[0].mxu0
    %v2240 = vadd.f32 %v2192, %v2239
    %v2241 = vpop.f32.mrb[0].mxu0
    %v2242 = vpop.f32.mrb[0].mxu0
    %v2243 = vadd.f32 %v2195, %v2242
    %v2244 = vpop.f32.mrb[0].mxu0
    %2245 = vmatprep.mubr.bf16.mxu0 %v189
    %2246 = vmatmul.mubr.bf16.gmra.mrb[0].mxu0 %v188
    %v2247 = vpop.f32.mrb[0].mxu0
    %v2248 = vadd.f32 %v2200, %v2247
    %v2249 = vpop.f32.mrb[0].mxu0
    %v2250 = vpop.f32.mrb[0].mxu0
    %v2251 = vpop.f32.mrb[0].mxu0
    %2252 = vdwg.mxu0
    %2253 = vmatprep.subr.bf16.mxu0 0
    %2254 = vmatpush1.bf16.msra.mxu0 %v1520
    %2255 = vmatprep.subr.bf16.mxu0 0
    %2256 = vmatpush1.bf16.msra.mxu0 %v1523
    %2257 = vmatprep.subr.bf16.mxu0 0
    %2258 = vmatpush1.bf16.msra.mxu0 %v1526
    %2259 = vmatprep.subr.bf16.mxu0 0
    %2260 = vmatpush1.bf16.msra.mxu0 %v1529
    %2261 = vmatprep.subr.bf16.mxu0 0
    %2262 = vmatpush1.bf16.msra.mxu0 %v1532
    %2263 = vmatprep.subr.bf16.mxu0 0
    %2264 = vmatpush1.bf16.msra.mxu0 %v1535
    %2265 = vmatprep.subr.bf16.mxu0 0
    %2266 = vmatpush1.bf16.msra.mxu0 %v1538
    %2267 = vmatprep.subr.bf16.mxu0 0
    %2268 = vmatpush1.bf16.msra.mxu0 %v1541
    %2269 = vmatprep.subr.bf16.mxu0 0
    %2270 = vmatpush1.bf16.msra.mxu0 %v1544
    %2271 = vmatprep.subr.bf16.mxu0 0
    %2272 = vmatpush1.bf16.msra.mxu0 %v1547
    %2273 = vmatprep.subr.bf16.mxu0 0
    %2274 = vmatpush1.bf16.msra.mxu0 %v1550
    %2275 = vmatprep.subr.bf16.mxu0 0
    %2276 = vmatpush1.bf16.msra.mxu0 %v1553
    %2277 = vmatprep.subr.bf16.mxu0 0
    %2278 = vmatpush1.bf16.msra.mxu0 %v1556
    %2279 = vmatprep.subr.bf16.mxu0 0
    %2280 = vmatpush1.bf16.msra.mxu0 %v1559
    %2281 = vmatprep.subr.bf16.mxu0 0
    %2282 = vmatpush1.bf16.msra.mxu0 %v1562
    %2283 = vmatprep.subr.bf16.mxu0 0
    %2284 = vmatpush1.bf16.msra.mxu0 %v1565
    %2285 = vmatprep.mubr.bf16.mxu0 %v203
    %2286 = vmatmul.mubr.bf16.gmra.mrb[0].mxu0 %v202
    %v2287 = vpop.f32.mrb[0].mxu0
    %v2288 = vadd.f32 %v2240, %v2287
    %v2289 = vpop.f32.mrb[0].mxu0
    %v2290 = vpop.f32.mrb[0].mxu0
    %v2291 = vadd.f32 %v2243, %v2290
    %v2292 = vpop.f32.mrb[0].mxu0
    %2293 = vmatprep.mubr.bf16.mxu0 %v205
    %2294 = vmatmul.mubr.bf16.gmra.mrb[0].mxu0 %v204
    %v2295 = vpop.f32.mrb[0].mxu0
    %v2296 = vadd.f32 %v2248, %v2295
    %v2297 = vpop.f32.mrb[0].mxu0
    %v2298 = vpop.f32.mrb[0].mxu0
    %v2299 = vpop.f32.mrb[0].mxu0
    %2300 = vdwg.mxu0
    %v2301 = vld [vmem:[#allocation5] sm:$0x3]
    %v2302 = vadd.f32 %v2045, %v2049
    %v2303 = vadd.f32 %v2302, %v2055
    %v2304 = vrot.slane %v2303, 4
    %v2305 = vadd.f32 %v2303, %v2304
    %v2306 = vrot.slane %v2305, 2
    %v2307 = vadd.f32 %v2305, %v2306
    %v2308 = vrot.slane %v2307, 1
    %v2309 = vadd.f32 %v2307, %v2308
    %v2310 = vadd.f32 %v2047, %v2051
    %v2311 = vadd.f32 %v2310, %v2057
    %v2312 = vrot.slane %v2311, 4
    %v2313 = vadd.f32 %v2311, %v2312
    %v2314 = vrot.slane %v2313, 2
    %v2315 = vadd.f32 %v2313, %v2314
    %v2316 = vrot.slane %v2315, 1
    %v2317 = vadd.f32 %v2315, %v2316
    %v2318 = vadd.f32 %v2288, %v2291
    %v2319 = vadd.f32 %v2318, %v2296
    %v2320 = vrot.slane %v2319, 4
    %v2321 = vadd.f32 %v2319, %v2320
    %v2322 = vrot.slane %v2321, 2
    %v2323 = vadd.f32 %v2321, %v2322
    %v2324 = vrot.slane %v2323, 1
    %v2325 = vadd.f32 %v2323, %v2324
    %v2326 = vmul.f32 %v2045, %v2045
    %v2327 = vmul.f32 %v2047, %v2047
    %v2328 = vmul.f32 %v2288, %v2288
    %v2329 = vmul.f32 %v2049, %v2049
    %v2330 = vmul.f32 %v2051, %v2051
    %v2331 = vmul.f32 %v2291, %v2291
    %v2332 = vmul.f32 %v2055, %v2055
    %v2333 = vmul.f32 %v2057, %v2057
    %v2334 = vmul.f32 %v2296, %v2296
    %v2335 = vadd.f32 %v2326, %v2329
    %v2336 = vadd.f32 %v2335, %v2332
    %v2337 = vrot.slane %v2336, 4
    %v2338 = vadd.f32 %v2336, %v2337
    %v2339 = vrot.slane %v2338, 2
    %v2340 = vadd.f32 %v2338, %v2339
    %v2341 = vrot.slane %v2340, 1
    %v2342 = vadd.f32 %v2340, %v2341
    %v2343 = vadd.f32 %v2327, %v2330
    %v2344 = vadd.f32 %v2343, %v2333
    %v2345 = vrot.slane %v2344, 4
    %v2346 = vadd.f32 %v2344, %v2345
    %v2347 = vrot.slane %v2346, 2
    %v2348 = vadd.f32 %v2346, %v2347
    %v2349 = vrot.slane %v2348, 1
    %v2350 = vadd.f32 %v2348, %v2349
    %v2351 = vadd.f32 %v2328, %v2331
    %v2352 = vadd.f32 %v2351, %v2334
    %v2353 = vrot.slane %v2352, 4
    %v2354 = vadd.f32 %v2352, %v2353
    %v2355 = vrot.slane %v2354, 2
    %v2356 = vadd.f32 %v2354, %v2355
    %v2357 = vrot.slane %v2356, 1
    %v2358 = vadd.f32 %v2356, %v2357
    %2360 = vrot.lane.b32.xlu0 %v2309, 96
    %v2361 = vpop.permute.xlu0 %2360
    %v2363 = vadd.f32 %v2309, %v2361
    %2365 = vrot.lane.b32.xlu0 %v2342, 96
    %v2366 = vpop.permute.xlu0 %2365
    %v2368 = vadd.f32 %v2342, %v2366
    %2369 = vrot.lane.b32.xlu0 %v2309, 64
    %v2370 = vpop.permute.xlu0 %2369
    %v2372 = vadd.f32 %v2363, %v2370
    %2373 = vrot.lane.b32.xlu0 %v2342, 64
    %v2374 = vpop.permute.xlu0 %2373
    %v2376 = vadd.f32 %v2368, %v2374
    %2377 = vrot.lane.b32.xlu0 %v2309, 32
    %v2378 = vpop.permute.xlu0 %2377
    %v2380 = vadd.f32 %v2372, %v2378
    %2381 = vrot.lane.b32.xlu0 %v2342, 32
    %v2382 = vpop.permute.xlu0 %2381
    %v2384 = vadd.f32 %v2376, %v2382
    %v2385 = vadd.f32 %v2380, %v2317
    %v2386 = vadd.f32 %v2384, %v2350
    %2388 = vrot.lane.b32.xlu0 %v2317, 96
    %v2389 = vpop.permute.xlu0 %2388
    %v2391 = vadd.f32 %v2385, %v2389
    %2393 = vrot.lane.b32.xlu0 %v2350, 96
    %v2394 = vpop.permute.xlu0 %2393
    %v2396 = vadd.f32 %v2386, %v2394
    %2397 = vrot.lane.b32.xlu0 %v2317, 64
    %v2398 = vpop.permute.xlu0 %2397
    %v2400 = vadd.f32 %v2391, %v2398
    %2401 = vrot.lane.b32.xlu0 %v2350, 64
    %v2402 = vpop.permute.xlu0 %2401
    %v2404 = vadd.f32 %v2396, %v2402
    %2405 = vrot.lane.b32.xlu0 %v2317, 32
    %v2406 = vpop.permute.xlu0 %2405
    %v2408 = vadd.f32 %v2400, %v2406
    %2409 = vrot.lane.b32.xlu0 %v2350, 32
    %v2410 = vpop.permute.xlu0 %2409
    %v2412 = vadd.f32 %v2404, %v2410
    %v2413 = vadd.f32 %v2408, %v2325
    %v2414 = vadd.f32 %v2412, %v2358
    %2416 = vrot.lane.b32.xlu0 %v2325, 96
    %v2417 = vpop.permute.xlu0 %2416
    %v2419 = vadd.f32 %v2413, %v2417
    %2421 = vrot.lane.b32.xlu0 %v2358, 96
    %v2422 = vpop.permute.xlu0 %2421
    %v2424 = vadd.f32 %v2414, %v2422
    %2425 = vrot.lane.b32.xlu0 %v2325, 64
    %v2426 = vpop.permute.xlu0 %2425
    %v2428 = vadd.f32 %v2419, %v2426
    %2429 = vrot.lane.b32.xlu0 %v2358, 64
    %v2430 = vpop.permute.xlu0 %2429
    %v2432 = vadd.f32 %v2424, %v2430
    %2433 = vrot.lane.b32.xlu0 %v2325, 32
    %v2434 = vpop.permute.xlu0 %2433
    %v2436 = vadd.f32 %v2428, %v2434
    %2437 = vrot.lane.b32.xlu0 %v2358, 32
    %v2438 = vpop.permute.xlu0 %2437
    %v2440 = vadd.f32 %v2432, %v2438
    %v2441 = vrcp.pop 288.0
    %v2442 = vmul.f32 %v2436, %v2441
    %v2443 = vmul.f32 %v2440, %v2441
    %v2444 = vmul.f32 %v2442, %v2442
    %v2445 = vsub.f32 %v2443, %v2444
    %v2446 = vmax.f32 %v2445, 0.0
    %v2447 = vadd.f32 %v2446, 1e-05
    %v2448 = vrsqrt.pop %v2447
    %v2449 = vmul.f32 %v2301, %v2448
    %v2450 = vmul.f32 %v2442, %v2449
    %v2452 = vrot.slane %v2450, 7
    %v2454 = vsub.f32 %v2301, %v2452
    %2456 = vrot.lane.b32.xlu0 %v2449, 32
    %v2457 = vpop.permute.xlu0 %2456
    %2459 = vrot.lane.b32.xlu0 %v2449, 64
    %v2460 = vpop.permute.xlu0 %2459
    %2462 = vrot.lane.b32.xlu0 %v2449, 96
    %v2463 = vpop.permute.xlu0 %2462
    %vm2465 = vcmask 261120
    %v2466 = vsel %vm2465, %v2449, %v2457
    %vm2467 = vcmask 523264
    %v2468 = vsel %vm2467, %v2466, %v2460
    %vm2469 = vcmask 785408
    %v2470 = vsel %vm2469, %v2468, %v2463
    %2472 = vrot.lane.b32.xlu0 %v2454, 32
    %v2473 = vpop.permute.xlu0 %2472
    %2475 = vrot.lane.b32.xlu0 %v2454, 64
    %v2476 = vpop.permute.xlu0 %2475
    %2478 = vrot.lane.b32.xlu0 %v2454, 96
    %v2479 = vpop.permute.xlu0 %2478
    %v2481 = vsel %vm2465, %v2454, %v2473
    %v2482 = vsel %vm2467, %v2481, %v2476
    %v2483 = vsel %vm2469, %v2482, %v2479
    %v2484 = vlaneseq
    %v2485 = vshrl.u32 %v2484, 7
    %v2486 = vsub.s32 0, %v2485
    %v2487 = vrot.slane %v2470, %v2486
    %v2488 = vmul.f32 %v2045, %v2487
    %v2489 = vmul.f32 %v2047, %v2487
    %v2490 = vmul.f32 %v2288, %v2487
    %v2491 = vmul.f32 %v2049, %v2487
    %v2492 = vmul.f32 %v2051, %v2487
    %v2493 = vmul.f32 %v2291, %v2487
    %v2494 = vmul.f32 %v2055, %v2487
    %v2495 = vmul.f32 %v2057, %v2487
    %v2496 = vmul.f32 %v2296, %v2487
    %v2497 = vlaneseq
    %v2498 = vshrl.u32 %v2497, 7
    %v2499 = vsub.s32 1, %v2498
    %v2500 = vrot.slane %v2483, %v2499
    %v2501 = vadd.f32 %v2488, %v2500
    %v2502 = vadd.f32 %v2489, %v2500
    %v2503 = vadd.f32 %v2490, %v2500
    %v2504 = vadd.f32 %v2491, %v2500
    %v2505 = vadd.f32 %v2492, %v2500
    %v2506 = vadd.f32 %v2493, %v2500
    %v2507 = vadd.f32 %v2494, %v2500
    %v2508 = vadd.f32 %v2495, %v2500
    %v2509 = vadd.f32 %v2496, %v2500
    %vm2510 = vcmp.gt.f32.partialorder %v2501, 20.0
    %vm2511 = vcmp.gt.f32.partialorder %v2502, 20.0
    %vm2512 = vcmp.gt.f32.partialorder %v2503, 20.0
    %vm2513 = vcmp.gt.f32.partialorder %v2504, 20.0
    %vm2514 = vcmp.gt.f32.partialorder %v2505, 20.0
    %vm2515 = vcmp.gt.f32.partialorder %v2506, 20.0
    %vm2516 = vcmp.gt.f32.partialorder %v2507, 20.0
    %vm2517 = vcmp.gt.f32.partialorder %v2508, 20.0
    %vm2518 = vcmp.gt.f32.partialorder %v2509, 20.0
    %v2519 = vmin.f32 %v2501, 20.0
    %v2520 = vmin.f32 %v2502, 20.0
    %v2521 = vmin.f32 %v2503, 20.0
    %v2522 = vmin.f32 %v2504, 20.0
    %v2523 = vmin.f32 %v2505, 20.0
    %v2524 = vmin.f32 %v2506, 20.0
    %v2525 = vmin.f32 %v2507, 20.0
    %v2526 = vmin.f32 %v2508, 20.0
    %v2527 = vmin.f32 %v2509, 20.0
    %v2528 = vmul.f32 %v2519, 1.442695
    %v2529 = vpow.pop %v2528
    %v2530 = vmul.f32 %v2520, 1.442695
    %v2531 = vpow.pop %v2530
    %v2532 = vmul.f32 %v2521, 1.442695
    %v2533 = vpow.pop %v2532
    %v2534 = vmul.f32 %v2522, 1.442695
    %v2535 = vpow.pop %v2534
    %v2536 = vmul.f32 %v2523, 1.442695
    %v2537 = vpow.pop %v2536
    %v2538 = vmul.f32 %v2524, 1.442695
    %v2539 = vpow.pop %v2538
    %v2540 = vmul.f32 %v2525, 1.442695
    %v2541 = vpow.pop %v2540
    %v2542 = vmul.f32 %v2526, 1.442695
    %v2543 = vpow.pop %v2542
    %v2544 = vmul.f32 %v2527, 1.442695
    %v2545 = vpow.pop %v2544
    %v2546 = vadd.f32 %v2529, 1.0
    %v2547 = vlog2.pop %v2546
    %v2548 = vmul.f32 %v2547, 0.6931472
    %v2549 = vmul.f32 -0.5, %v2529
    %v2550 = vadd.f32 %v2549, 1.0
    %v2551 = vmul.f32 %v2550, %v2529
    %v2552 = vand.u32 2147483647, %v2529
    %vm2553 = vcmp.lt.f32.partialorder %v2552, 0.0004427343
    %v2554 = vsel %vm2553, %v2551, %v2548
    %v2555 = vadd.f32 %v2531, 1.0
    %v2556 = vlog2.pop %v2555
    %v2557 = vmul.f32 %v2556, 0.6931472
    %v2558 = vmul.f32 -0.5, %v2531
    %v2559 = vadd.f32 %v2558, 1.0
    %v2560 = vmul.f32 %v2559, %v2531
    %v2561 = vand.u32 2147483647, %v2531
    %vm2562 = vcmp.lt.f32.partialorder %v2561, 0.0004427343
    %v2563 = vsel %vm2562, %v2560, %v2557
    %v2564 = vadd.f32 %v2533, 1.0
    %v2565 = vlog2.pop %v2564
    %v2566 = vmul.f32 %v2565, 0.6931472
    %v2567 = vmul.f32 -0.5, %v2533
    %v2568 = vadd.f32 %v2567, 1.0
    %v2569 = vmul.f32 %v2568, %v2533
    %v2570 = vand.u32 2147483647, %v2533
    %vm2571 = vcmp.lt.f32.partialorder %v2570, 0.0004427343
    %v2572 = vsel %vm2571, %v2569, %v2566
    %v2573 = vadd.f32 %v2535, 1.0
    %v2574 = vlog2.pop %v2573
    %v2575 = vmul.f32 %v2574, 0.6931472
    %v2576 = vmul.f32 -0.5, %v2535
    %v2577 = vadd.f32 %v2576, 1.0
    %v2578 = vmul.f32 %v2577, %v2535
    %v2579 = vand.u32 2147483647, %v2535
    %vm2580 = vcmp.lt.f32.partialorder %v2579, 0.0004427343
    %v2581 = vsel %vm2580, %v2578, %v2575
    %v2582 = vadd.f32 %v2537, 1.0
    %v2583 = vlog2.pop %v2582
    %v2584 = vmul.f32 %v2583, 0.6931472
    %v2585 = vmul.f32 -0.5, %v2537
    %v2586 = vadd.f32 %v2585, 1.0
    %v2587 = vmul.f32 %v2586, %v2537
    %v2588 = vand.u32 2147483647, %v2537
    %vm2589 = vcmp.lt.f32.partialorder %v2588, 0.0004427343
    %v2590 = vsel %vm2589, %v2587, %v2584
    %v2591 = vadd.f32 %v2539, 1.0
    %v2592 = vlog2.pop %v2591
    %v2593 = vmul.f32 %v2592, 0.6931472
    %v2594 = vmul.f32 -0.5, %v2539
    %v2595 = vadd.f32 %v2594, 1.0
    %v2596 = vmul.f32 %v2595, %v2539
    %v2597 = vand.u32 2147483647, %v2539
    %vm2598 = vcmp.lt.f32.partialorder %v2597, 0.0004427343
    %v2599 = vsel %vm2598, %v2596, %v2593
    %v2600 = vadd.f32 %v2541, 1.0
    %v2601 = vlog2.pop %v2600
    %v2602 = vmul.f32 %v2601, 0.6931472
    %v2603 = vmul.f32 -0.5, %v2541
    %v2604 = vadd.f32 %v2603, 1.0
    %v2605 = vmul.f32 %v2604, %v2541
    %v2606 = vand.u32 2147483647, %v2541
    %vm2607 = vcmp.lt.f32.partialorder %v2606, 0.0004427343
    %v2608 = vsel %vm2607, %v2605, %v2602
    %v2609 = vadd.f32 %v2543, 1.0
    %v2610 = vlog2.pop %v2609
    %v2611 = vmul.f32 %v2610, 0.6931472
    %v2612 = vmul.f32 -0.5, %v2543
    %v2613 = vadd.f32 %v2612, 1.0
    %v2614 = vmul.f32 %v2613, %v2543
    %v2615 = vand.u32 2147483647, %v2543
    %vm2616 = vcmp.lt.f32.partialorder %v2615, 0.0004427343
    %v2617 = vsel %vm2616, %v2614, %v2611
    %v2618 = vadd.f32 %v2545, 1.0
    %v2619 = vlog2.pop %v2618
    %v2620 = vmul.f32 %v2619, 0.6931472
    %v2621 = vmul.f32 -0.5, %v2545
    %v2622 = vadd.f32 %v2621, 1.0
    %v2623 = vmul.f32 %v2622, %v2545
    %v2624 = vand.u32 2147483647, %v2545
    %vm2625 = vcmp.lt.f32.partialorder %v2624, 0.0004427343
    %v2626 = vsel %vm2625, %v2623, %v2620
    %v2627 = vsel %vm2510, %v2501, %v2554
    %v2628 = vsel %vm2511, %v2502, %v2563
    %v2629 = vsel %vm2512, %v2503, %v2572
    %v2630 = vsel %vm2513, %v2504, %v2581
    %v2631 = vsel %vm2514, %v2505, %v2590
    %v2632 = vsel %vm2515, %v2506, %v2599
    %v2633 = vsel %vm2516, %v2507, %v2608
    %v2634 = vsel %vm2517, %v2508, %v2617
    %v2635 = vsel %vm2518, %v2509, %v2626
    %v2642 = vrot.slane %v2630, 4
    %v2643 = vrot.slane %v2633, 4
    %v2644 = vsel %vm85, %v2642, %v2643
    %v2645 = vrot.slane %v2631, 4
    %v2646 = vrot.slane %v2634, 4
    %v2647 = vsel %vm85, %v2645, %v2646
    %v2648 = vrot.slane %v2632, 4
    %v2649 = vrot.slane %v2635, 4
    %v2650 = vsel %vm85, %v2648, %v2649
    %v2654 = vpack.c.bf16 %v2644, %v2627
    %v2655 = vpack.c.bf16 %v2647, %v2628
    %v2656 = vpack.c.bf16 %v2650, %v2629
    %v2660 = vrot.slane %v2627, 1
    %v2661 = vrot.slane %v2630, 1
    %v2662 = vsel %vm106, %v2660, %v2661
    %v2663 = vrot.slane %v2628, 1
    %v2664 = vrot.slane %v2631, 1
    %v2665 = vsel %vm106, %v2663, %v2664
    %v2666 = vrot.slane %v2629, 1
    %v2667 = vrot.slane %v2632, 1
    %v2668 = vsel %vm106, %v2666, %v2667
    %v2672 = vrot.slane %v2630, 5
    %v2673 = vrot.slane %v2633, 5
    %v2674 = vsel %vm117, %v2672, %v2673
    %v2675 = vrot.slane %v2631, 5
    %v2676 = vrot.slane %v2634, 5
    %v2677 = vsel %vm117, %v2675, %v2676
    %v2678 = vrot.slane %v2632, 5
    %v2679 = vrot.slane %v2635, 5
    %v2680 = vsel %vm117, %v2678, %v2679
    %v2684 = vpack.c.bf16 %v2674, %v2662
    %v2685 = vpack.c.bf16 %v2677, %v2665
    %v2686 = vpack.c.bf16 %v2680, %v2668
    %v2687 = vrot.slane %v2627, 2
    %v2688 = vrot.slane %v2630, 2
    %v2689 = vsel %vm134, %v2687, %v2688
    %v2690 = vrot.slane %v2628, 2
    %v2691 = vrot.slane %v2631, 2
    %v2692 = vsel %vm134, %v2690, %v2691
    %v2693 = vrot.slane %v2629, 2
    %v2694 = vrot.slane %v2632, 2
    %v2695 = vsel %vm134, %v2693, %v2694
    %v2699 = vrot.slane %v2630, 6
    %v2700 = vrot.slane %v2633, 6
    %v2701 = vsel %vm145, %v2699, %v2700
    %v2702 = vrot.slane %v2631, 6
    %v2703 = vrot.slane %v2634, 6
    %v2704 = vsel %vm145, %v2702, %v2703
    %v2705 = vrot.slane %v2632, 6
    %v2706 = vrot.slane %v2635, 6
    %v2707 = vsel %vm145, %v2705, %v2706
    %v2711 = vpack.c.bf16 %v2701, %v2689
    %v2712 = vpack.c.bf16 %v2704, %v2692
    %v2713 = vpack.c.bf16 %v2707, %v2695
    %v2714 = vrot.slane %v2627, 3
    %v2715 = vrot.slane %v2630, 3
    %v2716 = vsel %vm162, %v2714, %v2715
    %v2717 = vrot.slane %v2628, 3
    %v2718 = vrot.slane %v2631, 3
    %v2719 = vsel %vm162, %v2717, %v2718
    %v2720 = vrot.slane %v2629, 3
    %v2721 = vrot.slane %v2632, 3
    %v2722 = vsel %vm162, %v2720, %v2721
    %v2726 = vrot.slane %v2630, 7
    %v2727 = vrot.slane %v2633, 7
    %v2728 = vsel %vm173, %v2726, %v2727
    %v2729 = vrot.slane %v2631, 7
    %v2730 = vrot.slane %v2634, 7
    %v2731 = vsel %vm173, %v2729, %v2730
    %v2732 = vrot.slane %v2632, 7
    %v2733 = vrot.slane %v2635, 7
    %v2734 = vsel %vm173, %v2732, %v2733
    %v2738 = vpack.c.bf16 %v2728, %v2716
    %v2739 = vpack.c.bf16 %v2731, %v2719
    %v2740 = vpack.c.bf16 %v2734, %v2722
    %v2741 = vrot.slane %v2627, 4
    %v2742 = vsel %vm85, %v2741, %v2642
    %v2743 = vrot.slane %v2628, 4
    %v2744 = vsel %vm85, %v2743, %v2645
    %v2745 = vrot.slane %v2629, 4
    %v2746 = vsel %vm85, %v2745, %v2648
    %v2750 = vpack.c.bf16 %v2633, %v2742
    %v2751 = vpack.c.bf16 %v2634, %v2744
    %v2752 = vpack.c.bf16 %v2635, %v2746
    %v2753 = vld [vmem:[#allocation7] sm:$0xff]
    %v2754 = vld [vmem:[#allocation7 + $0x8] sm:$0xff]
    %v2755 = vld [vmem:[#allocation7 + $0x10] sm:$0xff]
    %v2756 = vld [vmem:[#allocation7 + $0x18] sm:$0xff]
    %v2757 = vld [vmem:[#allocation7 + $0x20] sm:$0xff]
    %v2758 = vld [vmem:[#allocation7 + $0x28] sm:$0xff]
    %v2759 = vld [vmem:[#allocation7 + $0x30] sm:$0xff]
    %v2760 = vld [vmem:[#allocation7 + $0x38] sm:$0xff]
    %v2761 = vld [vmem:[#allocation7 + $0x40] sm:$0xff]
    %v2762 = vld [vmem:[#allocation7 + $0x48] sm:$0xff]
    %v2763 = vld [vmem:[#allocation7 + $0x50] sm:$0xff]
    %v2764 = vld [vmem:[#allocation7 + $0x58] sm:$0xff]
    %v2765 = vld [vmem:[#allocation7 + $0x60] sm:$0xff]
    %v2766 = vld [vmem:[#allocation7 + $0x68] sm:$0xff]
    %v2767 = vld [vmem:[#allocation7 + $0x70] sm:$0xff]
    %v2768 = vld [vmem:[#allocation7 + $0x78] sm:$0xff]
    %v2769 = vld [vmem:[#allocation7 + $0x80] sm:$0xff]
    %v2770 = vld [vmem:[#allocation7 + $0x88] sm:$0xff]
    %v2771 = vld [vmem:[#allocation7 + $0x90] sm:$0xff]
    %v2772 = vld [vmem:[#allocation7 + $0x98] sm:$0xff]
    %v2773 = vld [vmem:[#allocation7 + $0xa0] sm:$0xff]
    %v2774 = vld [vmem:[#allocation7 + $0xa8] sm:$0xff]
    %v2775 = vld [vmem:[#allocation7 + $0xb0] sm:$0xff]
    %v2776 = vld [vmem:[#allocation7 + $0xb8] sm:$0xff]
    %v2777 = vld [vmem:[#allocation7 + $0xc0] sm:$0xff]
    %v2778 = vld [vmem:[#allocation7 + $0xc8] sm:$0xff]
    %v2779 = vld [vmem:[#allocation7 + $0xd0] sm:$0xff]
    %v2780 = vld [vmem:[#allocation7 + $0xd8] sm:$0xff]
    %v2781 = vld [vmem:[#allocation7 + $0xe0] sm:$0xff]
    %v2782 = vld [vmem:[#allocation7 + $0xe8] sm:$0xff]
    %v2783 = vld [vmem:[#allocation7 + $0xf0] sm:$0xff]
    %v2784 = vld [vmem:[#allocation7 + $0xf8] sm:$0xff]
    %v2785 = vld [vmem:[#allocation7 + $0x100] sm:$0xff]
    %v2786 = vld [vmem:[#allocation7 + $0x108] sm:$0xff]
    %v2787 = vld [vmem:[#allocation7 + $0x110] sm:$0xff]
    %v2788 = vld [vmem:[#allocation7 + $0x118] sm:$0xff]
    %v2789 = vld [vmem:[#allocation7 + $0x120] sm:$0xff]
    %v2790 = vld [vmem:[#allocation7 + $0x128] sm:$0xff]
    %v2791 = vld [vmem:[#allocation7 + $0x130] sm:$0xff]
    %v2792 = vld [vmem:[#allocation7 + $0x138] sm:$0xff]
    %v2793 = vld [vmem:[#allocation7 + $0x140] sm:$0xff]
    %v2794 = vld [vmem:[#allocation7 + $0x148] sm:$0xff]
    %v2795 = vld [vmem:[#allocation7 + $0x150] sm:$0xff]
    %v2796 = vld [vmem:[#allocation7 + $0x158] sm:$0xff]
    %v2797 = vld [vmem:[#allocation7 + $0x160] sm:$0xff]
    %v2798 = vld [vmem:[#allocation7 + $0x168] sm:$0xff]
    %v2799 = vld [vmem:[#allocation7 + $0x170] sm:$0xff]
    %v2800 = vld [vmem:[#allocation7 + $0x178] sm:$0xff]
    %v2801 = vld [vmem:[#allocation7 + $0x180] sm:$0xff]
    %v2802 = vld [vmem:[#allocation7 + $0x188] sm:$0xff]
    %v2803 = vld [vmem:[#allocation7 + $0x190] sm:$0xff]
    %v2804 = vld [vmem:[#allocation7 + $0x198] sm:$0xff]
    %v2805 = vld [vmem:[#allocation7 + $0x1a0] sm:$0xff]
    %v2806 = vld [vmem:[#allocation7 + $0x1a8] sm:$0xff]
    %v2807 = vld [vmem:[#allocation7 + $0x1b0] sm:$0xff]
    %v2808 = vld [vmem:[#allocation7 + $0x1b8] sm:$0xff]
    %v2809 = vld [vmem:[#allocation7 + $0x1c0] sm:$0xff]
    %v2810 = vld [vmem:[#allocation7 + $0x1c8] sm:$0xff]
    %v2811 = vld [vmem:[#allocation7 + $0x1d0] sm:$0xff]
    %v2812 = vld [vmem:[#allocation7 + $0x1d8] sm:$0xff]
    %v2813 = vld [vmem:[#allocation7 + $0x1e0] sm:$0xff]
    %v2814 = vld [vmem:[#allocation7 + $0x1e8] sm:$0xff]
    %v2815 = vld [vmem:[#allocation7 + $0x1f0] sm:$0xff]
    %v2816 = vld [vmem:[#allocation7 + $0x1f8] sm:$0xff]
    %v2817 = vld [vmem:[#allocation7 + $0x200] sm:$0xff]
    %v2818 = vld [vmem:[#allocation7 + $0x208] sm:$0xff]
    %v2819 = vld [vmem:[#allocation7 + $0x210] sm:$0xff]
    %v2820 = vld [vmem:[#allocation7 + $0x218] sm:$0xff]
    %v2821 = vld [vmem:[#allocation7 + $0x220] sm:$0xff]
    %v2822 = vld [vmem:[#allocation7 + $0x228] sm:$0xff]
    %v2823 = vld [vmem:[#allocation7 + $0x230] sm:$0xff]
    %v2824 = vld [vmem:[#allocation7 + $0x238] sm:$0xff]
    %v2825 = vld [vmem:[#allocation7 + $0x240] sm:$0xff]
    %v2826 = vld [vmem:[#allocation7 + $0x248] sm:$0xff]
    %v2827 = vld [vmem:[#allocation7 + $0x250] sm:$0xff]
    %v2828 = vld [vmem:[#allocation7 + $0x258] sm:$0xff]
    %v2829 = vld [vmem:[#allocation7 + $0x260] sm:$0xff]
    %v2830 = vld [vmem:[#allocation7 + $0x268] sm:$0xff]
    %v2831 = vld [vmem:[#allocation7 + $0x270] sm:$0xff]
    %v2832 = vld [vmem:[#allocation7 + $0x278] sm:$0xff]
    %v2833 = vld [vmem:[#allocation7 + $0x280] sm:$0xff]
    %v2834 = vld [vmem:[#allocation7 + $0x288] sm:$0xff]
    %v2835 = vld [vmem:[#allocation7 + $0x290] sm:$0xff]
    %v2836 = vld [vmem:[#allocation7 + $0x298] sm:$0xff]
    %v2837 = vld [vmem:[#allocation7 + $0x2a0] sm:$0xff]
    %v2838 = vld [vmem:[#allocation7 + $0x2a8] sm:$0xff]
    %v2839 = vld [vmem:[#allocation7 + $0x2b0] sm:$0xff]
    %v2840 = vld [vmem:[#allocation7 + $0x2b8] sm:$0xff]
    %v2841 = vld [vmem:[#allocation7 + $0x2c0] sm:$0xff]
    %v2842 = vld [vmem:[#allocation7 + $0x2c8] sm:$0xff]
    %v2843 = vld [vmem:[#allocation7 + $0x2d0] sm:$0xff]
    %v2844 = vld [vmem:[#allocation7 + $0x2d8] sm:$0xff]
    %v2845 = vld [vmem:[#allocation7 + $0x2e0] sm:$0xff]
    %v2846 = vld [vmem:[#allocation7 + $0x2e8] sm:$0xff]
    %v2847 = vld [vmem:[#allocation7 + $0x2f0] sm:$0xff]
    %v2848 = vld [vmem:[#allocation7 + $0x2f8] sm:$0xff]
    %v2849 = vld [vmem:[#allocation7 + $0x300] sm:$0xff]
    %v2850 = vld [vmem:[#allocation7 + $0x308] sm:$0xff]
    %v2851 = vld [vmem:[#allocation7 + $0x310] sm:$0xff]
    %v2852 = vld [vmem:[#allocation7 + $0x318] sm:$0xff]
    %v2853 = vld [vmem:[#allocation7 + $0x320] sm:$0xff]
    %v2854 = vld [vmem:[#allocation7 + $0x328] sm:$0xff]
    %v2855 = vld [vmem:[#allocation7 + $0x330] sm:$0xff]
    %v2856 = vld [vmem:[#allocation7 + $0x338] sm:$0xff]
    %v2857 = vld [vmem:[#allocation7 + $0x340] sm:$0xff]
    %v2858 = vld [vmem:[#allocation7 + $0x348] sm:$0xff]
    %v2859 = vld [vmem:[#allocation7 + $0x350] sm:$0xff]
    %v2860 = vld [vmem:[#allocation7 + $0x358] sm:$0xff]
    %v2861 = vld [vmem:[#allocation7 + $0x360] sm:$0xff]
    %v2862 = vld [vmem:[#allocation7 + $0x368] sm:$0xff]
    %v2863 = vld [vmem:[#allocation7 + $0x370] sm:$0xff]
    %v2864 = vld [vmem:[#allocation7 + $0x378] sm:$0xff]
    %v2865 = vld [vmem:[#allocation7 + $0x380] sm:$0xff]
    %v2866 = vld [vmem:[#allocation7 + $0x388] sm:$0xff]
    %v2867 = vld [vmem:[#allocation7 + $0x390] sm:$0xff]
    %v2868 = vld [vmem:[#allocation7 + $0x398] sm:$0xff]
    %v2869 = vld [vmem:[#allocation7 + $0x3a0] sm:$0xff]
    %v2870 = vld [vmem:[#allocation7 + $0x3a8] sm:$0xff]
    %v2871 = vld [vmem:[#allocation7 + $0x3b0] sm:$0xff]
    %v2872 = vld [vmem:[#allocation7 + $0x3b8] sm:$0xff]
    %v2873 = vld [vmem:[#allocation7 + $0x3c0] sm:$0xff]
    %v2874 = vld [vmem:[#allocation7 + $0x3c8] sm:$0xff]
    %v2875 = vld [vmem:[#allocation7 + $0x3d0] sm:$0xff]
    %v2876 = vld [vmem:[#allocation7 + $0x3d8] sm:$0xff]
    %v2877 = vld [vmem:[#allocation7 + $0x3e0] sm:$0xff]
    %v2878 = vld [vmem:[#allocation7 + $0x3e8] sm:$0xff]
    %v2879 = vld [vmem:[#allocation7 + $0x3f0] sm:$0xff]
    %v2880 = vld [vmem:[#allocation7 + $0x3f8] sm:$0xff]
    %v2881 = vld [vmem:[#allocation7 + $0x400] sm:$0xff]
    %v2882 = vld [vmem:[#allocation7 + $0x408] sm:$0xff]
    %v2883 = vld [vmem:[#allocation7 + $0x410] sm:$0xff]
    %v2884 = vld [vmem:[#allocation7 + $0x418] sm:$0xff]
    %v2885 = vld [vmem:[#allocation7 + $0x420] sm:$0xff]
    %v2886 = vld [vmem:[#allocation7 + $0x428] sm:$0xff]
    %v2887 = vld [vmem:[#allocation7 + $0x430] sm:$0xff]
    %v2888 = vld [vmem:[#allocation7 + $0x438] sm:$0xff]
    %v2889 = vld [vmem:[#allocation7 + $0x440] sm:$0xff]
    %v2890 = vld [vmem:[#allocation7 + $0x448] sm:$0xff]
    %v2891 = vld [vmem:[#allocation7 + $0x450] sm:$0xff]
    %v2892 = vld [vmem:[#allocation7 + $0x458] sm:$0xff]
    %v2893 = vld [vmem:[#allocation7 + $0x460] sm:$0xff]
    %v2894 = vld [vmem:[#allocation7 + $0x468] sm:$0xff]
    %v2895 = vld [vmem:[#allocation7 + $0x470] sm:$0xff]
    %v2896 = vld [vmem:[#allocation7 + $0x478] sm:$0xff]
    %v2897 = vld [vmem:[#allocation7 + $0x480] sm:$0xff]
    %v2898 = vld [vmem:[#allocation7 + $0x488] sm:$0xff]
    %v2899 = vld [vmem:[#allocation7 + $0x490] sm:$0xff]
    %v2900 = vld [vmem:[#allocation7 + $0x498] sm:$0xff]
    %v2901 = vld [vmem:[#allocation7 + $0x4a0] sm:$0xff]
    %v2902 = vld [vmem:[#allocation7 + $0x4a8] sm:$0xff]
    %v2903 = vld [vmem:[#allocation7 + $0x4b0] sm:$0xff]
    %v2904 = vld [vmem:[#allocation7 + $0x4b8] sm:$0xff]
    %v2905 = vld [vmem:[#allocation7 + $0x4c0] sm:$0xff]
    %v2906 = vld [vmem:[#allocation7 + $0x4c8] sm:$0xff]
    %v2907 = vld [vmem:[#allocation7 + $0x4d0] sm:$0xff]
    %v2908 = vld [vmem:[#allocation7 + $0x4d8] sm:$0xff]
    %v2909 = vld [vmem:[#allocation7 + $0x4e0] sm:$0xff]
    %v2910 = vld [vmem:[#allocation7 + $0x4e8] sm:$0xff]
    %v2911 = vld [vmem:[#allocation7 + $0x4f0] sm:$0xff]
    %v2912 = vld [vmem:[#allocation7 + $0x4f8] sm:$0xff]
    %v2913 = vld [vmem:[#allocation7 + $0x500] sm:$0xff]
    %v2914 = vld [vmem:[#allocation7 + $0x508] sm:$0xff]
    %v2915 = vld [vmem:[#allocation7 + $0x510] sm:$0xff]
    %v2916 = vld [vmem:[#allocation7 + $0x518] sm:$0xff]
    %v2917 = vld [vmem:[#allocation7 + $0x520] sm:$0xff]
    %v2918 = vld [vmem:[#allocation7 + $0x528] sm:$0xff]
    %v2919 = vld [vmem:[#allocation7 + $0x530] sm:$0xff]
    %v2920 = vld [vmem:[#allocation7 + $0x538] sm:$0xff]
    %v2921 = vld [vmem:[#allocation7 + $0x540] sm:$0xff]
    %v2922 = vld [vmem:[#allocation7 + $0x548] sm:$0xff]
    %v2923 = vld [vmem:[#allocation7 + $0x550] sm:$0xff]
    %v2924 = vld [vmem:[#allocation7 + $0x558] sm:$0xff]
    %v2925 = vld [vmem:[#allocation7 + $0x560] sm:$0xff]
    %v2926 = vld [vmem:[#allocation7 + $0x568] sm:$0xff]
    %v2927 = vld [vmem:[#allocation7 + $0x570] sm:$0xff]
    %v2928 = vld [vmem:[#allocation7 + $0x578] sm:$0xff]
    %v2929 = vld [vmem:[#allocation7 + $0x580] sm:$0xff]
    %v2930 = vld [vmem:[#allocation7 + $0x588] sm:$0xff]
    %v2931 = vld [vmem:[#allocation7 + $0x590] sm:$0xff]
    %v2932 = vld [vmem:[#allocation7 + $0x598] sm:$0xff]
    %v2933 = vld [vmem:[#allocation7 + $0x5a0] sm:$0xff]
    %v2934 = vld [vmem:[#allocation7 + $0x5a8] sm:$0xff]
    %v2935 = vld [vmem:[#allocation7 + $0x5b0] sm:$0xff]
    %v2936 = vld [vmem:[#allocation7 + $0x5b8] sm:$0xff]
    %v2937 = vld [vmem:[#allocation7 + $0x5c0] sm:$0xff]
    %v2938 = vld [vmem:[#allocation7 + $0x5c8] sm:$0xff]
    %v2939 = vld [vmem:[#allocation7 + $0x5d0] sm:$0xff]
    %v2940 = vld [vmem:[#allocation7 + $0x5d8] sm:$0xff]
    %v2941 = vld [vmem:[#allocation7 + $0x5e0] sm:$0xff]
    %v2942 = vld [vmem:[#allocation7 + $0x5e8] sm:$0xff]
    %v2943 = vld [vmem:[#allocation7 + $0x5f0] sm:$0xff]
    %v2944 = vld [vmem:[#allocation7 + $0x5f8] sm:$0xff]
    %v2945 = vld [vmem:[#allocation7 + $0x600] sm:$0xff]
    %v2946 = vld [vmem:[#allocation7 + $0x608] sm:$0xff]
    %v2947 = vld [vmem:[#allocation7 + $0x610] sm:$0xff]
    %v2948 = vld [vmem:[#allocation7 + $0x618] sm:$0xff]
    %v2949 = vld [vmem:[#allocation7 + $0x620] sm:$0xff]
    %v2950 = vld [vmem:[#allocation7 + $0x628] sm:$0xff]
    %v2951 = vld [vmem:[#allocation7 + $0x630] sm:$0xff]
    %v2952 = vld [vmem:[#allocation7 + $0x638] sm:$0xff]
    %v2953 = vld [vmem:[#allocation7 + $0x640] sm:$0xff]
    %v2954 = vld [vmem:[#allocation7 + $0x648] sm:$0xff]
    %v2955 = vld [vmem:[#allocation7 + $0x650] sm:$0xff]
    %v2956 = vld [vmem:[#allocation7 + $0x658] sm:$0xff]
    %v2957 = vld [vmem:[#allocation7 + $0x660] sm:$0xff]
    %v2958 = vld [vmem:[#allocation7 + $0x668] sm:$0xff]
    %v2959 = vld [vmem:[#allocation7 + $0x670] sm:$0xff]
    %v2960 = vld [vmem:[#allocation7 + $0x678] sm:$0xff]
    %v2961 = vld [vmem:[#allocation7 + $0x680] sm:$0xff]
    %v2962 = vld [vmem:[#allocation7 + $0x688] sm:$0xff]
    %v2963 = vld [vmem:[#allocation7 + $0x690] sm:$0xff]
    %v2964 = vld [vmem:[#allocation7 + $0x698] sm:$0xff]
    %v2965 = vld [vmem:[#allocation7 + $0x6a0] sm:$0xff]
    %v2966 = vld [vmem:[#allocation7 + $0x6a8] sm:$0xff]
    %v2967 = vld [vmem:[#allocation7 + $0x6b0] sm:$0xff]
    %v2968 = vld [vmem:[#allocation7 + $0x6b8] sm:$0xff]
    %v2969 = vld [vmem:[#allocation7 + $0x6c0] sm:$0xff]
    %v2970 = vld [vmem:[#allocation7 + $0x6c8] sm:$0xff]
    %v2971 = vld [vmem:[#allocation7 + $0x6d0] sm:$0xff]
    %v2972 = vld [vmem:[#allocation7 + $0x6d8] sm:$0xff]
    %v2973 = vld [vmem:[#allocation7 + $0x6e0] sm:$0xff]
    %v2974 = vld [vmem:[#allocation7 + $0x6e8] sm:$0xff]
    %v2975 = vld [vmem:[#allocation7 + $0x6f0] sm:$0xff]
    %v2976 = vld [vmem:[#allocation7 + $0x6f8] sm:$0xff]
    %v2977 = vld [vmem:[#allocation7 + $0x700] sm:$0xff]
    %v2978 = vld [vmem:[#allocation7 + $0x708] sm:$0xff]
    %v2979 = vld [vmem:[#allocation7 + $0x710] sm:$0xff]
    %v2980 = vld [vmem:[#allocation7 + $0x718] sm:$0xff]
    %v2981 = vld [vmem:[#allocation7 + $0x720] sm:$0xff]
    %v2982 = vld [vmem:[#allocation7 + $0x728] sm:$0xff]
    %v2983 = vld [vmem:[#allocation7 + $0x730] sm:$0xff]
    %v2984 = vld [vmem:[#allocation7 + $0x738] sm:$0xff]
    %v2985 = vld [vmem:[#allocation7 + $0x740] sm:$0xff]
    %v2986 = vld [vmem:[#allocation7 + $0x748] sm:$0xff]
    %v2987 = vld [vmem:[#allocation7 + $0x750] sm:$0xff]
    %v2988 = vld [vmem:[#allocation7 + $0x758] sm:$0xff]
    %v2989 = vld [vmem:[#allocation7 + $0x760] sm:$0xff]
    %v2990 = vld [vmem:[#allocation7 + $0x768] sm:$0xff]
    %v2991 = vld [vmem:[#allocation7 + $0x770] sm:$0xff]
    %v2992 = vld [vmem:[#allocation7 + $0x778] sm:$0xff]
    %v2993 = vld [vmem:[#allocation7 + $0x780] sm:$0xff]
    %v2994 = vld [vmem:[#allocation7 + $0x788] sm:$0xff]
    %v2995 = vld [vmem:[#allocation7 + $0x790] sm:$0xff]
    %v2996 = vld [vmem:[#allocation7 + $0x798] sm:$0xff]
    %v2997 = vld [vmem:[#allocation7 + $0x7a0] sm:$0xff]
    %v2998 = vld [vmem:[#allocation7 + $0x7a8] sm:$0xff]
    %v2999 = vld [vmem:[#allocation7 + $0x7b0] sm:$0xff]
    %v3000 = vld [vmem:[#allocation7 + $0x7b8] sm:$0xff]
    %v3001 = vld [vmem:[#allocation7 + $0x7c0] sm:$0xff]
    %v3002 = vld [vmem:[#allocation7 + $0x7c8] sm:$0xff]
    %v3003 = vld [vmem:[#allocation7 + $0x7d0] sm:$0xff]
    %v3004 = vld [vmem:[#allocation7 + $0x7d8] sm:$0xff]
    %v3005 = vld [vmem:[#allocation7 + $0x7e0] sm:$0xff]
    %v3006 = vld [vmem:[#allocation7 + $0x7e8] sm:$0xff]
    %v3007 = vld [vmem:[#allocation7 + $0x7f0] sm:$0xff]
    %v3008 = vld [vmem:[#allocation7 + $0x7f8] sm:$0xff]
    %v3009 = vld [vmem:[#allocation7 + $0x800] sm:$0xff]
    %v3010 = vld [vmem:[#allocation7 + $0x808] sm:$0xff]
    %v3011 = vld [vmem:[#allocation7 + $0x810] sm:$0xff]
    %v3012 = vld [vmem:[#allocation7 + $0x818] sm:$0xff]
    %v3013 = vld [vmem:[#allocation7 + $0x820] sm:$0xff]
    %v3014 = vld [vmem:[#allocation7 + $0x828] sm:$0xff]
    %v3015 = vld [vmem:[#allocation7 + $0x830] sm:$0xff]
    %v3016 = vld [vmem:[#allocation7 + $0x838] sm:$0xff]
    %v3017 = vld [vmem:[#allocation7 + $0x840] sm:$0xff]
    %v3018 = vld [vmem:[#allocation7 + $0x848] sm:$0xff]
    %v3019 = vld [vmem:[#allocation7 + $0x850] sm:$0xff]
    %v3020 = vld [vmem:[#allocation7 + $0x858] sm:$0xff]
    %v3021 = vld [vmem:[#allocation7 + $0x860] sm:$0xff]
    %v3022 = vld [vmem:[#allocation7 + $0x868] sm:$0xff]
    %v3023 = vld [vmem:[#allocation7 + $0x870] sm:$0xff]
    %v3024 = vld [vmem:[#allocation7 + $0x878] sm:$0xff]
    %v3025 = vld [vmem:[#allocation7 + $0x880] sm:$0xff]
    %v3026 = vld [vmem:[#allocation7 + $0x888] sm:$0xff]
    %v3027 = vld [vmem:[#allocation7 + $0x890] sm:$0xff]
    %v3028 = vld [vmem:[#allocation7 + $0x898] sm:$0xff]
    %v3029 = vld [vmem:[#allocation7 + $0x8a0] sm:$0xff]
    %v3030 = vld [vmem:[#allocation7 + $0x8a8] sm:$0xff]
    %v3031 = vld [vmem:[#allocation7 + $0x8b0] sm:$0xff]
    %v3032 = vld [vmem:[#allocation7 + $0x8b8] sm:$0xff]
    %v3033 = vld [vmem:[#allocation7 + $0x8c0] sm:$0xff]
    %v3034 = vld [vmem:[#allocation7 + $0x8c8] sm:$0xff]
    %v3035 = vld [vmem:[#allocation7 + $0x8d0] sm:$0xff]
    %v3036 = vld [vmem:[#allocation7 + $0x8d8] sm:$0xff]
    %v3037 = vld [vmem:[#allocation7 + $0x8e0] sm:$0xff]
    %v3038 = vld [vmem:[#allocation7 + $0x8e8] sm:$0xff]
    %v3039 = vld [vmem:[#allocation7 + $0x8f0] sm:$0xff]
    %v3040 = vld [vmem:[#allocation7 + $0x8f8] sm:$0xff]
    %v3041 = vld [vmem:[#allocation7 + $0x900] sm:$0xff]
    %v3042 = vld [vmem:[#allocation7 + $0x908] sm:$0xff]
    %v3043 = vld [vmem:[#allocation7 + $0x910] sm:$0xff]
    %v3044 = vld [vmem:[#allocation7 + $0x918] sm:$0xff]
    %v3045 = vld [vmem:[#allocation7 + $0x920] sm:$0xff]
    %v3046 = vld [vmem:[#allocation7 + $0x928] sm:$0xff]
    %v3047 = vld [vmem:[#allocation7 + $0x930] sm:$0xff]
    %v3048 = vld [vmem:[#allocation7 + $0x938] sm:$0xff]
    %v3049 = vld [vmem:[#allocation7 + $0x940] sm:$0xff]
    %v3050 = vld [vmem:[#allocation7 + $0x948] sm:$0xff]
    %v3051 = vld [vmem:[#allocation7 + $0x950] sm:$0xff]
    %v3052 = vld [vmem:[#allocation7 + $0x958] sm:$0xff]
    %v3053 = vld [vmem:[#allocation7 + $0x960] sm:$0xff]
    %v3054 = vld [vmem:[#allocation7 + $0x968] sm:$0xff]
    %v3055 = vld [vmem:[#allocation7 + $0x970] sm:$0xff]
    %v3056 = vld [vmem:[#allocation7 + $0x978] sm:$0xff]
    %v3057 = vld [vmem:[#allocation7 + $0x980] sm:$0xff]
    %v3058 = vld [vmem:[#allocation7 + $0x988] sm:$0xff]
    %v3059 = vld [vmem:[#allocation7 + $0x990] sm:$0xff]
    %v3060 = vld [vmem:[#allocation7 + $0x998] sm:$0xff]
    %v3061 = vld [vmem:[#allocation7 + $0x9a0] sm:$0xff]
    %v3062 = vld [vmem:[#allocation7 + $0x9a8] sm:$0xff]
    %v3063 = vld [vmem:[#allocation7 + $0x9b0] sm:$0xff]
    %v3064 = vld [vmem:[#allocation7 + $0x9b8] sm:$0xff]
    %v3065 = vld [vmem:[#allocation7 + $0x9c0] sm:$0xff]
    %v3066 = vld [vmem:[#allocation7 + $0x9c8] sm:$0xff]
    %v3067 = vld [vmem:[#allocation7 + $0x9d0] sm:$0xff]
    %v3068 = vld [vmem:[#allocation7 + $0x9d8] sm:$0xff]
    %v3069 = vld [vmem:[#allocation7 + $0x9e0] sm:$0xff]
    %v3070 = vld [vmem:[#allocation7 + $0x9e8] sm:$0xff]
    %v3071 = vld [vmem:[#allocation7 + $0x9f0] sm:$0xff]
    %v3072 = vld [vmem:[#allocation7 + $0x9f8] sm:$0xff]
    %v3073 = vld [vmem:[#allocation7 + $0xa00] sm:$0xff]
    %v3074 = vld [vmem:[#allocation7 + $0xa08] sm:$0xff]
    %v3075 = vld [vmem:[#allocation7 + $0xa10] sm:$0xff]
    %v3076 = vld [vmem:[#allocation7 + $0xa18] sm:$0xff]
    %v3077 = vld [vmem:[#allocation7 + $0xa20] sm:$0xff]
    %v3078 = vld [vmem:[#allocation7 + $0xa28] sm:$0xff]
    %v3079 = vld [vmem:[#allocation7 + $0xa30] sm:$0xff]
    %v3080 = vld [vmem:[#allocation7 + $0xa38] sm:$0xff]
    %v3081 = vld [vmem:[#allocation7 + $0xa40] sm:$0xff]
    %v3082 = vld [vmem:[#allocation7 + $0xa48] sm:$0xff]
    %v3083 = vld [vmem:[#allocation7 + $0xa50] sm:$0xff]
    %v3084 = vld [vmem:[#allocation7 + $0xa58] sm:$0xff]
    %v3085 = vld [vmem:[#allocation7 + $0xa60] sm:$0xff]
    %v3086 = vld [vmem:[#allocation7 + $0xa68] sm:$0xff]
    %v3087 = vld [vmem:[#allocation7 + $0xa70] sm:$0xff]
    %v3088 = vld [vmem:[#allocation7 + $0xa78] sm:$0xff]
    %v3089 = vld [vmem:[#allocation7 + $0xa80] sm:$0xff]
    %v3090 = vld [vmem:[#allocation7 + $0xa88] sm:$0xff]
    %v3091 = vld [vmem:[#allocation7 + $0xa90] sm:$0xff]
    %v3092 = vld [vmem:[#allocation7 + $0xa98] sm:$0xff]
    %v3093 = vld [vmem:[#allocation7 + $0xaa0] sm:$0xff]
    %v3094 = vld [vmem:[#allocation7 + $0xaa8] sm:$0xff]
    %v3095 = vld [vmem:[#allocation7 + $0xab0] sm:$0xff]
    %v3096 = vld [vmem:[#allocation7 + $0xab8] sm:$0xff]
    %v3097 = vld [vmem:[#allocation7 + $0xac0] sm:$0xff]
    %v3098 = vld [vmem:[#allocation7 + $0xac8] sm:$0xff]
    %v3099 = vld [vmem:[#allocation7 + $0xad0] sm:$0xff]
    %v3100 = vld [vmem:[#allocation7 + $0xad8] sm:$0xff]
    %v3101 = vld [vmem:[#allocation7 + $0xae0] sm:$0xff]
    %v3102 = vld [vmem:[#allocation7 + $0xae8] sm:$0xff]
    %v3103 = vld [vmem:[#allocation7 + $0xaf0] sm:$0xff]
    %v3104 = vld [vmem:[#allocation7 + $0xaf8] sm:$0xff]
    %v3105 = vld [vmem:[#allocation7 + $0xb00] sm:$0xff]
    %v3106 = vld [vmem:[#allocation7 + $0xb08] sm:$0xff]
    %v3107 = vld [vmem:[#allocation7 + $0xb10] sm:$0xff]
    %v3108 = vld [vmem:[#allocation7 + $0xb18] sm:$0xff]
    %v3109 = vld [vmem:[#allocation7 + $0xb20] sm:$0xff]
    %v3110 = vld [vmem:[#allocation7 + $0xb28] sm:$0xff]
    %v3111 = vld [vmem:[#allocation7 + $0xb30] sm:$0xff]
    %v3112 = vld [vmem:[#allocation7 + $0xb38] sm:$0xff]
    %v3113 = vld [vmem:[#allocation7 + $0xb40] sm:$0xff]
    %v3114 = vld [vmem:[#allocation7 + $0xb48] sm:$0xff]
    %v3115 = vld [vmem:[#allocation7 + $0xb50] sm:$0xff]
    %v3116 = vld [vmem:[#allocation7 + $0xb58] sm:$0xff]
    %v3117 = vld [vmem:[#allocation7 + $0xb60] sm:$0xff]
    %v3118 = vld [vmem:[#allocation7 + $0xb68] sm:$0xff]
    %v3119 = vld [vmem:[#allocation7 + $0xb70] sm:$0xff]
    %v3120 = vld [vmem:[#allocation7 + $0xb78] sm:$0xff]
    %v3121 = vld [vmem:[#allocation7 + $0xb80] sm:$0xff]
    %v3122 = vld [vmem:[#allocation7 + $0xb88] sm:$0xff]
    %v3123 = vld [vmem:[#allocation7 + $0xb90] sm:$0xff]
    %v3124 = vld [vmem:[#allocation7 + $0xb98] sm:$0xff]
    %v3125 = vld [vmem:[#allocation7 + $0xba0] sm:$0xff]
    %v3126 = vld [vmem:[#allocation7 + $0xba8] sm:$0xff]
    %v3127 = vld [vmem:[#allocation7 + $0xbb0] sm:$0xff]
    %v3128 = vld [vmem:[#allocation7 + $0xbb8] sm:$0xff]
    %v3129 = vld [vmem:[#allocation7 + $0xbc0] sm:$0xff]
    %v3130 = vld [vmem:[#allocation7 + $0xbc8] sm:$0xff]
    %v3131 = vld [vmem:[#allocation7 + $0xbd0] sm:$0xff]
    %v3132 = vld [vmem:[#allocation7 + $0xbd8] sm:$0xff]
    %v3133 = vld [vmem:[#allocation7 + $0xbe0] sm:$0xff]
    %v3134 = vld [vmem:[#allocation7 + $0xbe8] sm:$0xff]
    %v3135 = vld [vmem:[#allocation7 + $0xbf0] sm:$0xff]
    %v3136 = vld [vmem:[#allocation7 + $0xbf8] sm:$0xff]
    %v3137 = vld [vmem:[#allocation7 + $0xc00] sm:$0xff]
    %v3138 = vld [vmem:[#allocation7 + $0xc08] sm:$0xff]
    %v3139 = vld [vmem:[#allocation7 + $0xc10] sm:$0xff]
    %v3140 = vld [vmem:[#allocation7 + $0xc18] sm:$0xff]
    %v3141 = vld [vmem:[#allocation7 + $0xc20] sm:$0xff]
    %v3142 = vld [vmem:[#allocation7 + $0xc28] sm:$0xff]
    %v3143 = vld [vmem:[#allocation7 + $0xc30] sm:$0xff]
    %v3144 = vld [vmem:[#allocation7 + $0xc38] sm:$0xff]
    %v3145 = vld [vmem:[#allocation7 + $0xc40] sm:$0xff]
    %v3146 = vld [vmem:[#allocation7 + $0xc48] sm:$0xff]
    %v3147 = vld [vmem:[#allocation7 + $0xc50] sm:$0xff]
    %v3148 = vld [vmem:[#allocation7 + $0xc58] sm:$0xff]
    %v3149 = vld [vmem:[#allocation7 + $0xc60] sm:$0xff]
    %v3150 = vld [vmem:[#allocation7 + $0xc68] sm:$0xff]
    %v3151 = vld [vmem:[#allocation7 + $0xc70] sm:$0xff]
    %v3152 = vld [vmem:[#allocation7 + $0xc78] sm:$0xff]
    %v3153 = vld [vmem:[#allocation7 + $0xc80] sm:$0xff]
    %v3154 = vld [vmem:[#allocation7 + $0xc88] sm:$0xff]
    %v3155 = vld [vmem:[#allocation7 + $0xc90] sm:$0xff]
    %v3156 = vld [vmem:[#allocation7 + $0xc98] sm:$0xff]
    %v3157 = vld [vmem:[#allocation7 + $0xca0] sm:$0xff]
    %v3158 = vld [vmem:[#allocation7 + $0xca8] sm:$0xff]
    %v3159 = vld [vmem:[#allocation7 + $0xcb0] sm:$0xff]
    %v3160 = vld [vmem:[#allocation7 + $0xcb8] sm:$0xff]
    %v3161 = vld [vmem:[#allocation7 + $0xcc0] sm:$0xff]
    %v3162 = vld [vmem:[#allocation7 + $0xcc8] sm:$0xff]
    %v3163 = vld [vmem:[#allocation7 + $0xcd0] sm:$0xff]
    %v3164 = vld [vmem:[#allocation7 + $0xcd8] sm:$0xff]
    %v3165 = vld [vmem:[#allocation7 + $0xce0] sm:$0xff]
    %v3166 = vld [vmem:[#allocation7 + $0xce8] sm:$0xff]
    %v3167 = vld [vmem:[#allocation7 + $0xcf0] sm:$0xff]
    %v3168 = vld [vmem:[#allocation7 + $0xcf8] sm:$0xff]
    %v3169 = vld [vmem:[#allocation7 + $0xd00] sm:$0xff]
    %v3170 = vld [vmem:[#allocation7 + $0xd08] sm:$0xff]
    %v3171 = vld [vmem:[#allocation7 + $0xd10] sm:$0xff]
    %v3172 = vld [vmem:[#allocation7 + $0xd18] sm:$0xff]
    %v3173 = vld [vmem:[#allocation7 + $0xd20] sm:$0xff]
    %v3174 = vld [vmem:[#allocation7 + $0xd28] sm:$0xff]
    %v3175 = vld [vmem:[#allocation7 + $0xd30] sm:$0xff]
    %v3176 = vld [vmem:[#allocation7 + $0xd38] sm:$0xff]
    %v3177 = vld [vmem:[#allocation7 + $0xd40] sm:$0xff]
    %v3178 = vld [vmem:[#allocation7 + $0xd48] sm:$0xff]
    %v3179 = vld [vmem:[#allocation7 + $0xd50] sm:$0xff]
    %v3180 = vld [vmem:[#allocation7 + $0xd58] sm:$0xff]
    %v3181 = vld [vmem:[#allocation7 + $0xd60] sm:$0xff]
    %v3182 = vld [vmem:[#allocation7 + $0xd68] sm:$0xff]
    %v3183 = vld [vmem:[#allocation7 + $0xd70] sm:$0xff]
    %v3184 = vld [vmem:[#allocation7 + $0xd78] sm:$0xff]
    %v3185 = vld [vmem:[#allocation7 + $0xd80] sm:$0xff]
    %v3186 = vld [vmem:[#allocation7 + $0xd88] sm:$0xff]
    %v3187 = vld [vmem:[#allocation7 + $0xd90] sm:$0xff]
    %v3188 = vld [vmem:[#allocation7 + $0xd98] sm:$0xff]
    %v3189 = vld [vmem:[#allocation7 + $0xda0] sm:$0xff]
    %v3190 = vld [vmem:[#allocation7 + $0xda8] sm:$0xff]
    %v3191 = vld [vmem:[#allocation7 + $0xdb0] sm:$0xff]
    %v3192 = vld [vmem:[#allocation7 + $0xdb8] sm:$0xff]
    %v3193 = vld [vmem:[#allocation7 + $0xdc0] sm:$0xff]
    %v3194 = vld [vmem:[#allocation7 + $0xdc8] sm:$0xff]
    %v3195 = vld [vmem:[#allocation7 + $0xdd0] sm:$0xff]
    %v3196 = vld [vmem:[#allocation7 + $0xdd8] sm:$0xff]
    %v3197 = vld [vmem:[#allocation7 + $0xde0] sm:$0xff]
    %v3198 = vld [vmem:[#allocation7 + $0xde8] sm:$0xff]
    %v3199 = vld [vmem:[#allocation7 + $0xdf0] sm:$0xff]
    %v3200 = vld [vmem:[#allocation7 + $0xdf8] sm:$0xff]
    %v3201 = vld [vmem:[#allocation7 + $0xe00] sm:$0xff]
    %v3202 = vld [vmem:[#allocation7 + $0xe08] sm:$0xff]
    %v3203 = vld [vmem:[#allocation7 + $0xe10] sm:$0xff]
    %v3204 = vld [vmem:[#allocation7 + $0xe18] sm:$0xff]
    %v3205 = vld [vmem:[#allocation7 + $0xe20] sm:$0xff]
    %v3206 = vld [vmem:[#allocation7 + $0xe28] sm:$0xff]
    %v3207 = vld [vmem:[#allocation7 + $0xe30] sm:$0xff]
    %v3208 = vld [vmem:[#allocation7 + $0xe38] sm:$0xff]
    %v3209 = vld [vmem:[#allocation7 + $0xe40] sm:$0xff]
    %v3210 = vld [vmem:[#allocation7 + $0xe48] sm:$0xff]
    %v3211 = vld [vmem:[#allocation7 + $0xe50] sm:$0xff]
    %v3212 = vld [vmem:[#allocation7 + $0xe58] sm:$0xff]
    %v3213 = vld [vmem:[#allocation7 + $0xe60] sm:$0xff]
    %v3214 = vld [vmem:[#allocation7 + $0xe68] sm:$0xff]
    %v3215 = vld [vmem:[#allocation7 + $0xe70] sm:$0xff]
    %v3216 = vld [vmem:[#allocation7 + $0xe78] sm:$0xff]
    %v3217 = vld [vmem:[#allocation7 + $0xe80] sm:$0xff]
    %v3218 = vld [vmem:[#allocation7 + $0xe88] sm:$0xff]
    %v3219 = vld [vmem:[#allocation7 + $0xe90] sm:$0xff]
    %v3220 = vld [vmem:[#allocation7 + $0xe98] sm:$0xff]
    %v3221 = vld [vmem:[#allocation7 + $0xea0] sm:$0xff]
    %v3222 = vld [vmem:[#allocation7 + $0xea8] sm:$0xff]
    %v3223 = vld [vmem:[#allocation7 + $0xeb0] sm:$0xff]
    %v3224 = vld [vmem:[#allocation7 + $0xeb8] sm:$0xff]
    %v3225 = vld [vmem:[#allocation7 + $0xec0] sm:$0xff]
    %v3226 = vld [vmem:[#allocation7 + $0xec8] sm:$0xff]
    %v3227 = vld [vmem:[#allocation7 + $0xed0] sm:$0xff]
    %v3228 = vld [vmem:[#allocation7 + $0xed8] sm:$0xff]
    %v3229 = vld [vmem:[#allocation7 + $0xee0] sm:$0xff]
    %v3230 = vld [vmem:[#allocation7 + $0xee8] sm:$0xff]
    %v3231 = vld [vmem:[#allocation7 + $0xef0] sm:$0xff]
    %v3232 = vld [vmem:[#allocation7 + $0xef8] sm:$0xff]
    %v3713 = vunpack.c.l.b16 %v2753
    %v3714 = vunpack.c.h.b16 %v2753
    %v3715 = vunpack.c.l.b16 %v2754
    %v3716 = vunpack.c.h.b16 %v2754
    %v3717 = vunpack.c.l.b16 %v2755
    %v3718 = vunpack.c.h.b16 %v2755
    %v3719 = vunpack.c.l.b16 %v2756
    %v3720 = vunpack.c.h.b16 %v2756
    %v3721 = vunpack.c.l.b16 %v2757
    %v3722 = vunpack.c.h.b16 %v2757
    %v3723 = vunpack.c.l.b16 %v2758
    %v3724 = vunpack.c.h.b16 %v2758
    %v3725 = vunpack.c.l.b16 %v2759
    %v3726 = vunpack.c.h.b16 %v2759
    %v3727 = vunpack.c.l.b16 %v2760
    %v3728 = vunpack.c.h.b16 %v2760
    %v3729 = vunpack.c.l.b16 %v2761
    %v3730 = vunpack.c.h.b16 %v2761
    %v3731 = vunpack.c.l.b16 %v2762
    %v3732 = vunpack.c.h.b16 %v2762
    %v3733 = vunpack.c.l.b16 %v2763
    %v3734 = vunpack.c.h.b16 %v2763
    %v3735 = vunpack.c.l.b16 %v2764
    %v3736 = vunpack.c.h.b16 %v2764
    %v3737 = vunpack.c.l.b16 %v2765
    %v3738 = vunpack.c.h.b16 %v2765
    %v3739 = vunpack.c.l.b16 %v2766
    %v3740 = vunpack.c.h.b16 %v2766
    %v3741 = vunpack.c.l.b16 %v2767
    %v3742 = vunpack.c.h.b16 %v2767
    %v3743 = vunpack.c.l.b16 %v2768
    %v3744 = vunpack.c.h.b16 %v2768
    %v3745 = vunpack.c.l.b16 %v2769
    %v3746 = vunpack.c.h.b16 %v2769
    %v3747 = vunpack.c.l.b16 %v2770
    %v3748 = vunpack.c.h.b16 %v2770
    %v3749 = vunpack.c.l.b16 %v2771
    %v3750 = vunpack.c.h.b16 %v2771
    %v3751 = vunpack.c.l.b16 %v2772
    %v3752 = vunpack.c.h.b16 %v2772
    %v3753 = vunpack.c.l.b16 %v2773
    %v3754 = vunpack.c.h.b16 %v2773
    %v3755 = vunpack.c.l.b16 %v2774
    %v3756 = vunpack.c.h.b16 %v2774
    %v3757 = vunpack.c.l.b16 %v2775
    %v3758 = vunpack.c.h.b16 %v2775
    %v3759 = vunpack.c.l.b16 %v2776
    %v3760 = vunpack.c.h.b16 %v2776
    %v3761 = vunpack.c.l.b16 %v2777
    %v3762 = vunpack.c.h.b16 %v2777
    %v3763 = vunpack.c.l.b16 %v2778
    %v3764 = vunpack.c.h.b16 %v2778
    %v3765 = vunpack.c.l.b16 %v2779
    %v3766 = vunpack.c.h.b16 %v2779
    %v3767 = vunpack.c.l.b16 %v2780
    %v3768 = vunpack.c.h.b16 %v2780
    %v3769 = vunpack.c.l.b16 %v2781
    %v3770 = vunpack.c.h.b16 %v2781
    %v3771 = vunpack.c.l.b16 %v2782
    %v3772 = vunpack.c.h.b16 %v2782
    %v3773 = vunpack.c.l.b16 %v2783
    %v3774 = vunpack.c.h.b16 %v2783
    %v3775 = vunpack.c.l.b16 %v2784
    %v3776 = vunpack.c.h.b16 %v2784
    %v3777 = vunpack.c.l.b16 %v2785
    %v3778 = vunpack.c.h.b16 %v2785
    %v3779 = vunpack.c.l.b16 %v2786
    %v3780 = vunpack.c.h.b16 %v2786
    %v3781 = vunpack.c.l.b16 %v2787
    %v3782 = vunpack.c.h.b16 %v2787
    %v3783 = vunpack.c.l.b16 %v2788
    %v3784 = vunpack.c.h.b16 %v2788
    %v3785 = vunpack.c.l.b16 %v2789
    %v3786 = vunpack.c.h.b16 %v2789
    %v3787 = vunpack.c.l.b16 %v2790
    %v3788 = vunpack.c.h.b16 %v2790
    %v3789 = vunpack.c.l.b16 %v2791
    %v3790 = vunpack.c.h.b16 %v2791
    %v3791 = vunpack.c.l.b16 %v2792
    %v3792 = vunpack.c.h.b16 %v2792
    %v3793 = vunpack.c.l.b16 %v2793
    %v3794 = vunpack.c.h.b16 %v2793
    %v3795 = vunpack.c.l.b16 %v2794
    %v3796 = vunpack.c.h.b16 %v2794
    %v3797 = vunpack.c.l.b16 %v2795
    %v3798 = vunpack.c.h.b16 %v2795
    %v3799 = vunpack.c.l.b16 %v2796
    %v3800 = vunpack.c.h.b16 %v2796
    %v3801 = vunpack.c.l.b16 %v2797
    %v3802 = vunpack.c.h.b16 %v2797
    %v3803 = vunpack.c.l.b16 %v2798
    %v3804 = vunpack.c.h.b16 %v2798
    %v3805 = vunpack.c.l.b16 %v2799
    %v3806 = vunpack.c.h.b16 %v2799
    %v3807 = vunpack.c.l.b16 %v2800
    %v3808 = vunpack.c.h.b16 %v2800
    %v3809 = vunpack.c.l.b16 %v2801
    %v3810 = vunpack.c.h.b16 %v2801
    %v3811 = vunpack.c.l.b16 %v2802
    %v3812 = vunpack.c.h.b16 %v2802
    %v3813 = vunpack.c.l.b16 %v2803
    %v3814 = vunpack.c.h.b16 %v2803
    %v3815 = vunpack.c.l.b16 %v2804
    %v3816 = vunpack.c.h.b16 %v2804
    %v3817 = vunpack.c.l.b16 %v2805
    %v3818 = vunpack.c.h.b16 %v2805
    %v3819 = vunpack.c.l.b16 %v2806
    %v3820 = vunpack.c.h.b16 %v2806
    %v3821 = vunpack.c.l.b16 %v2807
    %v3822 = vunpack.c.h.b16 %v2807
    %v3823 = vunpack.c.l.b16 %v2808
    %v3824 = vunpack.c.h.b16 %v2808
    %v3825 = vunpack.c.l.b16 %v2809
    %v3826 = vunpack.c.h.b16 %v2809
    %v3827 = vunpack.c.l.b16 %v2810
    %v3828 = vunpack.c.h.b16 %v2810
    %v3829 = vunpack.c.l.b16 %v2811
    %v3830 = vunpack.c.h.b16 %v2811
    %v3831 = vunpack.c.l.b16 %v2812
    %v3832 = vunpack.c.h.b16 %v2812
    %v3833 = vunpack.c.l.b16 %v2813
    %v3834 = vunpack.c.h.b16 %v2813
    %v3835 = vunpack.c.l.b16 %v2814
    %v3836 = vunpack.c.h.b16 %v2814
    %v3837 = vunpack.c.l.b16 %v2815
    %v3838 = vunpack.c.h.b16 %v2815
    %v3839 = vunpack.c.l.b16 %v2816
    %v3840 = vunpack.c.h.b16 %v2816
    %v3841 = vunpack.c.l.b16 %v2817
    %v3842 = vunpack.c.h.b16 %v2817
    %v3843 = vunpack.c.l.b16 %v2818
    %v3844 = vunpack.c.h.b16 %v2818
    %v3845 = vunpack.c.l.b16 %v2819
    %v3846 = vunpack.c.h.b16 %v2819
    %v3847 = vunpack.c.l.b16 %v2820
    %v3848 = vunpack.c.h.b16 %v2820
    %v3849 = vunpack.c.l.b16 %v2821
    %v3850 = vunpack.c.h.b16 %v2821
    %v3851 = vunpack.c.l.b16 %v2822
    %v3852 = vunpack.c.h.b16 %v2822
    %v3853 = vunpack.c.l.b16 %v2823
    %v3854 = vunpack.c.h.b16 %v2823
    %v3855 = vunpack.c.l.b16 %v2824
    %v3856 = vunpack.c.h.b16 %v2824
    %v3857 = vunpack.c.l.b16 %v2825
    %v3858 = vunpack.c.h.b16 %v2825
    %v3859 = vunpack.c.l.b16 %v2826
    %v3860 = vunpack.c.h.b16 %v2826
    %v3861 = vunpack.c.l.b16 %v2827
    %v3862 = vunpack.c.h.b16 %v2827
    %v3863 = vunpack.c.l.b16 %v2828
    %v3864 = vunpack.c.h.b16 %v2828
    %v3865 = vunpack.c.l.b16 %v2829
    %v3866 = vunpack.c.h.b16 %v2829
    %v3867 = vunpack.c.l.b16 %v2830
    %v3868 = vunpack.c.h.b16 %v2830
    %v3869 = vunpack.c.l.b16 %v2831
    %v3870 = vunpack.c.h.b16 %v2831
    %v3871 = vunpack.c.l.b16 %v2832
    %v3872 = vunpack.c.h.b16 %v2832
    %v3873 = vunpack.c.l.b16 %v2833
    %v3874 = vunpack.c.h.b16 %v2833
    %v3875 = vunpack.c.l.b16 %v2834
    %v3876 = vunpack.c.h.b16 %v2834
    %v3877 = vunpack.c.l.b16 %v2835
    %v3878 = vunpack.c.h.b16 %v2835
    %v3879 = vunpack.c.l.b16 %v2836
    %v3880 = vunpack.c.h.b16 %v2836
    %v3881 = vunpack.c.l.b16 %v2837
    %v3882 = vunpack.c.h.b16 %v2837
    %v3883 = vunpack.c.l.b16 %v2838
    %v3884 = vunpack.c.h.b16 %v2838
    %v3885 = vunpack.c.l.b16 %v2839
    %v3886 = vunpack.c.h.b16 %v2839
    %v3887 = vunpack.c.l.b16 %v2840
    %v3888 = vunpack.c.h.b16 %v2840
    %v3889 = vunpack.c.l.b16 %v2841
    %v3890 = vunpack.c.h.b16 %v2841
    %v3891 = vunpack.c.l.b16 %v2842
    %v3892 = vunpack.c.h.b16 %v2842
    %v3893 = vunpack.c.l.b16 %v2843
    %v3894 = vunpack.c.h.b16 %v2843
    %v3895 = vunpack.c.l.b16 %v2844
    %v3896 = vunpack.c.h.b16 %v2844
    %v3897 = vunpack.c.l.b16 %v2845
    %v3898 = vunpack.c.h.b16 %v2845
    %v3899 = vunpack.c.l.b16 %v2846
    %v3900 = vunpack.c.h.b16 %v2846
    %v3901 = vunpack.c.l.b16 %v2847
    %v3902 = vunpack.c.h.b16 %v2847
    %v3903 = vunpack.c.l.b16 %v2848
    %v3904 = vunpack.c.h.b16 %v2848
    %v3905 = vunpack.c.l.b16 %v2849
    %v3906 = vunpack.c.h.b16 %v2849
    %v3907 = vunpack.c.l.b16 %v2850
    %v3908 = vunpack.c.h.b16 %v2850
    %v3909 = vunpack.c.l.b16 %v2851
    %v3910 = vunpack.c.h.b16 %v2851
    %v3911 = vunpack.c.l.b16 %v2852
    %v3912 = vunpack.c.h.b16 %v2852
    %v3913 = vunpack.c.l.b16 %v2853
    %v3914 = vunpack.c.h.b16 %v2853
    %v3915 = vunpack.c.l.b16 %v2854
    %v3916 = vunpack.c.h.b16 %v2854
    %v3917 = vunpack.c.l.b16 %v2855
    %v3918 = vunpack.c.h.b16 %v2855
    %v3919 = vunpack.c.l.b16 %v2856
    %v3920 = vunpack.c.h.b16 %v2856
    %v3921 = vunpack.c.l.b16 %v2857
    %v3922 = vunpack.c.h.b16 %v2857
    %v3923 = vunpack.c.l.b16 %v2858
    %v3924 = vunpack.c.h.b16 %v2858
    %v3925 = vunpack.c.l.b16 %v2859
    %v3926 = vunpack.c.h.b16 %v2859
    %v3927 = vunpack.c.l.b16 %v2860
    %v3928 = vunpack.c.h.b16 %v2860
    %v3929 = vunpack.c.l.b16 %v2861
    %v3930 = vunpack.c.h.b16 %v2861
    %v3931 = vunpack.c.l.b16 %v2862
    %v3932 = vunpack.c.h.b16 %v2862
    %v3933 = vunpack.c.l.b16 %v2863
    %v3934 = vunpack.c.h.b16 %v2863
    %v3935 = vunpack.c.l.b16 %v2864
    %v3936 = vunpack.c.h.b16 %v2864
    %v3937 = vunpack.c.l.b16 %v2865
    %v3938 = vunpack.c.h.b16 %v2865
    %v3939 = vunpack.c.l.b16 %v2866
    %v3940 = vunpack.c.h.b16 %v2866
    %v3941 = vunpack.c.l.b16 %v2867
    %v3942 = vunpack.c.h.b16 %v2867
    %v3943 = vunpack.c.l.b16 %v2868
    %v3944 = vunpack.c.h.b16 %v2868
    %v3945 = vunpack.c.l.b16 %v2869
    %v3946 = vunpack.c.h.b16 %v2869
    %v3947 = vunpack.c.l.b16 %v2870
    %v3948 = vunpack.c.h.b16 %v2870
    %v3949 = vunpack.c.l.b16 %v2871
    %v3950 = vunpack.c.h.b16 %v2871
    %v3951 = vunpack.c.l.b16 %v2872
    %v3952 = vunpack.c.h.b16 %v2872
    %v3953 = vunpack.c.l.b16 %v2873
    %v3954 = vunpack.c.h.b16 %v2873
    %v3955 = vunpack.c.l.b16 %v2874
    %v3956 = vunpack.c.h.b16 %v2874
    %v3957 = vunpack.c.l.b16 %v2875
    %v3958 = vunpack.c.h.b16 %v2875
    %v3959 = vunpack.c.l.b16 %v2876
    %v3960 = vunpack.c.h.b16 %v2876
    %v3961 = vunpack.c.l.b16 %v2877
    %v3962 = vunpack.c.h.b16 %v2877
    %v3963 = vunpack.c.l.b16 %v2878
    %v3964 = vunpack.c.h.b16 %v2878
    %v3965 = vunpack.c.l.b16 %v2879
    %v3966 = vunpack.c.h.b16 %v2879
    %v3967 = vunpack.c.l.b16 %v2880
    %v3968 = vunpack.c.h.b16 %v2880
    %v3969 = vunpack.c.l.b16 %v2881
    %v3970 = vunpack.c.h.b16 %v2881
    %v3971 = vunpack.c.l.b16 %v2882
    %v3972 = vunpack.c.h.b16 %v2882
    %v3973 = vunpack.c.l.b16 %v2883
    %v3974 = vunpack.c.h.b16 %v2883
    %v3975 = vunpack.c.l.b16 %v2884
    %v3976 = vunpack.c.h.b16 %v2884
    %v3977 = vunpack.c.l.b16 %v2885
    %v3978 = vunpack.c.h.b16 %v2885
    %v3979 = vunpack.c.l.b16 %v2886
    %v3980 = vunpack.c.h.b16 %v2886
    %v3981 = vunpack.c.l.b16 %v2887
    %v3982 = vunpack.c.h.b16 %v2887
    %v3983 = vunpack.c.l.b16 %v2888
    %v3984 = vunpack.c.h.b16 %v2888
    %v3985 = vunpack.c.l.b16 %v2889
    %v3986 = vunpack.c.h.b16 %v2889
    %v3987 = vunpack.c.l.b16 %v2890
    %v3988 = vunpack.c.h.b16 %v2890
    %v3989 = vunpack.c.l.b16 %v2891
    %v3990 = vunpack.c.h.b16 %v2891
    %v3991 = vunpack.c.l.b16 %v2892
    %v3992 = vunpack.c.h.b16 %v2892
    %v3993 = vunpack.c.l.b16 %v2893
    %v3994 = vunpack.c.h.b16 %v2893
    %v3995 = vunpack.c.l.b16 %v2894
    %v3996 = vunpack.c.h.b16 %v2894
    %v3997 = vunpack.c.l.b16 %v2895
    %v3998 = vunpack.c.h.b16 %v2895
    %v3999 = vunpack.c.l.b16 %v2896
    %v4000 = vunpack.c.h.b16 %v2896
    %v4001 = vunpack.c.l.b16 %v2897
    %v4002 = vunpack.c.h.b16 %v2897
    %v4003 = vunpack.c.l.b16 %v2898
    %v4004 = vunpack.c.h.b16 %v2898
    %v4005 = vunpack.c.l.b16 %v2899
    %v4006 = vunpack.c.h.b16 %v2899
    %v4007 = vunpack.c.l.b16 %v2900
    %v4008 = vunpack.c.h.b16 %v2900
    %v4009 = vunpack.c.l.b16 %v2901
    %v4010 = vunpack.c.h.b16 %v2901
    %v4011 = vunpack.c.l.b16 %v2902
    %v4012 = vunpack.c.h.b16 %v2902
    %v4013 = vunpack.c.l.b16 %v2903
    %v4014 = vunpack.c.h.b16 %v2903
    %v4015 = vunpack.c.l.b16 %v2904
    %v4016 = vunpack.c.h.b16 %v2904
    %v4017 = vunpack.c.l.b16 %v2905
    %v4018 = vunpack.c.h.b16 %v2905
    %v4019 = vunpack.c.l.b16 %v2906
    %v4020 = vunpack.c.h.b16 %v2906
    %v4021 = vunpack.c.l.b16 %v2907
    %v4022 = vunpack.c.h.b16 %v2907
    %v4023 = vunpack.c.l.b16 %v2908
    %v4024 = vunpack.c.h.b16 %v2908
    %v4025 = vunpack.c.l.b16 %v2909
    %v4026 = vunpack.c.h.b16 %v2909
    %v4027 = vunpack.c.l.b16 %v2910
    %v4028 = vunpack.c.h.b16 %v2910
    %v4029 = vunpack.c.l.b16 %v2911
    %v4030 = vunpack.c.h.b16 %v2911
    %v4031 = vunpack.c.l.b16 %v2912
    %v4032 = vunpack.c.h.b16 %v2912
    %v4033 = vunpack.c.l.b16 %v2913
    %v4034 = vunpack.c.h.b16 %v2913
    %v4035 = vunpack.c.l.b16 %v2914
    %v4036 = vunpack.c.h.b16 %v2914
    %v4037 = vunpack.c.l.b16 %v2915
    %v4038 = vunpack.c.h.b16 %v2915
    %v4039 = vunpack.c.l.b16 %v2916
    %v4040 = vunpack.c.h.b16 %v2916
    %v4041 = vunpack.c.l.b16 %v2917
    %v4042 = vunpack.c.h.b16 %v2917
    %v4043 = vunpack.c.l.b16 %v2918
    %v4044 = vunpack.c.h.b16 %v2918
    %v4045 = vunpack.c.l.b16 %v2919
    %v4046 = vunpack.c.h.b16 %v2919
    %v4047 = vunpack.c.l.b16 %v2920
    %v4048 = vunpack.c.h.b16 %v2920
    %v4049 = vunpack.c.l.b16 %v2921
    %v4050 = vunpack.c.h.b16 %v2921
    %v4051 = vunpack.c.l.b16 %v2922
    %v4052 = vunpack.c.h.b16 %v2922
    %v4053 = vunpack.c.l.b16 %v2923
    %v4054 = vunpack.c.h.b16 %v2923
    %v4055 = vunpack.c.l.b16 %v2924
    %v4056 = vunpack.c.h.b16 %v2924
    %v4057 = vunpack.c.l.b16 %v2925
    %v4058 = vunpack.c.h.b16 %v2925
    %v4059 = vunpack.c.l.b16 %v2926
    %v4060 = vunpack.c.h.b16 %v2926
    %v4061 = vunpack.c.l.b16 %v2927
    %v4062 = vunpack.c.h.b16 %v2927
    %v4063 = vunpack.c.l.b16 %v2928
    %v4064 = vunpack.c.h.b16 %v2928
    %v4065 = vunpack.c.l.b16 %v2929
    %v4066 = vunpack.c.h.b16 %v2929
    %v4067 = vunpack.c.l.b16 %v2930
    %v4068 = vunpack.c.h.b16 %v2930
    %v4069 = vunpack.c.l.b16 %v2931
    %v4070 = vunpack.c.h.b16 %v2931
    %v4071 = vunpack.c.l.b16 %v2932
    %v4072 = vunpack.c.h.b16 %v2932
    %v4073 = vunpack.c.l.b16 %v2933
    %v4074 = vunpack.c.h.b16 %v2933
    %v4075 = vunpack.c.l.b16 %v2934
    %v4076 = vunpack.c.h.b16 %v2934
    %v4077 = vunpack.c.l.b16 %v2935
    %v4078 = vunpack.c.h.b16 %v2935
    %v4079 = vunpack.c.l.b16 %v2936
    %v4080 = vunpack.c.h.b16 %v2936
    %v4081 = vunpack.c.l.b16 %v2937
    %v4082 = vunpack.c.h.b16 %v2937
    %v4083 = vunpack.c.l.b16 %v2938
    %v4084 = vunpack.c.h.b16 %v2938
    %v4085 = vunpack.c.l.b16 %v2939
    %v4086 = vunpack.c.h.b16 %v2939
    %v4087 = vunpack.c.l.b16 %v2940
    %v4088 = vunpack.c.h.b16 %v2940
    %v4089 = vunpack.c.l.b16 %v2941
    %v4090 = vunpack.c.h.b16 %v2941
    %v4091 = vunpack.c.l.b16 %v2942
    %v4092 = vunpack.c.h.b16 %v2942
    %v4093 = vunpack.c.l.b16 %v2943
    %v4094 = vunpack.c.h.b16 %v2943
    %v4095 = vunpack.c.l.b16 %v2944
    %v4096 = vunpack.c.h.b16 %v2944
    %v4097 = vunpack.c.l.b16 %v2945
    %v4098 = vunpack.c.h.b16 %v2945
    %v4099 = vunpack.c.l.b16 %v2946
    %v4100 = vunpack.c.h.b16 %v2946
    %v4101 = vunpack.c.l.b16 %v2947
    %v4102 = vunpack.c.h.b16 %v2947
    %v4103 = vunpack.c.l.b16 %v2948
    %v4104 = vunpack.c.h.b16 %v2948
    %v4105 = vunpack.c.l.b16 %v2949
    %v4106 = vunpack.c.h.b16 %v2949
    %v4107 = vunpack.c.l.b16 %v2950
    %v4108 = vunpack.c.h.b16 %v2950
    %v4109 = vunpack.c.l.b16 %v2951
    %v4110 = vunpack.c.h.b16 %v2951
    %v4111 = vunpack.c.l.b16 %v2952
    %v4112 = vunpack.c.h.b16 %v2952
    %v4113 = vunpack.c.l.b16 %v2953
    %v4114 = vunpack.c.h.b16 %v2953
    %v4115 = vunpack.c.l.b16 %v2954
    %v4116 = vunpack.c.h.b16 %v2954
    %v4117 = vunpack.c.l.b16 %v2955
    %v4118 = vunpack.c.h.b16 %v2955
    %v4119 = vunpack.c.l.b16 %v2956
    %v4120 = vunpack.c.h.b16 %v2956
    %v4121 = vunpack.c.l.b16 %v2957
    %v4122 = vunpack.c.h.b16 %v2957
    %v4123 = vunpack.c.l.b16 %v2958
    %v4124 = vunpack.c.h.b16 %v2958
    %v4125 = vunpack.c.l.b16 %v2959
    %v4126 = vunpack.c.h.b16 %v2959
    %v4127 = vunpack.c.l.b16 %v2960
    %v4128 = vunpack.c.h.b16 %v2960
    %v4129 = vunpack.c.l.b16 %v2961
    %v4130 = vunpack.c.h.b16 %v2961
    %v4131 = vunpack.c.l.b16 %v2962
    %v4132 = vunpack.c.h.b16 %v2962
    %v4133 = vunpack.c.l.b16 %v2963
    %v4134 = vunpack.c.h.b16 %v2963
    %v4135 = vunpack.c.l.b16 %v2964
    %v4136 = vunpack.c.h.b16 %v2964
    %v4137 = vunpack.c.l.b16 %v2965
    %v4138 = vunpack.c.h.b16 %v2965
    %v4139 = vunpack.c.l.b16 %v2966
    %v4140 = vunpack.c.h.b16 %v2966
    %v4141 = vunpack.c.l.b16 %v2967
    %v4142 = vunpack.c.h.b16 %v2967
    %v4143 = vunpack.c.l.b16 %v2968
    %v4144 = vunpack.c.h.b16 %v2968
    %v4145 = vunpack.c.l.b16 %v2969
    %v4146 = vunpack.c.h.b16 %v2969
    %v4147 = vunpack.c.l.b16 %v2970
    %v4148 = vunpack.c.h.b16 %v2970
    %v4149 = vunpack.c.l.b16 %v2971
    %v4150 = vunpack.c.h.b16 %v2971
    %v4151 = vunpack.c.l.b16 %v2972
    %v4152 = vunpack.c.h.b16 %v2972
    %v4153 = vunpack.c.l.b16 %v2973
    %v4154 = vunpack.c.h.b16 %v2973
    %v4155 = vunpack.c.l.b16 %v2974
    %v4156 = vunpack.c.h.b16 %v2974
    %v4157 = vunpack.c.l.b16 %v2975
    %v4158 = vunpack.c.h.b16 %v2975
    %v4159 = vunpack.c.l.b16 %v2976
    %v4160 = vunpack.c.h.b16 %v2976
    %v4161 = vunpack.c.l.b16 %v2977
    %v4162 = vunpack.c.h.b16 %v2977
    %v4163 = vunpack.c.l.b16 %v2978
    %v4164 = vunpack.c.h.b16 %v2978
    %v4165 = vunpack.c.l.b16 %v2979
    %v4166 = vunpack.c.h.b16 %v2979
    %v4167 = vunpack.c.l.b16 %v2980
    %v4168 = vunpack.c.h.b16 %v2980
    %v4169 = vunpack.c.l.b16 %v2981
    %v4170 = vunpack.c.h.b16 %v2981
    %v4171 = vunpack.c.l.b16 %v2982
    %v4172 = vunpack.c.h.b16 %v2982
    %v4173 = vunpack.c.l.b16 %v2983
    %v4174 = vunpack.c.h.b16 %v2983
    %v4175 = vunpack.c.l.b16 %v2984
    %v4176 = vunpack.c.h.b16 %v2984
    %v4177 = vunpack.c.l.b16 %v2985
    %v4178 = vunpack.c.h.b16 %v2985
    %v4179 = vunpack.c.l.b16 %v2986
    %v4180 = vunpack.c.h.b16 %v2986
    %v4181 = vunpack.c.l.b16 %v2987
    %v4182 = vunpack.c.h.b16 %v2987
    %v4183 = vunpack.c.l.b16 %v2988
    %v4184 = vunpack.c.h.b16 %v2988
    %v4185 = vunpack.c.l.b16 %v2989
    %v4186 = vunpack.c.h.b16 %v2989
    %v4187 = vunpack.c.l.b16 %v2990
    %v4188 = vunpack.c.h.b16 %v2990
    %v4189 = vunpack.c.l.b16 %v2991
    %v4190 = vunpack.c.h.b16 %v2991
    %v4191 = vunpack.c.l.b16 %v2992
    %v4192 = vunpack.c.h.b16 %v2992
    %v4193 = vunpack.c.l.b16 %v2993
    %v4194 = vunpack.c.h.b16 %v2993
    %v4195 = vunpack.c.l.b16 %v2994
    %v4196 = vunpack.c.h.b16 %v2994
    %v4197 = vunpack.c.l.b16 %v2995
    %v4198 = vunpack.c.h.b16 %v2995
    %v4199 = vunpack.c.l.b16 %v2996
    %v4200 = vunpack.c.h.b16 %v2996
    %v4201 = vunpack.c.l.b16 %v2997
    %v4202 = vunpack.c.h.b16 %v2997
    %v4203 = vunpack.c.l.b16 %v2998
    %v4204 = vunpack.c.h.b16 %v2998
    %v4205 = vunpack.c.l.b16 %v2999
    %v4206 = vunpack.c.h.b16 %v2999
    %v4207 = vunpack.c.l.b16 %v3000
    %v4208 = vunpack.c.h.b16 %v3000
    %v4209 = vunpack.c.l.b16 %v3001
    %v4210 = vunpack.c.h.b16 %v3001
    %v4211 = vunpack.c.l.b16 %v3002
    %v4212 = vunpack.c.h.b16 %v3002
    %v4213 = vunpack.c.l.b16 %v3003
    %v4214 = vunpack.c.h.b16 %v3003
    %v4215 = vunpack.c.l.b16 %v3004
    %v4216 = vunpack.c.h.b16 %v3004
    %v4217 = vunpack.c.l.b16 %v3005
    %v4218 = vunpack.c.h.b16 %v3005
    %v4219 = vunpack.c.l.b16 %v3006
    %v4220 = vunpack.c.h.b16 %v3006
    %v4221 = vunpack.c.l.b16 %v3007
    %v4222 = vunpack.c.h.b16 %v3007
    %v4223 = vunpack.c.l.b16 %v3008
    %v4224 = vunpack.c.h.b16 %v3008
    %v4225 = vunpack.c.l.b16 %v3009
    %v4226 = vunpack.c.h.b16 %v3009
    %v4227 = vunpack.c.l.b16 %v3010
    %v4228 = vunpack.c.h.b16 %v3010
    %v4229 = vunpack.c.l.b16 %v3011
    %v4230 = vunpack.c.h.b16 %v3011
    %v4231 = vunpack.c.l.b16 %v3012
    %v4232 = vunpack.c.h.b16 %v3012
    %v4233 = vunpack.c.l.b16 %v3013
    %v4234 = vunpack.c.h.b16 %v3013
    %v4235 = vunpack.c.l.b16 %v3014
    %v4236 = vunpack.c.h.b16 %v3014
    %v4237 = vunpack.c.l.b16 %v3015
    %v4238 = vunpack.c.h.b16 %v3015
    %v4239 = vunpack.c.l.b16 %v3016
    %v4240 = vunpack.c.h.b16 %v3016
    %v4241 = vunpack.c.l.b16 %v3017
    %v4242 = vunpack.c.h.b16 %v3017
    %v4243 = vunpack.c.l.b16 %v3018
    %v4244 = vunpack.c.h.b16 %v3018
    %v4245 = vunpack.c.l.b16 %v3019
    %v4246 = vunpack.c.h.b16 %v3019
    %v4247 = vunpack.c.l.b16 %v3020
    %v4248 = vunpack.c.h.b16 %v3020
    %v4249 = vunpack.c.l.b16 %v3021
    %v4250 = vunpack.c.h.b16 %v3021
    %v4251 = vunpack.c.l.b16 %v3022
    %v4252 = vunpack.c.h.b16 %v3022
    %v4253 = vunpack.c.l.b16 %v3023
    %v4254 = vunpack.c.h.b16 %v3023
    %v4255 = vunpack.c.l.b16 %v3024
    %v4256 = vunpack.c.h.b16 %v3024
    %v4257 = vunpack.c.l.b16 %v3025
    %v4258 = vunpack.c.h.b16 %v3025
    %v4259 = vunpack.c.l.b16 %v3026
    %v4260 = vunpack.c.h.b16 %v3026
    %v4261 = vunpack.c.l.b16 %v3027
    %v4262 = vunpack.c.h.b16 %v3027
    %v4263 = vunpack.c.l.b16 %v3028
    %v4264 = vunpack.c.h.b16 %v3028
    %v4265 = vunpack.c.l.b16 %v3029
    %v4266 = vunpack.c.h.b16 %v3029
    %v4267 = vunpack.c.l.b16 %v3030
    %v4268 = vunpack.c.h.b16 %v3030
    %v4269 = vunpack.c.l.b16 %v3031
    %v4270 = vunpack.c.h.b16 %v3031
    %v4271 = vunpack.c.l.b16 %v3032
    %v4272 = vunpack.c.h.b16 %v3032
    %v4273 = vunpack.c.l.b16 %v3033
    %v4274 = vunpack.c.h.b16 %v3033
    %v4275 = vunpack.c.l.b16 %v3034
    %v4276 = vunpack.c.h.b16 %v3034
    %v4277 = vunpack.c.l.b16 %v3035
    %v4278 = vunpack.c.h.b16 %v3035
    %v4279 = vunpack.c.l.b16 %v3036
    %v4280 = vunpack.c.h.b16 %v3036
    %v4281 = vunpack.c.l.b16 %v3037
    %v4282 = vunpack.c.h.b16 %v3037
    %v4283 = vunpack.c.l.b16 %v3038
    %v4284 = vunpack.c.h.b16 %v3038
    %v4285 = vunpack.c.l.b16 %v3039
    %v4286 = vunpack.c.h.b16 %v3039
    %v4287 = vunpack.c.l.b16 %v3040
    %v4288 = vunpack.c.h.b16 %v3040
    %v4289 = vunpack.c.l.b16 %v3041
    %v4290 = vunpack.c.h.b16 %v3041
    %v4291 = vunpack.c.l.b16 %v3042
    %v4292 = vunpack.c.h.b16 %v3042
    %v4293 = vunpack.c.l.b16 %v3043
    %v4294 = vunpack.c.h.b16 %v3043
    %v4295 = vunpack.c.l.b16 %v3044
    %v4296 = vunpack.c.h.b16 %v3044
    %v4297 = vunpack.c.l.b16 %v3045
    %v4298 = vunpack.c.h.b16 %v3045
    %v4299 = vunpack.c.l.b16 %v3046
    %v4300 = vunpack.c.h.b16 %v3046
    %v4301 = vunpack.c.l.b16 %v3047
    %v4302 = vunpack.c.h.b16 %v3047
    %v4303 = vunpack.c.l.b16 %v3048
    %v4304 = vunpack.c.h.b16 %v3048
    %v4305 = vunpack.c.l.b16 %v3049
    %v4306 = vunpack.c.h.b16 %v3049
    %v4307 = vunpack.c.l.b16 %v3050
    %v4308 = vunpack.c.h.b16 %v3050
    %v4309 = vunpack.c.l.b16 %v3051
    %v4310 = vunpack.c.h.b16 %v3051
    %v4311 = vunpack.c.l.b16 %v3052
    %v4312 = vunpack.c.h.b16 %v3052
    %v4313 = vunpack.c.l.b16 %v3053
    %v4314 = vunpack.c.h.b16 %v3053
    %v4315 = vunpack.c.l.b16 %v3054
    %v4316 = vunpack.c.h.b16 %v3054
    %v4317 = vunpack.c.l.b16 %v3055
    %v4318 = vunpack.c.h.b16 %v3055
    %v4319 = vunpack.c.l.b16 %v3056
    %v4320 = vunpack.c.h.b16 %v3056
    %v4321 = vunpack.c.l.b16 %v3057
    %v4322 = vunpack.c.h.b16 %v3057
    %v4323 = vunpack.c.l.b16 %v3058
    %v4324 = vunpack.c.h.b16 %v3058
    %v4325 = vunpack.c.l.b16 %v3059
    %v4326 = vunpack.c.h.b16 %v3059
    %v4327 = vunpack.c.l.b16 %v3060
    %v4328 = vunpack.c.h.b16 %v3060
    %v4329 = vunpack.c.l.b16 %v3061
    %v4330 = vunpack.c.h.b16 %v3061
    %v4331 = vunpack.c.l.b16 %v3062
    %v4332 = vunpack.c.h.b16 %v3062
    %v4333 = vunpack.c.l.b16 %v3063
    %v4334 = vunpack.c.h.b16 %v3063
    %v4335 = vunpack.c.l.b16 %v3064
    %v4336 = vunpack.c.h.b16 %v3064
    %v4337 = vunpack.c.l.b16 %v3065
    %v4338 = vunpack.c.h.b16 %v3065
    %v4339 = vunpack.c.l.b16 %v3066
    %v4340 = vunpack.c.h.b16 %v3066
    %v4341 = vunpack.c.l.b16 %v3067
    %v4342 = vunpack.c.h.b16 %v3067
    %v4343 = vunpack.c.l.b16 %v3068
    %v4344 = vunpack.c.h.b16 %v3068
    %v4345 = vunpack.c.l.b16 %v3069
    %v4346 = vunpack.c.h.b16 %v3069
    %v4347 = vunpack.c.l.b16 %v3070
    %v4348 = vunpack.c.h.b16 %v3070
    %v4349 = vunpack.c.l.b16 %v3071
    %v4350 = vunpack.c.h.b16 %v3071
    %v4351 = vunpack.c.l.b16 %v3072
    %v4352 = vunpack.c.h.b16 %v3072
    %v4353 = vunpack.c.l.b16 %v3073
    %v4354 = vunpack.c.h.b16 %v3073
    %v4355 = vunpack.c.l.b16 %v3074
    %v4356 = vunpack.c.h.b16 %v3074
    %v4357 = vunpack.c.l.b16 %v3075
    %v4358 = vunpack.c.h.b16 %v3075
    %v4359 = vunpack.c.l.b16 %v3076
    %v4360 = vunpack.c.h.b16 %v3076
    %v4361 = vunpack.c.l.b16 %v3077
    %v4362 = vunpack.c.h.b16 %v3077
    %v4363 = vunpack.c.l.b16 %v3078
    %v4364 = vunpack.c.h.b16 %v3078
    %v4365 = vunpack.c.l.b16 %v3079
    %v4366 = vunpack.c.h.b16 %v3079
    %v4367 = vunpack.c.l.b16 %v3080
    %v4368 = vunpack.c.h.b16 %v3080
    %v4369 = vunpack.c.l.b16 %v3081
    %v4370 = vunpack.c.h.b16 %v3081
    %v4371 = vunpack.c.l.b16 %v3082
    %v4372 = vunpack.c.h.b16 %v3082
    %v4373 = vunpack.c.l.b16 %v3083
    %v4374 = vunpack.c.h.b16 %v3083
    %v4375 = vunpack.c.l.b16 %v3084
    %v4376 = vunpack.c.h.b16 %v3084
    %v4377 = vunpack.c.l.b16 %v3085
    %v4378 = vunpack.c.h.b16 %v3085
    %v4379 = vunpack.c.l.b16 %v3086
    %v4380 = vunpack.c.h.b16 %v3086
    %v4381 = vunpack.c.l.b16 %v3087
    %v4382 = vunpack.c.h.b16 %v3087
    %v4383 = vunpack.c.l.b16 %v3088
    %v4384 = vunpack.c.h.b16 %v3088
    %v4385 = vunpack.c.l.b16 %v3089
    %v4386 = vunpack.c.h.b16 %v3089
    %v4387 = vunpack.c.l.b16 %v3090
    %v4388 = vunpack.c.h.b16 %v3090
    %v4389 = vunpack.c.l.b16 %v3091
    %v4390 = vunpack.c.h.b16 %v3091
    %v4391 = vunpack.c.l.b16 %v3092
    %v4392 = vunpack.c.h.b16 %v3092
    %v4393 = vunpack.c.l.b16 %v3093
    %v4394 = vunpack.c.h.b16 %v3093
    %v4395 = vunpack.c.l.b16 %v3094
    %v4396 = vunpack.c.h.b16 %v3094
    %v4397 = vunpack.c.l.b16 %v3095
    %v4398 = vunpack.c.h.b16 %v3095
    %v4399 = vunpack.c.l.b16 %v3096
    %v4400 = vunpack.c.h.b16 %v3096
    %v4401 = vunpack.c.l.b16 %v3097
    %v4402 = vunpack.c.h.b16 %v3097
    %v4403 = vunpack.c.l.b16 %v3098
    %v4404 = vunpack.c.h.b16 %v3098
    %v4405 = vunpack.c.l.b16 %v3099
    %v4406 = vunpack.c.h.b16 %v3099
    %v4407 = vunpack.c.l.b16 %v3100
    %v4408 = vunpack.c.h.b16 %v3100
    %v4409 = vunpack.c.l.b16 %v3101
    %v4410 = vunpack.c.h.b16 %v3101
    %v4411 = vunpack.c.l.b16 %v3102
    %v4412 = vunpack.c.h.b16 %v3102
    %v4413 = vunpack.c.l.b16 %v3103
    %v4414 = vunpack.c.h.b16 %v3103
    %v4415 = vunpack.c.l.b16 %v3104
    %v4416 = vunpack.c.h.b16 %v3104
    %v4417 = vunpack.c.l.b16 %v3105
    %v4418 = vunpack.c.h.b16 %v3105
    %v4419 = vunpack.c.l.b16 %v3106
    %v4420 = vunpack.c.h.b16 %v3106
    %v4421 = vunpack.c.l.b16 %v3107
    %v4422 = vunpack.c.h.b16 %v3107
    %v4423 = vunpack.c.l.b16 %v3108
    %v4424 = vunpack.c.h.b16 %v3108
    %v4425 = vunpack.c.l.b16 %v3109
    %v4426 = vunpack.c.h.b16 %v3109
    %v4427 = vunpack.c.l.b16 %v3110
    %v4428 = vunpack.c.h.b16 %v3110
    %v4429 = vunpack.c.l.b16 %v3111
    %v4430 = vunpack.c.h.b16 %v3111
    %v4431 = vunpack.c.l.b16 %v3112
    %v4432 = vunpack.c.h.b16 %v3112
    %v4433 = vunpack.c.l.b16 %v3113
    %v4434 = vunpack.c.h.b16 %v3113
    %v4435 = vunpack.c.l.b16 %v3114
    %v4436 = vunpack.c.h.b16 %v3114
    %v4437 = vunpack.c.l.b16 %v3115
    %v4438 = vunpack.c.h.b16 %v3115
    %v4439 = vunpack.c.l.b16 %v3116
    %v4440 = vunpack.c.h.b16 %v3116
    %v4441 = vunpack.c.l.b16 %v3117
    %v4442 = vunpack.c.h.b16 %v3117
    %v4443 = vunpack.c.l.b16 %v3118
    %v4444 = vunpack.c.h.b16 %v3118
    %v4445 = vunpack.c.l.b16 %v3119
    %v4446 = vunpack.c.h.b16 %v3119
    %v4447 = vunpack.c.l.b16 %v3120
    %v4448 = vunpack.c.h.b16 %v3120
    %v4449 = vunpack.c.l.b16 %v3121
    %v4450 = vunpack.c.h.b16 %v3121
    %v4451 = vunpack.c.l.b16 %v3122
    %v4452 = vunpack.c.h.b16 %v3122
    %v4453 = vunpack.c.l.b16 %v3123
    %v4454 = vunpack.c.h.b16 %v3123
    %v4455 = vunpack.c.l.b16 %v3124
    %v4456 = vunpack.c.h.b16 %v3124
    %v4457 = vunpack.c.l.b16 %v3125
    %v4458 = vunpack.c.h.b16 %v3125
    %v4459 = vunpack.c.l.b16 %v3126
    %v4460 = vunpack.c.h.b16 %v3126
    %v4461 = vunpack.c.l.b16 %v3127
    %v4462 = vunpack.c.h.b16 %v3127
    %v4463 = vunpack.c.l.b16 %v3128
    %v4464 = vunpack.c.h.b16 %v3128
    %v4465 = vunpack.c.l.b16 %v3129
    %v4466 = vunpack.c.h.b16 %v3129
    %v4467 = vunpack.c.l.b16 %v3130
    %v4468 = vunpack.c.h.b16 %v3130
    %v4469 = vunpack.c.l.b16 %v3131
    %v4470 = vunpack.c.h.b16 %v3131
    %v4471 = vunpack.c.l.b16 %v3132
    %v4472 = vunpack.c.h.b16 %v3132
    %v4473 = vunpack.c.l.b16 %v3133
    %v4474 = vunpack.c.h.b16 %v3133
    %v4475 = vunpack.c.l.b16 %v3134
    %v4476 = vunpack.c.h.b16 %v3134
    %v4477 = vunpack.c.l.b16 %v3135
    %v4478 = vunpack.c.h.b16 %v3135
    %v4479 = vunpack.c.l.b16 %v3136
    %v4480 = vunpack.c.h.b16 %v3136
    %v4481 = vunpack.c.l.b16 %v3137
    %v4482 = vunpack.c.h.b16 %v3137
    %v4483 = vunpack.c.l.b16 %v3138
    %v4484 = vunpack.c.h.b16 %v3138
    %v4485 = vunpack.c.l.b16 %v3139
    %v4486 = vunpack.c.h.b16 %v3139
    %v4487 = vunpack.c.l.b16 %v3140
    %v4488 = vunpack.c.h.b16 %v3140
    %v4489 = vunpack.c.l.b16 %v3141
    %v4490 = vunpack.c.h.b16 %v3141
    %v4491 = vunpack.c.l.b16 %v3142
    %v4492 = vunpack.c.h.b16 %v3142
    %v4493 = vunpack.c.l.b16 %v3143
    %v4494 = vunpack.c.h.b16 %v3143
    %v4495 = vunpack.c.l.b16 %v3144
    %v4496 = vunpack.c.h.b16 %v3144
    %v4497 = vunpack.c.l.b16 %v3145
    %v4498 = vunpack.c.h.b16 %v3145
    %v4499 = vunpack.c.l.b16 %v3146
    %v4500 = vunpack.c.h.b16 %v3146
    %v4501 = vunpack.c.l.b16 %v3147
    %v4502 = vunpack.c.h.b16 %v3147
    %v4503 = vunpack.c.l.b16 %v3148
    %v4504 = vunpack.c.h.b16 %v3148
    %v4505 = vunpack.c.l.b16 %v3149
    %v4506 = vunpack.c.h.b16 %v3149
    %v4507 = vunpack.c.l.b16 %v3150
    %v4508 = vunpack.c.h.b16 %v3150
    %v4509 = vunpack.c.l.b16 %v3151
    %v4510 = vunpack.c.h.b16 %v3151
    %v4511 = vunpack.c.l.b16 %v3152
    %v4512 = vunpack.c.h.b16 %v3152
    %v4513 = vunpack.c.l.b16 %v3153
    %v4514 = vunpack.c.h.b16 %v3153
    %v4515 = vunpack.c.l.b16 %v3154
    %v4516 = vunpack.c.h.b16 %v3154
    %v4517 = vunpack.c.l.b16 %v3155
    %v4518 = vunpack.c.h.b16 %v3155
    %v4519 = vunpack.c.l.b16 %v3156
    %v4520 = vunpack.c.h.b16 %v3156
    %v4521 = vunpack.c.l.b16 %v3157
    %v4522 = vunpack.c.h.b16 %v3157
    %v4523 = vunpack.c.l.b16 %v3158
    %v4524 = vunpack.c.h.b16 %v3158
    %v4525 = vunpack.c.l.b16 %v3159
    %v4526 = vunpack.c.h.b16 %v3159
    %v4527 = vunpack.c.l.b16 %v3160
    %v4528 = vunpack.c.h.b16 %v3160
    %v4529 = vunpack.c.l.b16 %v3161
    %v4530 = vunpack.c.h.b16 %v3161
    %v4531 = vunpack.c.l.b16 %v3162
    %v4532 = vunpack.c.h.b16 %v3162
    %v4533 = vunpack.c.l.b16 %v3163
    %v4534 = vunpack.c.h.b16 %v3163
    %v4535 = vunpack.c.l.b16 %v3164
    %v4536 = vunpack.c.h.b16 %v3164
    %v4537 = vunpack.c.l.b16 %v3165
    %v4538 = vunpack.c.h.b16 %v3165
    %v4539 = vunpack.c.l.b16 %v3166
    %v4540 = vunpack.c.h.b16 %v3166
    %v4541 = vunpack.c.l.b16 %v3167
    %v4542 = vunpack.c.h.b16 %v3167
    %v4543 = vunpack.c.l.b16 %v3168
    %v4544 = vunpack.c.h.b16 %v3168
    %v4545 = vunpack.c.l.b16 %v3169
    %v4546 = vunpack.c.h.b16 %v3169
    %v4547 = vunpack.c.l.b16 %v3170
    %v4548 = vunpack.c.h.b16 %v3170
    %v4549 = vunpack.c.l.b16 %v3171
    %v4550 = vunpack.c.h.b16 %v3171
    %v4551 = vunpack.c.l.b16 %v3172
    %v4552 = vunpack.c.h.b16 %v3172
    %v4553 = vunpack.c.l.b16 %v3173
    %v4554 = vunpack.c.h.b16 %v3173
    %v4555 = vunpack.c.l.b16 %v3174
    %v4556 = vunpack.c.h.b16 %v3174
    %v4557 = vunpack.c.l.b16 %v3175
    %v4558 = vunpack.c.h.b16 %v3175
    %v4559 = vunpack.c.l.b16 %v3176
    %v4560 = vunpack.c.h.b16 %v3176
    %v4561 = vunpack.c.l.b16 %v3177
    %v4562 = vunpack.c.h.b16 %v3177
    %v4563 = vunpack.c.l.b16 %v3178
    %v4564 = vunpack.c.h.b16 %v3178
    %v4565 = vunpack.c.l.b16 %v3179
    %v4566 = vunpack.c.h.b16 %v3179
    %v4567 = vunpack.c.l.b16 %v3180
    %v4568 = vunpack.c.h.b16 %v3180
    %v4569 = vunpack.c.l.b16 %v3181
    %v4570 = vunpack.c.h.b16 %v3181
    %v4571 = vunpack.c.l.b16 %v3182
    %v4572 = vunpack.c.h.b16 %v3182
    %v4573 = vunpack.c.l.b16 %v3183
    %v4574 = vunpack.c.h.b16 %v3183
    %v4575 = vunpack.c.l.b16 %v3184
    %v4576 = vunpack.c.h.b16 %v3184
    %v4577 = vunpack.c.l.b16 %v3185
    %v4578 = vunpack.c.h.b16 %v3185
    %v4579 = vunpack.c.l.b16 %v3186
    %v4580 = vunpack.c.h.b16 %v3186
    %v4581 = vunpack.c.l.b16 %v3187
    %v4582 = vunpack.c.h.b16 %v3187
    %v4583 = vunpack.c.l.b16 %v3188
    %v4584 = vunpack.c.h.b16 %v3188
    %v4585 = vunpack.c.l.b16 %v3189
    %v4586 = vunpack.c.h.b16 %v3189
    %v4587 = vunpack.c.l.b16 %v3190
    %v4588 = vunpack.c.h.b16 %v3190
    %v4589 = vunpack.c.l.b16 %v3191
    %v4590 = vunpack.c.h.b16 %v3191
    %v4591 = vunpack.c.l.b16 %v3192
    %v4592 = vunpack.c.h.b16 %v3192
    %v4593 = vunpack.c.l.b16 %v3193
    %v4594 = vunpack.c.h.b16 %v3193
    %v4595 = vunpack.c.l.b16 %v3194
    %v4596 = vunpack.c.h.b16 %v3194
    %v4597 = vunpack.c.l.b16 %v3195
    %v4598 = vunpack.c.h.b16 %v3195
    %v4599 = vunpack.c.l.b16 %v3196
    %v4600 = vunpack.c.h.b16 %v3196
    %v4601 = vunpack.c.l.b16 %v3197
    %v4602 = vunpack.c.h.b16 %v3197
    %v4603 = vunpack.c.l.b16 %v3198
    %v4604 = vunpack.c.h.b16 %v3198
    %v4605 = vunpack.c.l.b16 %v3199
    %v4606 = vunpack.c.h.b16 %v3199
    %v4607 = vunpack.c.l.b16 %v3200
    %v4608 = vunpack.c.h.b16 %v3200
    %v4609 = vunpack.c.l.b16 %v3201
    %v4610 = vunpack.c.h.b16 %v3201
    %v4611 = vunpack.c.l.b16 %v3202
    %v4612 = vunpack.c.h.b16 %v3202
    %v4613 = vunpack.c.l.b16 %v3203
    %v4614 = vunpack.c.h.b16 %v3203
    %v4615 = vunpack.c.l.b16 %v3204
    %v4616 = vunpack.c.h.b16 %v3204
    %v4617 = vunpack.c.l.b16 %v3205
    %v4618 = vunpack.c.h.b16 %v3205
    %v4619 = vunpack.c.l.b16 %v3206
    %v4620 = vunpack.c.h.b16 %v3206
    %v4621 = vunpack.c.l.b16 %v3207
    %v4622 = vunpack.c.h.b16 %v3207
    %v4623 = vunpack.c.l.b16 %v3208
    %v4624 = vunpack.c.h.b16 %v3208
    %v4625 = vunpack.c.l.b16 %v3209
    %v4626 = vunpack.c.h.b16 %v3209
    %v4627 = vunpack.c.l.b16 %v3210
    %v4628 = vunpack.c.h.b16 %v3210
    %v4629 = vunpack.c.l.b16 %v3211
    %v4630 = vunpack.c.h.b16 %v3211
    %v4631 = vunpack.c.l.b16 %v3212
    %v4632 = vunpack.c.h.b16 %v3212
    %v4633 = vunpack.c.l.b16 %v3213
    %v4634 = vunpack.c.h.b16 %v3213
    %v4635 = vunpack.c.l.b16 %v3214
    %v4636 = vunpack.c.h.b16 %v3214
    %v4637 = vunpack.c.l.b16 %v3215
    %v4638 = vunpack.c.h.b16 %v3215
    %v4639 = vunpack.c.l.b16 %v3216
    %v4640 = vunpack.c.h.b16 %v3216
    %v4641 = vunpack.c.l.b16 %v3217
    %v4642 = vunpack.c.h.b16 %v3217
    %v4643 = vunpack.c.l.b16 %v3218
    %v4644 = vunpack.c.h.b16 %v3218
    %v4645 = vunpack.c.l.b16 %v3219
    %v4646 = vunpack.c.h.b16 %v3219
    %v4647 = vunpack.c.l.b16 %v3220
    %v4648 = vunpack.c.h.b16 %v3220
    %v4649 = vunpack.c.l.b16 %v3221
    %v4650 = vunpack.c.h.b16 %v3221
    %v4651 = vunpack.c.l.b16 %v3222
    %v4652 = vunpack.c.h.b16 %v3222
    %v4653 = vunpack.c.l.b16 %v3223
    %v4654 = vunpack.c.h.b16 %v3223
    %v4655 = vunpack.c.l.b16 %v3224
    %v4656 = vunpack.c.h.b16 %v3224
    %v4657 = vunpack.c.l.b16 %v3225
    %v4658 = vunpack.c.h.b16 %v3225
    %v4659 = vunpack.c.l.b16 %v3226
    %v4660 = vunpack.c.h.b16 %v3226
    %v4661 = vunpack.c.l.b16 %v3227
    %v4662 = vunpack.c.h.b16 %v3227
    %v4663 = vunpack.c.l.b16 %v3228
    %v4664 = vunpack.c.h.b16 %v3228
    %v4665 = vunpack.c.l.b16 %v3229
    %v4666 = vunpack.c.h.b16 %v3229
    %v4667 = vunpack.c.l.b16 %v3230
    %v4668 = vunpack.c.h.b16 %v3230
    %v4669 = vunpack.c.l.b16 %v3231
    %v4670 = vunpack.c.h.b16 %v3231
    %v4671 = vunpack.c.l.b16 %v3232
    %v4672 = vunpack.c.h.b16 %v3232
    %v4673 = vpack.c.b16 %v3717, %v3713
    %v4674 = vpack.c.b16 %v3718, %v3714
    %v4675 = vpack.c.b16 %v3719, %v3715
    %v4676 = vpack.c.b16 %v3720, %v3716
    %v4677 = vpack.c.b16 %v3725, %v3721
    %v4678 = vpack.c.b16 %v3726, %v3722
    %v4679 = vpack.c.b16 %v3727, %v3723
    %v4680 = vpack.c.b16 %v3728, %v3724
    %v4681 = vpack.c.b16 %v3733, %v3729
    %v4682 = vpack.c.b16 %v3734, %v3730
    %v4683 = vpack.c.b16 %v3735, %v3731
    %v4684 = vpack.c.b16 %v3736, %v3732
    %v4685 = vpack.c.b16 %v3741, %v3737
    %v4686 = vpack.c.b16 %v3742, %v3738
    %v4687 = vpack.c.b16 %v3743, %v3739
    %v4688 = vpack.c.b16 %v3744, %v3740
    %v4689 = vpack.c.b16 %v3749, %v3745
    %v4690 = vpack.c.b16 %v3750, %v3746
    %v4691 = vpack.c.b16 %v3751, %v3747
    %v4692 = vpack.c.b16 %v3752, %v3748
    %v4693 = vpack.c.b16 %v3757, %v3753
    %v4694 = vpack.c.b16 %v3758, %v3754
    %v4695 = vpack.c.b16 %v3759, %v3755
    %v4696 = vpack.c.b16 %v3760, %v3756
    %v4697 = vpack.c.b16 %v3765, %v3761
    %v4698 = vpack.c.b16 %v3766, %v3762
    %v4699 = vpack.c.b16 %v3767, %v3763
    %v4700 = vpack.c.b16 %v3768, %v3764
    %v4701 = vpack.c.b16 %v3773, %v3769
    %v4702 = vpack.c.b16 %v3774, %v3770
    %v4703 = vpack.c.b16 %v3775, %v3771
    %v4704 = vpack.c.b16 %v3776, %v3772
    %v4705 = vpack.c.b16 %v3781, %v3777
    %v4706 = vpack.c.b16 %v3782, %v3778
    %v4707 = vpack.c.b16 %v3783, %v3779
    %v4708 = vpack.c.b16 %v3784, %v3780
    %v4709 = vpack.c.b16 %v3789, %v3785
    %v4710 = vpack.c.b16 %v3790, %v3786
    %v4711 = vpack.c.b16 %v3791, %v3787
    %v4712 = vpack.c.b16 %v3792, %v3788
    %v4713 = vpack.c.b16 %v3797, %v3793
    %v4714 = vpack.c.b16 %v3798, %v3794
    %v4715 = vpack.c.b16 %v3799, %v3795
    %v4716 = vpack.c.b16 %v3800, %v3796
    %v4717 = vpack.c.b16 %v3805, %v3801
    %v4718 = vpack.c.b16 %v3806, %v3802
    %v4719 = vpack.c.b16 %v3807, %v3803
    %v4720 = vpack.c.b16 %v3808, %v3804
    %v4721 = vpack.c.b16 %v3813, %v3809
    %v4722 = vpack.c.b16 %v3814, %v3810
    %v4723 = vpack.c.b16 %v3815, %v3811
    %v4724 = vpack.c.b16 %v3816, %v3812
    %v4725 = vpack.c.b16 %v3821, %v3817
    %v4726 = vpack.c.b16 %v3822, %v3818
    %v4727 = vpack.c.b16 %v3823, %v3819
    %v4728 = vpack.c.b16 %v3824, %v3820
    %v4729 = vpack.c.b16 %v3829, %v3825
    %v4730 = vpack.c.b16 %v3830, %v3826
    %v4731 = vpack.c.b16 %v3831, %v3827
    %v4732 = vpack.c.b16 %v3832, %v3828
    %v4733 = vpack.c.b16 %v3837, %v3833
    %v4734 = vpack.c.b16 %v3838, %v3834
    %v4735 = vpack.c.b16 %v3839, %v3835
    %v4736 = vpack.c.b16 %v3840, %v3836
    %v4737 = vpack.c.b16 %v3845, %v3841
    %v4738 = vpack.c.b16 %v3846, %v3842
    %v4739 = vpack.c.b16 %v3847, %v3843
    %v4740 = vpack.c.b16 %v3848, %v3844
    %v4741 = vpack.c.b16 %v3853, %v3849
    %v4742 = vpack.c.b16 %v3854, %v3850
    %v4743 = vpack.c.b16 %v3855, %v3851
    %v4744 = vpack.c.b16 %v3856, %v3852
    %v4745 = vpack.c.b16 %v3861, %v3857
    %v4746 = vpack.c.b16 %v3862, %v3858
    %v4747 = vpack.c.b16 %v3863, %v3859
    %v4748 = vpack.c.b16 %v3864, %v3860
    %v4749 = vpack.c.b16 %v3869, %v3865
    %v4750 = vpack.c.b16 %v3870, %v3866
    %v4751 = vpack.c.b16 %v3871, %v3867
    %v4752 = vpack.c.b16 %v3872, %v3868
    %v4753 = vpack.c.b16 %v3877, %v3873
    %v4754 = vpack.c.b16 %v3878, %v3874
    %v4755 = vpack.c.b16 %v3879, %v3875
    %v4756 = vpack.c.b16 %v3880, %v3876
    %v4757 = vpack.c.b16 %v3885, %v3881
    %v4758 = vpack.c.b16 %v3886, %v3882
    %v4759 = vpack.c.b16 %v3887, %v3883
    %v4760 = vpack.c.b16 %v3888, %v3884
    %v4761 = vpack.c.b16 %v3893, %v3889
    %v4762 = vpack.c.b16 %v3894, %v3890
    %v4763 = vpack.c.b16 %v3895, %v3891
    %v4764 = vpack.c.b16 %v3896, %v3892
    %v4765 = vpack.c.b16 %v3901, %v3897
    %v4766 = vpack.c.b16 %v3902, %v3898
    %v4767 = vpack.c.b16 %v3903, %v3899
    %v4768 = vpack.c.b16 %v3904, %v3900
    %v4769 = vpack.c.b16 %v3909, %v3905
    %v4770 = vpack.c.b16 %v3910, %v3906
    %v4771 = vpack.c.b16 %v3911, %v3907
    %v4772 = vpack.c.b16 %v3912, %v3908
    %v4773 = vpack.c.b16 %v3917, %v3913
    %v4774 = vpack.c.b16 %v3918, %v3914
    %v4775 = vpack.c.b16 %v3919, %v3915
    %v4776 = vpack.c.b16 %v3920, %v3916
    %v4777 = vpack.c.b16 %v3925, %v3921
    %v4778 = vpack.c.b16 %v3926, %v3922
    %v4779 = vpack.c.b16 %v3927, %v3923
    %v4780 = vpack.c.b16 %v3928, %v3924
    %v4781 = vpack.c.b16 %v3933, %v3929
    %v4782 = vpack.c.b16 %v3934, %v3930
    %v4783 = vpack.c.b16 %v3935, %v3931
    %v4784 = vpack.c.b16 %v3936, %v3932
    %v4785 = vpack.c.b16 %v3941, %v3937
    %v4786 = vpack.c.b16 %v3942, %v3938
    %v4787 = vpack.c.b16 %v3943, %v3939
    %v4788 = vpack.c.b16 %v3944, %v3940
    %v4789 = vpack.c.b16 %v3949, %v3945
    %v4790 = vpack.c.b16 %v3950, %v3946
    %v4791 = vpack.c.b16 %v3951, %v3947
    %v4792 = vpack.c.b16 %v3952, %v3948
    %v4793 = vpack.c.b16 %v3957, %v3953
    %v4794 = vpack.c.b16 %v3958, %v3954
    %v4795 = vpack.c.b16 %v3959, %v3955
    %v4796 = vpack.c.b16 %v3960, %v3956
    %v4797 = vpack.c.b16 %v3965, %v3961
    %v4798 = vpack.c.b16 %v3966, %v3962
    %v4799 = vpack.c.b16 %v3967, %v3963
    %v4800 = vpack.c.b16 %v3968, %v3964
    %v4801 = vpack.c.b16 %v3973, %v3969
    %v4802 = vpack.c.b16 %v3974, %v3970
    %v4803 = vpack.c.b16 %v3975, %v3971
    %v4804 = vpack.c.b16 %v3976, %v3972
    %v4805 = vpack.c.b16 %v3981, %v3977
    %v4806 = vpack.c.b16 %v3982, %v3978
    %v4807 = vpack.c.b16 %v3983, %v3979
    %v4808 = vpack.c.b16 %v3984, %v3980
    %v4809 = vpack.c.b16 %v3989, %v3985
    %v4810 = vpack.c.b16 %v3990, %v3986
    %v4811 = vpack.c.b16 %v3991, %v3987
    %v4812 = vpack.c.b16 %v3992, %v3988
    %v4813 = vpack.c.b16 %v3997, %v3993
    %v4814 = vpack.c.b16 %v3998, %v3994
    %v4815 = vpack.c.b16 %v3999, %v3995
    %v4816 = vpack.c.b16 %v4000, %v3996
    %v4817 = vpack.c.b16 %v4005, %v4001
    %v4818 = vpack.c.b16 %v4006, %v4002
    %v4819 = vpack.c.b16 %v4007, %v4003
    %v4820 = vpack.c.b16 %v4008, %v4004
    %v4821 = vpack.c.b16 %v4013, %v4009
    %v4822 = vpack.c.b16 %v4014, %v4010
    %v4823 = vpack.c.b16 %v4015, %v4011
    %v4824 = vpack.c.b16 %v4016, %v4012
    %v4825 = vpack.c.b16 %v4021, %v4017
    %v4826 = vpack.c.b16 %v4022, %v4018
    %v4827 = vpack.c.b16 %v4023, %v4019
    %v4828 = vpack.c.b16 %v4024, %v4020
    %v4829 = vpack.c.b16 %v4029, %v4025
    %v4830 = vpack.c.b16 %v4030, %v4026
    %v4831 = vpack.c.b16 %v4031, %v4027
    %v4832 = vpack.c.b16 %v4032, %v4028
    %v4833 = vpack.c.b16 %v4037, %v4033
    %v4834 = vpack.c.b16 %v4038, %v4034
    %v4835 = vpack.c.b16 %v4039, %v4035
    %v4836 = vpack.c.b16 %v4040, %v4036
    %v4837 = vpack.c.b16 %v4045, %v4041
    %v4838 = vpack.c.b16 %v4046, %v4042
    %v4839 = vpack.c.b16 %v4047, %v4043
    %v4840 = vpack.c.b16 %v4048, %v4044
    %v4841 = vpack.c.b16 %v4053, %v4049
    %v4842 = vpack.c.b16 %v4054, %v4050
    %v4843 = vpack.c.b16 %v4055, %v4051
    %v4844 = vpack.c.b16 %v4056, %v4052
    %v4845 = vpack.c.b16 %v4061, %v4057
    %v4846 = vpack.c.b16 %v4062, %v4058
    %v4847 = vpack.c.b16 %v4063, %v4059
    %v4848 = vpack.c.b16 %v4064, %v4060
    %v4849 = vpack.c.b16 %v4069, %v4065
    %v4850 = vpack.c.b16 %v4070, %v4066
    %v4851 = vpack.c.b16 %v4071, %v4067
    %v4852 = vpack.c.b16 %v4072, %v4068
    %v4853 = vpack.c.b16 %v4077, %v4073
    %v4854 = vpack.c.b16 %v4078, %v4074
    %v4855 = vpack.c.b16 %v4079, %v4075
    %v4856 = vpack.c.b16 %v4080, %v4076
    %v4857 = vpack.c.b16 %v4085, %v4081
    %v4858 = vpack.c.b16 %v4086, %v4082
    %v4859 = vpack.c.b16 %v4087, %v4083
    %v4860 = vpack.c.b16 %v4088, %v4084
    %v4861 = vpack.c.b16 %v4093, %v4089
    %v4862 = vpack.c.b16 %v4094, %v4090
    %v4863 = vpack.c.b16 %v4095, %v4091
    %v4864 = vpack.c.b16 %v4096, %v4092
    %v4865 = vpack.c.b16 %v4101, %v4097
    %v4866 = vpack.c.b16 %v4102, %v4098
    %v4867 = vpack.c.b16 %v4103, %v4099
    %v4868 = vpack.c.b16 %v4104, %v4100
    %v4869 = vpack.c.b16 %v4109, %v4105
    %v4870 = vpack.c.b16 %v4110, %v4106
    %v4871 = vpack.c.b16 %v4111, %v4107
    %v4872 = vpack.c.b16 %v4112, %v4108
    %v4873 = vpack.c.b16 %v4117, %v4113
    %v4874 = vpack.c.b16 %v4118, %v4114
    %v4875 = vpack.c.b16 %v4119, %v4115
    %v4876 = vpack.c.b16 %v4120, %v4116
    %v4877 = vpack.c.b16 %v4125, %v4121
    %v4878 = vpack.c.b16 %v4126, %v4122
    %v4879 = vpack.c.b16 %v4127, %v4123
    %v4880 = vpack.c.b16 %v4128, %v4124
    %v4881 = vpack.c.b16 %v4133, %v4129
    %v4882 = vpack.c.b16 %v4134, %v4130
    %v4883 = vpack.c.b16 %v4135, %v4131
    %v4884 = vpack.c.b16 %v4136, %v4132
    %v4885 = vpack.c.b16 %v4141, %v4137
    %v4886 = vpack.c.b16 %v4142, %v4138
    %v4887 = vpack.c.b16 %v4143, %v4139
    %v4888 = vpack.c.b16 %v4144, %v4140
    %v4889 = vpack.c.b16 %v4149, %v4145
    %v4890 = vpack.c.b16 %v4150, %v4146
    %v4891 = vpack.c.b16 %v4151, %v4147
    %v4892 = vpack.c.b16 %v4152, %v4148
    %v4893 = vpack.c.b16 %v4157, %v4153
    %v4894 = vpack.c.b16 %v4158, %v4154
    %v4895 = vpack.c.b16 %v4159, %v4155
    %v4896 = vpack.c.b16 %v4160, %v4156
    %v4897 = vpack.c.b16 %v4165, %v4161
    %v4898 = vpack.c.b16 %v4166, %v4162
    %v4899 = vpack.c.b16 %v4167, %v4163
    %v4900 = vpack.c.b16 %v4168, %v4164
    %v4901 = vpack.c.b16 %v4173, %v4169
    %v4902 = vpack.c.b16 %v4174, %v4170
    %v4903 = vpack.c.b16 %v4175, %v4171
    %v4904 = vpack.c.b16 %v4176, %v4172
    %v4905 = vpack.c.b16 %v4181, %v4177
    %v4906 = vpack.c.b16 %v4182, %v4178
    %v4907 = vpack.c.b16 %v4183, %v4179
    %v4908 = vpack.c.b16 %v4184, %v4180
    %v4909 = vpack.c.b16 %v4189, %v4185
    %v4910 = vpack.c.b16 %v4190, %v4186
    %v4911 = vpack.c.b16 %v4191, %v4187
    %v4912 = vpack.c.b16 %v4192, %v4188
    %v4913 = vpack.c.b16 %v4197, %v4193
    %v4914 = vpack.c.b16 %v4198, %v4194
    %v4915 = vpack.c.b16 %v4199, %v4195
    %v4916 = vpack.c.b16 %v4200, %v4196
    %v4917 = vpack.c.b16 %v4205, %v4201
    %v4918 = vpack.c.b16 %v4206, %v4202
    %v4919 = vpack.c.b16 %v4207, %v4203
    %v4920 = vpack.c.b16 %v4208, %v4204
    %v4921 = vpack.c.b16 %v4213, %v4209
    %v4922 = vpack.c.b16 %v4214, %v4210
    %v4923 = vpack.c.b16 %v4215, %v4211
    %v4924 = vpack.c.b16 %v4216, %v4212
    %v4925 = vpack.c.b16 %v4221, %v4217
    %v4926 = vpack.c.b16 %v4222, %v4218
    %v4927 = vpack.c.b16 %v4223, %v4219
    %v4928 = vpack.c.b16 %v4224, %v4220
    %v4929 = vpack.c.b16 %v4229, %v4225
    %v4930 = vpack.c.b16 %v4230, %v4226
    %v4931 = vpack.c.b16 %v4231, %v4227
    %v4932 = vpack.c.b16 %v4232, %v4228
    %v4933 = vpack.c.b16 %v4237, %v4233
    %v4934 = vpack.c.b16 %v4238, %v4234
    %v4935 = vpack.c.b16 %v4239, %v4235
    %v4936 = vpack.c.b16 %v4240, %v4236
    %v4937 = vpack.c.b16 %v4245, %v4241
    %v4938 = vpack.c.b16 %v4246, %v4242
    %v4939 = vpack.c.b16 %v4247, %v4243
    %v4940 = vpack.c.b16 %v4248, %v4244
    %v4941 = vpack.c.b16 %v4253, %v4249
    %v4942 = vpack.c.b16 %v4254, %v4250
    %v4943 = vpack.c.b16 %v4255, %v4251
    %v4944 = vpack.c.b16 %v4256, %v4252
    %v4945 = vpack.c.b16 %v4261, %v4257
    %v4946 = vpack.c.b16 %v4262, %v4258
    %v4947 = vpack.c.b16 %v4263, %v4259
    %v4948 = vpack.c.b16 %v4264, %v4260
    %v4949 = vpack.c.b16 %v4269, %v4265
    %v4950 = vpack.c.b16 %v4270, %v4266
    %v4951 = vpack.c.b16 %v4271, %v4267
    %v4952 = vpack.c.b16 %v4272, %v4268
    %v4953 = vpack.c.b16 %v4277, %v4273
    %v4954 = vpack.c.b16 %v4278, %v4274
    %v4955 = vpack.c.b16 %v4279, %v4275
    %v4956 = vpack.c.b16 %v4280, %v4276
    %v4957 = vpack.c.b16 %v4285, %v4281
    %v4958 = vpack.c.b16 %v4286, %v4282
    %v4959 = vpack.c.b16 %v4287, %v4283
    %v4960 = vpack.c.b16 %v4288, %v4284
    %v4961 = vpack.c.b16 %v4293, %v4289
    %v4962 = vpack.c.b16 %v4294, %v4290
    %v4963 = vpack.c.b16 %v4295, %v4291
    %v4964 = vpack.c.b16 %v4296, %v4292
    %v4965 = vpack.c.b16 %v4301, %v4297
    %v4966 = vpack.c.b16 %v4302, %v4298
    %v4967 = vpack.c.b16 %v4303, %v4299
    %v4968 = vpack.c.b16 %v4304, %v4300
    %v4969 = vpack.c.b16 %v4309, %v4305
    %v4970 = vpack.c.b16 %v4310, %v4306
    %v4971 = vpack.c.b16 %v4311, %v4307
    %v4972 = vpack.c.b16 %v4312, %v4308
    %v4973 = vpack.c.b16 %v4317, %v4313
    %v4974 = vpack.c.b16 %v4318, %v4314
    %v4975 = vpack.c.b16 %v4319, %v4315
    %v4976 = vpack.c.b16 %v4320, %v4316
    %v4977 = vpack.c.b16 %v4325, %v4321
    %v4978 = vpack.c.b16 %v4326, %v4322
    %v4979 = vpack.c.b16 %v4327, %v4323
    %v4980 = vpack.c.b16 %v4328, %v4324
    %v4981 = vpack.c.b16 %v4333, %v4329
    %v4982 = vpack.c.b16 %v4334, %v4330
    %v4983 = vpack.c.b16 %v4335, %v4331
    %v4984 = vpack.c.b16 %v4336, %v4332
    %v4985 = vpack.c.b16 %v4341, %v4337
    %v4986 = vpack.c.b16 %v4342, %v4338
    %v4987 = vpack.c.b16 %v4343, %v4339
    %v4988 = vpack.c.b16 %v4344, %v4340
    %v4989 = vpack.c.b16 %v4349, %v4345
    %v4990 = vpack.c.b16 %v4350, %v4346
    %v4991 = vpack.c.b16 %v4351, %v4347
    %v4992 = vpack.c.b16 %v4352, %v4348
    %v4993 = vpack.c.b16 %v4357, %v4353
    %v4994 = vpack.c.b16 %v4358, %v4354
    %v4995 = vpack.c.b16 %v4359, %v4355
    %v4996 = vpack.c.b16 %v4360, %v4356
    %v4997 = vpack.c.b16 %v4365, %v4361
    %v4998 = vpack.c.b16 %v4366, %v4362
    %v4999 = vpack.c.b16 %v4367, %v4363
    %v5000 = vpack.c.b16 %v4368, %v4364
    %v5001 = vpack.c.b16 %v4373, %v4369
    %v5002 = vpack.c.b16 %v4374, %v4370
    %v5003 = vpack.c.b16 %v4375, %v4371
    %v5004 = vpack.c.b16 %v4376, %v4372
    %v5005 = vpack.c.b16 %v4381, %v4377
    %v5006 = vpack.c.b16 %v4382, %v4378
    %v5007 = vpack.c.b16 %v4383, %v4379
    %v5008 = vpack.c.b16 %v4384, %v4380
    %v5009 = vpack.c.b16 %v4389, %v4385
    %v5010 = vpack.c.b16 %v4390, %v4386
    %v5011 = vpack.c.b16 %v4391, %v4387
    %v5012 = vpack.c.b16 %v4392, %v4388
    %v5013 = vpack.c.b16 %v4397, %v4393
    %v5014 = vpack.c.b16 %v4398, %v4394
    %v5015 = vpack.c.b16 %v4399, %v4395
    %v5016 = vpack.c.b16 %v4400, %v4396
    %v5017 = vpack.c.b16 %v4405, %v4401
    %v5018 = vpack.c.b16 %v4406, %v4402
    %v5019 = vpack.c.b16 %v4407, %v4403
    %v5020 = vpack.c.b16 %v4408, %v4404
    %v5021 = vpack.c.b16 %v4413, %v4409
    %v5022 = vpack.c.b16 %v4414, %v4410
    %v5023 = vpack.c.b16 %v4415, %v4411
    %v5024 = vpack.c.b16 %v4416, %v4412
    %v5025 = vpack.c.b16 %v4421, %v4417
    %v5026 = vpack.c.b16 %v4422, %v4418
    %v5027 = vpack.c.b16 %v4423, %v4419
    %v5028 = vpack.c.b16 %v4424, %v4420
    %v5029 = vpack.c.b16 %v4429, %v4425
    %v5030 = vpack.c.b16 %v4430, %v4426
    %v5031 = vpack.c.b16 %v4431, %v4427
    %v5032 = vpack.c.b16 %v4432, %v4428
    %v5033 = vpack.c.b16 %v4437, %v4433
    %v5034 = vpack.c.b16 %v4438, %v4434
    %v5035 = vpack.c.b16 %v4439, %v4435
    %v5036 = vpack.c.b16 %v4440, %v4436
    %v5037 = vpack.c.b16 %v4445, %v4441
    %v5038 = vpack.c.b16 %v4446, %v4442
    %v5039 = vpack.c.b16 %v4447, %v4443
    %v5040 = vpack.c.b16 %v4448, %v4444
    %v5041 = vpack.c.b16 %v4453, %v4449
    %v5042 = vpack.c.b16 %v4454, %v4450
    %v5043 = vpack.c.b16 %v4455, %v4451
    %v5044 = vpack.c.b16 %v4456, %v4452
    %v5045 = vpack.c.b16 %v4461, %v4457
    %v5046 = vpack.c.b16 %v4462, %v4458
    %v5047 = vpack.c.b16 %v4463, %v4459
    %v5048 = vpack.c.b16 %v4464, %v4460
    %v5049 = vpack.c.b16 %v4469, %v4465
    %v5050 = vpack.c.b16 %v4470, %v4466
    %v5051 = vpack.c.b16 %v4471, %v4467
    %v5052 = vpack.c.b16 %v4472, %v4468
    %v5053 = vpack.c.b16 %v4477, %v4473
    %v5054 = vpack.c.b16 %v4478, %v4474
    %v5055 = vpack.c.b16 %v4479, %v4475
    %v5056 = vpack.c.b16 %v4480, %v4476
    %v5057 = vpack.c.b16 %v4485, %v4481
    %v5058 = vpack.c.b16 %v4486, %v4482
    %v5059 = vpack.c.b16 %v4487, %v4483
    %v5060 = vpack.c.b16 %v4488, %v4484
    %v5061 = vpack.c.b16 %v4493, %v4489
    %v5062 = vpack.c.b16 %v4494, %v4490
    %v5063 = vpack.c.b16 %v4495, %v4491
    %v5064 = vpack.c.b16 %v4496, %v4492
    %v5065 = vpack.c.b16 %v4501, %v4497
    %v5066 = vpack.c.b16 %v4502, %v4498
    %v5067 = vpack.c.b16 %v4503, %v4499
    %v5068 = vpack.c.b16 %v4504, %v4500
    %v5069 = vpack.c.b16 %v4509, %v4505
    %v5070 = vpack.c.b16 %v4510, %v4506
    %v5071 = vpack.c.b16 %v4511, %v4507
    %v5072 = vpack.c.b16 %v4512, %v4508
    %v5073 = vpack.c.b16 %v4517, %v4513
    %v5074 = vpack.c.b16 %v4518, %v4514
    %v5075 = vpack.c.b16 %v4519, %v4515
    %v5076 = vpack.c.b16 %v4520, %v4516
    %v5077 = vpack.c.b16 %v4525, %v4521
    %v5078 = vpack.c.b16 %v4526, %v4522
    %v5079 = vpack.c.b16 %v4527, %v4523
    %v5080 = vpack.c.b16 %v4528, %v4524
    %v5081 = vpack.c.b16 %v4533, %v4529
    %v5082 = vpack.c.b16 %v4534, %v4530
    %v5083 = vpack.c.b16 %v4535, %v4531
    %v5084 = vpack.c.b16 %v4536, %v4532
    %v5085 = vpack.c.b16 %v4541, %v4537
    %v5086 = vpack.c.b16 %v4542, %v4538
    %v5087 = vpack.c.b16 %v4543, %v4539
    %v5088 = vpack.c.b16 %v4544, %v4540
    %v5089 = vpack.c.b16 %v4549, %v4545
    %v5090 = vpack.c.b16 %v4550, %v4546
    %v5091 = vpack.c.b16 %v4551, %v4547
    %v5092 = vpack.c.b16 %v4552, %v4548
    %v5093 = vpack.c.b16 %v4557, %v4553
    %v5094 = vpack.c.b16 %v4558, %v4554
    %v5095 = vpack.c.b16 %v4559, %v4555
    %v5096 = vpack.c.b16 %v4560, %v4556
    %v5097 = vpack.c.b16 %v4565, %v4561
    %v5098 = vpack.c.b16 %v4566, %v4562
    %v5099 = vpack.c.b16 %v4567, %v4563
    %v5100 = vpack.c.b16 %v4568, %v4564
    %v5101 = vpack.c.b16 %v4573, %v4569
    %v5102 = vpack.c.b16 %v4574, %v4570
    %v5103 = vpack.c.b16 %v4575, %v4571
    %v5104 = vpack.c.b16 %v4576, %v4572
    %v5105 = vpack.c.b16 %v4581, %v4577
    %v5106 = vpack.c.b16 %v4582, %v4578
    %v5107 = vpack.c.b16 %v4583, %v4579
    %v5108 = vpack.c.b16 %v4584, %v4580
    %v5109 = vpack.c.b16 %v4589, %v4585
    %v5110 = vpack.c.b16 %v4590, %v4586
    %v5111 = vpack.c.b16 %v4591, %v4587
    %v5112 = vpack.c.b16 %v4592, %v4588
    %v5113 = vpack.c.b16 %v4597, %v4593
    %v5114 = vpack.c.b16 %v4598, %v4594
    %v5115 = vpack.c.b16 %v4599, %v4595
    %v5116 = vpack.c.b16 %v4600, %v4596
    %v5117 = vpack.c.b16 %v4605, %v4601
    %v5118 = vpack.c.b16 %v4606, %v4602
    %v5119 = vpack.c.b16 %v4607, %v4603
    %v5120 = vpack.c.b16 %v4608, %v4604
    %v5121 = vpack.c.b16 %v4613, %v4609
    %v5122 = vpack.c.b16 %v4614, %v4610
    %v5123 = vpack.c.b16 %v4615, %v4611
    %v5124 = vpack.c.b16 %v4616, %v4612
    %v5125 = vpack.c.b16 %v4621, %v4617
    %v5126 = vpack.c.b16 %v4622, %v4618
    %v5127 = vpack.c.b16 %v4623, %v4619
    %v5128 = vpack.c.b16 %v4624, %v4620
    %v5129 = vpack.c.b16 %v4629, %v4625
    %v5130 = vpack.c.b16 %v4630, %v4626
    %v5131 = vpack.c.b16 %v4631, %v4627
    %v5132 = vpack.c.b16 %v4632, %v4628
    %v5133 = vpack.c.b16 %v4637, %v4633
    %v5134 = vpack.c.b16 %v4638, %v4634
    %v5135 = vpack.c.b16 %v4639, %v4635
    %v5136 = vpack.c.b16 %v4640, %v4636
    %v5137 = vpack.c.b16 %v4645, %v4641
    %v5138 = vpack.c.b16 %v4646, %v4642
    %v5139 = vpack.c.b16 %v4647, %v4643
    %v5140 = vpack.c.b16 %v4648, %v4644
    %v5141 = vpack.c.b16 %v4653, %v4649
    %v5142 = vpack.c.b16 %v4654, %v4650
    %v5143 = vpack.c.b16 %v4655, %v4651
    %v5144 = vpack.c.b16 %v4656, %v4652
    %v5145 = vpack.c.b16 %v4661, %v4657
    %v5146 = vpack.c.b16 %v4662, %v4658
    %v5147 = vpack.c.b16 %v4663, %v4659
    %v5148 = vpack.c.b16 %v4664, %v4660
    %v5149 = vpack.c.b16 %v4669, %v4665
    %v5150 = vpack.c.b16 %v4670, %v4666
    %v5151 = vpack.c.b16 %v4671, %v4667
    %v5152 = vpack.c.b16 %v4672, %v4668
    %5633 = vmatprep.subr.bf16.mxu0 %v4674
    %5634 = vmatpush1.bf16.msra.mxu0 %v4673
    %5635 = vmatprep.subr.bf16.mxu0 %v4678
    %5636 = vmatpush1.bf16.msra.mxu0 %v4677
    %5637 = vmatprep.subr.bf16.mxu0 %v4682
    %5638 = vmatpush1.bf16.msra.mxu0 %v4681
    %5639 = vmatprep.subr.bf16.mxu0 %v4686
    %5640 = vmatpush1.bf16.msra.mxu0 %v4685
    %5641 = vmatprep.subr.bf16.mxu0 %v4690
    %5642 = vmatpush1.bf16.msra.mxu0 %v4689
    %5643 = vmatprep.subr.bf16.mxu0 %v4694
    %5644 = vmatpush1.bf16.msra.mxu0 %v4693
    %5645 = vmatprep.subr.bf16.mxu0 %v4698
    %5646 = vmatpush1.bf16.msra.mxu0 %v4697
    %5647 = vmatprep.subr.bf16.mxu0 %v4702
    %5648 = vmatpush1.bf16.msra.mxu0 %v4701
    %5649 = vmatprep.subr.bf16.mxu0 %v4706
    %5650 = vmatpush1.bf16.msra.mxu0 %v4705
    %5651 = vmatprep.subr.bf16.mxu0 %v4710
    %5652 = vmatpush1.bf16.msra.mxu0 %v4709
    %5653 = vmatprep.subr.bf16.mxu0 %v4714
    %5654 = vmatpush1.bf16.msra.mxu0 %v4713
    %5655 = vmatprep.subr.bf16.mxu0 %v4718
    %5656 = vmatpush1.bf16.msra.mxu0 %v4717
    %5657 = vmatprep.subr.bf16.mxu0 %v4722
    %5658 = vmatpush1.bf16.msra.mxu0 %v4721
    %5659 = vmatprep.subr.bf16.mxu0 %v4726
    %5660 = vmatpush1.bf16.msra.mxu0 %v4725
    %5661 = vmatprep.subr.bf16.mxu0 %v4730
    %5662 = vmatpush1.bf16.msra.mxu0 %v4729
    %5663 = vmatprep.subr.bf16.mxu0 %v4734
    %5664 = vmatpush1.bf16.msra.mxu0 %v4733
    %5665 = vmatprep.mubr.bf16.mxu0 %v2655
    %5666 = vmatmul.mubr.bf16.gmra.mrb[0].mxu0 %v2654
    %v5667 = vpop.f32.mrb[0].mxu0
    %v5668 = vadd.f32 0.0, %v5667
    %v5669 = vpop.f32.mrb[0].mxu0
    %v5670 = vadd.f32 0.0, %v5669
    %v5671 = vpop.f32.mrb[0].mxu0
    %v5672 = vadd.f32 0.0, %v5671
    %v5673 = vpop.f32.mrb[0].mxu0
    %v5674 = vadd.f32 0.0, %v5673
    %5675 = vdwg.mxu0
    %5676 = vmatprep.subr.bf16.mxu0 %v4738
    %5677 = vmatpush1.bf16.msra.mxu0 %v4737
    %5678 = vmatprep.subr.bf16.mxu0 %v4742
    %5679 = vmatpush1.bf16.msra.mxu0 %v4741
    %5680 = vmatprep.subr.bf16.mxu0 %v4746
    %5681 = vmatpush1.bf16.msra.mxu0 %v4745
    %5682 = vmatprep.subr.bf16.mxu0 %v4750
    %5683 = vmatpush1.bf16.msra.mxu0 %v4749
    %5684 = vmatprep.subr.bf16.mxu0 %v4754
    %5685 = vmatpush1.bf16.msra.mxu0 %v4753
    %5686 = vmatprep.subr.bf16.mxu0 %v4758
    %5687 = vmatpush1.bf16.msra.mxu0 %v4757
    %5688 = vmatprep.subr.bf16.mxu0 %v4762
    %5689 = vmatpush1.bf16.msra.mxu0 %v4761
    %5690 = vmatprep.subr.bf16.mxu0 %v4766
    %5691 = vmatpush1.bf16.msra.mxu0 %v4765
    %5692 = vmatprep.subr.bf16.mxu0 %v4770
    %5693 = vmatpush1.bf16.msra.mxu0 %v4769
    %5694 = vmatprep.subr.bf16.mxu0 %v4774
    %5695 = vmatpush1.bf16.msra.mxu0 %v4773
    %5696 = vmatprep.subr.bf16.mxu0 %v4778
    %5697 = vmatpush1.bf16.msra.mxu0 %v4777
    %5698 = vmatprep.subr.bf16.mxu0 %v4782
    %5699 = vmatpush1.bf16.msra.mxu0 %v4781
    %5700 = vmatprep.subr.bf16.mxu0 %v4786
    %5701 = vmatpush1.bf16.msra.mxu0 %v4785
    %5702 = vmatprep.subr.bf16.mxu0 %v4790
    %5703 = vmatpush1.bf16.msra.mxu0 %v4789
    %5704 = vmatprep.subr.bf16.mxu0 %v4794
    %5705 = vmatpush1.bf16.msra.mxu0 %v4793
    %5706 = vmatprep.subr.bf16.mxu0 %v4798
    %5707 = vmatpush1.bf16.msra.mxu0 %v4797
    %5708 = vmatprep.mubr.bf16.mxu0 %v2684
    %5709 = vmatmul.mubr.bf16.gmra.mrb[0].mxu0 %v2656
    %v5710 = vpop.f32.mrb[0].mxu0
    %v5711 = vadd.f32 %v5668, %v5710
    %v5712 = vpop.f32.mrb[0].mxu0
    %v5713 = vadd.f32 %v5670, %v5712
    %v5714 = vpop.f32.mrb[0].mxu0
    %v5715 = vadd.f32 %v5672, %v5714
    %v5716 = vpop.f32.mrb[0].mxu0
    %v5717 = vadd.f32 %v5674, %v5716
    %5718 = vdwg.mxu0
    %5719 = vmatprep.subr.bf16.mxu0 %v4802
    %5720 = vmatpush1.bf16.msra.mxu0 %v4801
    %5721 = vmatprep.subr.bf16.mxu0 %v4806
    %5722 = vmatpush1.bf16.msra.mxu0 %v4805
    %5723 = vmatprep.subr.bf16.mxu0 %v4810
    %5724 = vmatpush1.bf16.msra.mxu0 %v4809
    %5725 = vmatprep.subr.bf16.mxu0 %v4814
    %5726 = vmatpush1.bf16.msra.mxu0 %v4813
    %5727 = vmatprep.subr.bf16.mxu0 %v4818
    %5728 = vmatpush1.bf16.msra.mxu0 %v4817
    %5729 = vmatprep.subr.bf16.mxu0 %v4822
    %5730 = vmatpush1.bf16.msra.mxu0 %v4821
    %5731 = vmatprep.subr.bf16.mxu0 %v4826
    %5732 = vmatpush1.bf16.msra.mxu0 %v4825
    %5733 = vmatprep.subr.bf16.mxu0 %v4830
    %5734 = vmatpush1.bf16.msra.mxu0 %v4829
    %5735 = vmatprep.subr.bf16.mxu0 %v4834
    %5736 = vmatpush1.bf16.msra.mxu0 %v4833
    %5737 = vmatprep.subr.bf16.mxu0 %v4838
    %5738 = vmatpush1.bf16.msra.mxu0 %v4837
    %5739 = vmatprep.subr.bf16.mxu0 %v4842
    %5740 = vmatpush1.bf16.msra.mxu0 %v4841
    %5741 = vmatprep.subr.bf16.mxu0 %v4846
    %5742 = vmatpush1.bf16.msra.mxu0 %v4845
    %5743 = vmatprep.subr.bf16.mxu0 %v4850
    %5744 = vmatpush1.bf16.msra.mxu0 %v4849
    %5745 = vmatprep.subr.bf16.mxu0 %v4854
    %5746 = vmatpush1.bf16.msra.mxu0 %v4853
    %5747 = vmatprep.subr.bf16.mxu0 %v4858
    %5748 = vmatpush1.bf16.msra.mxu0 %v4857
    %5749 = vmatprep.subr.bf16.mxu0 %v4862
    %5750 = vmatpush1.bf16.msra.mxu0 %v4861
    %5751 = vmatprep.mubr.bf16.mxu0 %v2686
    %5752 = vmatmul.mubr.bf16.gmra.mrb[0].mxu0 %v2685
    %v5753 = vpop.f32.mrb[0].mxu0
    %v5754 = vadd.f32 %v5711, %v5753
    %v5755 = vpop.f32.mrb[0].mxu0
    %v5756 = vadd.f32 %v5713, %v5755
    %v5757 = vpop.f32.mrb[0].mxu0
    %v5758 = vadd.f32 %v5715, %v5757
    %v5759 = vpop.f32.mrb[0].mxu0
    %v5760 = vadd.f32 %v5717, %v5759
    %5761 = vdwg.mxu0
    %5762 = vmatprep.subr.bf16.mxu0 %v4866
    %5763 = vmatpush1.bf16.msra.mxu0 %v4865
    %5764 = vmatprep.subr.bf16.mxu0 %v4870
    %5765 = vmatpush1.bf16.msra.mxu0 %v4869
    %5766 = vmatprep.subr.bf16.mxu0 %v4874
    %5767 = vmatpush1.bf16.msra.mxu0 %v4873
    %5768 = vmatprep.subr.bf16.mxu0 %v4878
    %5769 = vmatpush1.bf16.msra.mxu0 %v4877
    %5770 = vmatprep.subr.bf16.mxu0 %v4882
    %5771 = vmatpush1.bf16.msra.mxu0 %v4881
    %5772 = vmatprep.subr.bf16.mxu0 %v4886
    %5773 = vmatpush1.bf16.msra.mxu0 %v4885
    %5774 = vmatprep.subr.bf16.mxu0 %v4890
    %5775 = vmatpush1.bf16.msra.mxu0 %v4889
    %5776 = vmatprep.subr.bf16.mxu0 %v4894
    %5777 = vmatpush1.bf16.msra.mxu0 %v4893
    %5778 = vmatprep.subr.bf16.mxu0 %v4898
    %5779 = vmatpush1.bf16.msra.mxu0 %v4897
    %5780 = vmatprep.subr.bf16.mxu0 %v4902
    %5781 = vmatpush1.bf16.msra.mxu0 %v4901
    %5782 = vmatprep.subr.bf16.mxu0 %v4906
    %5783 = vmatpush1.bf16.msra.mxu0 %v4905
    %5784 = vmatprep.subr.bf16.mxu0 %v4910
    %5785 = vmatpush1.bf16.msra.mxu0 %v4909
    %5786 = vmatprep.subr.bf16.mxu0 %v4914
    %5787 = vmatpush1.bf16.msra.mxu0 %v4913
    %5788 = vmatprep.subr.bf16.mxu0 %v4918
    %5789 = vmatpush1.bf16.msra.mxu0 %v4917
    %5790 = vmatprep.subr.bf16.mxu0 %v4922
    %5791 = vmatpush1.bf16.msra.mxu0 %v4921
    %5792 = vmatprep.subr.bf16.mxu0 %v4926
    %5793 = vmatpush1.bf16.msra.mxu0 %v4925
    %5794 = vmatprep.mubr.bf16.mxu0 %v2712
    %5795 = vmatmul.mubr.bf16.gmra.mrb[0].mxu0 %v2711
    %v5796 = vpop.f32.mrb[0].mxu0
    %v5797 = vadd.f32 %v5754, %v5796
    %v5798 = vpop.f32.mrb[0].mxu0
    %v5799 = vadd.f32 %v5756, %v5798
    %v5800 = vpop.f32.mrb[0].mxu0
    %v5801 = vadd.f32 %v5758, %v5800
    %v5802 = vpop.f32.mrb[0].mxu0
    %v5803 = vadd.f32 %v5760, %v5802
    %5804 = vdwg.mxu0
    %5805 = vmatprep.subr.bf16.mxu0 %v4930
    %5806 = vmatpush1.bf16.msra.mxu0 %v4929
    %5807 = vmatprep.subr.bf16.mxu0 %v4934
    %5808 = vmatpush1.bf16.msra.mxu0 %v4933
    %5809 = vmatprep.subr.bf16.mxu0 %v4938
    %5810 = vmatpush1.bf16.msra.mxu0 %v4937
    %5811 = vmatprep.subr.bf16.mxu0 %v4942
    %5812 = vmatpush1.bf16.msra.mxu0 %v4941
    %5813 = vmatprep.subr.bf16.mxu0 %v4946
    %5814 = vmatpush1.bf16.msra.mxu0 %v4945
    %5815 = vmatprep.subr.bf16.mxu0 %v4950
    %5816 = vmatpush1.bf16.msra.mxu0 %v4949
    %5817 = vmatprep.subr.bf16.mxu0 %v4954
    %5818 = vmatpush1.bf16.msra.mxu0 %v4953
    %5819 = vmatprep.subr.bf16.mxu0 %v4958
    %5820 = vmatpush1.bf16.msra.mxu0 %v4957
    %5821 = vmatprep.subr.bf16.mxu0 %v4962
    %5822 = vmatpush1.bf16.msra.mxu0 %v4961
    %5823 = vmatprep.subr.bf16.mxu0 %v4966
    %5824 = vmatpush1.bf16.msra.mxu0 %v4965
    %5825 = vmatprep.subr.bf16.mxu0 %v4970
    %5826 = vmatpush1.bf16.msra.mxu0 %v4969
    %5827 = vmatprep.subr.bf16.mxu0 %v4974
    %5828 = vmatpush1.bf16.msra.mxu0 %v4973
    %5829 = vmatprep.subr.bf16.mxu0 %v4978
    %5830 = vmatpush1.bf16.msra.mxu0 %v4977
    %5831 = vmatprep.subr.bf16.mxu0 %v4982
    %5832 = vmatpush1.bf16.msra.mxu0 %v4981
    %5833 = vmatprep.subr.bf16.mxu0 %v4986
    %5834 = vmatpush1.bf16.msra.mxu0 %v4985
    %5835 = vmatprep.subr.bf16.mxu0 %v4990
    %5836 = vmatpush1.bf16.msra.mxu0 %v4989
    %5837 = vmatprep.mubr.bf16.mxu0 %v2738
    %5838 = vmatmul.mubr.bf16.gmra.mrb[0].mxu0 %v2713
    %v5839 = vpop.f32.mrb[0].mxu0
    %v5840 = vadd.f32 %v5797, %v5839
    %v5841 = vpop.f32.mrb[0].mxu0
    %v5842 = vadd.f32 %v5799, %v5841
    %v5843 = vpop.f32.mrb[0].mxu0
    %v5844 = vadd.f32 %v5801, %v5843
    %v5845 = vpop.f32.mrb[0].mxu0
    %v5846 = vadd.f32 %v5803, %v5845
    %5847 = vdwg.mxu0
    %5848 = vmatprep.subr.bf16.mxu0 %v4994
    %5849 = vmatpush1.bf16.msra.mxu0 %v4993
    %5850 = vmatprep.subr.bf16.mxu0 %v4998
    %5851 = vmatpush1.bf16.msra.mxu0 %v4997
    %5852 = vmatprep.subr.bf16.mxu0 %v5002
    %5853 = vmatpush1.bf16.msra.mxu0 %v5001
    %5854 = vmatprep.subr.bf16.mxu0 %v5006
    %5855 = vmatpush1.bf16.msra.mxu0 %v5005
    %5856 = vmatprep.subr.bf16.mxu0 %v5010
    %5857 = vmatpush1.bf16.msra.mxu0 %v5009
    %5858 = vmatprep.subr.bf16.mxu0 %v5014
    %5859 = vmatpush1.bf16.msra.mxu0 %v5013
    %5860 = vmatprep.subr.bf16.mxu0 %v5018
    %5861 = vmatpush1.bf16.msra.mxu0 %v5017
    %5862 = vmatprep.subr.bf16.mxu0 %v5022
    %5863 = vmatpush1.bf16.msra.mxu0 %v5021
    %5864 = vmatprep.subr.bf16.mxu0 %v5026
    %5865 = vmatpush1.bf16.msra.mxu0 %v5025
    %5866 = vmatprep.subr.bf16.mxu0 %v5030
    %5867 = vmatpush1.bf16.msra.mxu0 %v5029
    %5868 = vmatprep.subr.bf16.mxu0 %v5034
    %5869 = vmatpush1.bf16.msra.mxu0 %v5033
    %5870 = vmatprep.subr.bf16.mxu0 %v5038
    %5871 = vmatpush1.bf16.msra.mxu0 %v5037
    %5872 = vmatprep.subr.bf16.mxu0 %v5042
    %5873 = vmatpush1.bf16.msra.mxu0 %v5041
    %5874 = vmatprep.subr.bf16.mxu0 %v5046
    %5875 = vmatpush1.bf16.msra.mxu0 %v5045
    %5876 = vmatprep.subr.bf16.mxu0 %v5050
    %5877 = vmatpush1.bf16.msra.mxu0 %v5049
    %5878 = vmatprep.subr.bf16.mxu0 %v5054
    %5879 = vmatpush1.bf16.msra.mxu0 %v5053
    %5880 = vmatprep.mubr.bf16.mxu0 %v2740
    %5881 = vmatmul.mubr.bf16.gmra.mrb[0].mxu0 %v2739
    %v5882 = vpop.f32.mrb[0].mxu0
    %v5883 = vadd.f32 %v5840, %v5882
    %v5884 = vpop.f32.mrb[0].mxu0
    %v5885 = vadd.f32 %v5842, %v5884
    %v5886 = vpop.f32.mrb[0].mxu0
    %v5887 = vadd.f32 %v5844, %v5886
    %v5888 = vpop.f32.mrb[0].mxu0
    %v5889 = vadd.f32 %v5846, %v5888
    %5890 = vdwg.mxu0
    %5891 = vmatprep.subr.bf16.mxu0 %v5058
    %5892 = vmatpush1.bf16.msra.mxu0 %v5057
    %5893 = vmatprep.subr.bf16.mxu0 %v5062
    %5894 = vmatpush1.bf16.msra.mxu0 %v5061
    %5895 = vmatprep.subr.bf16.mxu0 %v5066
    %5896 = vmatpush1.bf16.msra.mxu0 %v5065
    %5897 = vmatprep.subr.bf16.mxu0 %v5070
    %5898 = vmatpush1.bf16.msra.mxu0 %v5069
    %5899 = vmatprep.subr.bf16.mxu0 %v5074
    %5900 = vmatpush1.bf16.msra.mxu0 %v5073
    %5901 = vmatprep.subr.bf16.mxu0 %v5078
    %5902 = vmatpush1.bf16.msra.mxu0 %v5077
    %5903 = vmatprep.subr.bf16.mxu0 %v5082
    %5904 = vmatpush1.bf16.msra.mxu0 %v5081
    %5905 = vmatprep.subr.bf16.mxu0 %v5086
    %5906 = vmatpush1.bf16.msra.mxu0 %v5085
    %5907 = vmatprep.subr.bf16.mxu0 %v5090
    %5908 = vmatpush1.bf16.msra.mxu0 %v5089
    %5909 = vmatprep.subr.bf16.mxu0 %v5094
    %5910 = vmatpush1.bf16.msra.mxu0 %v5093
    %5911 = vmatprep.subr.bf16.mxu0 %v5098
    %5912 = vmatpush1.bf16.msra.mxu0 %v5097
    %5913 = vmatprep.subr.bf16.mxu0 %v5102
    %5914 = vmatpush1.bf16.msra.mxu0 %v5101
    %5915 = vmatprep.subr.bf16.mxu0 %v5106
    %5916 = vmatpush1.bf16.msra.mxu0 %v5105
    %5917 = vmatprep.subr.bf16.mxu0 %v5110
    %5918 = vmatpush1.bf16.msra.mxu0 %v5109
    %5919 = vmatprep.subr.bf16.mxu0 %v5114
    %5920 = vmatpush1.bf16.msra.mxu0 %v5113
    %5921 = vmatprep.subr.bf16.mxu0 %v5118
    %5922 = vmatpush1.bf16.msra.mxu0 %v5117
    %5923 = vmatprep.mubr.bf16.mxu0 %v2751
    %5924 = vmatmul.mubr.bf16.gmra.mrb[0].mxu0 %v2750
    %v5925 = vpop.f32.mrb[0].mxu0
    %v5926 = vadd.f32 %v5883, %v5925
    %v5927 = vpop.f32.mrb[0].mxu0
    %v5928 = vadd.f32 %v5885, %v5927
    %v5929 = vpop.f32.mrb[0].mxu0
    %v5930 = vadd.f32 %v5887, %v5929
    %v5931 = vpop.f32.mrb[0].mxu0
    %v5932 = vadd.f32 %v5889, %v5931
    %5933 = vdwg.mxu0
    %5934 = vmatprep.subr.bf16.mxu0 %v5122
    %5935 = vmatpush1.bf16.msra.mxu0 %v5121
    %5936 = vmatprep.subr.bf16.mxu0 %v5126
    %5937 = vmatpush1.bf16.msra.mxu0 %v5125
    %5938 = vmatprep.subr.bf16.mxu0 %v5130
    %5939 = vmatpush1.bf16.msra.mxu0 %v5129
    %5940 = vmatprep.subr.bf16.mxu0 %v5134
    %5941 = vmatpush1.bf16.msra.mxu0 %v5133
    %5942 = vmatprep.subr.bf16.mxu0 %v5138
    %5943 = vmatpush1.bf16.msra.mxu0 %v5137
    %5944 = vmatprep.subr.bf16.mxu0 %v5142
    %5945 = vmatpush1.bf16.msra.mxu0 %v5141
    %5946 = vmatprep.subr.bf16.mxu0 %v5146
    %5947 = vmatpush1.bf16.msra.mxu0 %v5145
    %5948 = vmatprep.subr.bf16.mxu0 %v5150
    %5949 = vmatpush1.bf16.msra.mxu0 %v5149
    %5950 = vmatprep.subr.bf16.mxu0 0
    %5951 = vmatpush1.bf16.msra.mxu0 0
    %5952 = vmatprep.subr.bf16.mxu0 0
    %5953 = vmatpush1.bf16.msra.mxu0 0
    %5954 = vmatprep.subr.bf16.mxu0 0
    %5955 = vmatpush1.bf16.msra.mxu0 0
    %5956 = vmatprep.subr.bf16.mxu0 0
    %5957 = vmatpush1.bf16.msra.mxu0 0
    %5958 = vmatprep.subr.bf16.mxu0 0
    %5959 = vmatpush1.bf16.msra.mxu0 0
    %5960 = vmatprep.subr.bf16.mxu0 0
    %5961 = vmatpush1.bf16.msra.mxu0 0
    %5962 = vmatprep.subr.bf16.mxu0 0
    %5963 = vmatpush1.bf16.msra.mxu0 0
    %5964 = vmatprep.subr.bf16.mxu0 0
    %5965 = vmatpush1.bf16.msra.mxu0 0
    %5966 = vmatprep.mubr.bf16.mxu0 0
    %5967 = vmatmul.mubr.bf16.gmra.mrb[0].mxu0 %v2752
    %v5968 = vpop.f32.mrb[0].mxu0
    %v5969 = vadd.f32 %v5926, %v5968
    %v5970 = vpop.f32.mrb[0].mxu0
    %v5971 = vadd.f32 %v5928, %v5970
    %v5972 = vpop.f32.mrb[0].mxu0
    %v5973 = vadd.f32 %v5930, %v5972
    %v5974 = vpop.f32.mrb[0].mxu0
    %v5975 = vadd.f32 %v5932, %v5974
    %5976 = vdwg.mxu0
    %5977 = vmatprep.subr.bf16.mxu0 %v4676
    %5978 = vmatpush1.bf16.msra.mxu0 %v4675
    %5979 = vmatprep.subr.bf16.mxu0 %v4680
    %5980 = vmatpush1.bf16.msra.mxu0 %v4679
    %5981 = vmatprep.subr.bf16.mxu0 %v4684
    %5982 = vmatpush1.bf16.msra.mxu0 %v4683
    %5983 = vmatprep.subr.bf16.mxu0 %v4688
    %5984 = vmatpush1.bf16.msra.mxu0 %v4687
    %5985 = vmatprep.subr.bf16.mxu0 %v4692
    %5986 = vmatpush1.bf16.msra.mxu0 %v4691
    %5987 = vmatprep.subr.bf16.mxu0 %v4696
    %5988 = vmatpush1.bf16.msra.mxu0 %v4695
    %5989 = vmatprep.subr.bf16.mxu0 %v4700
    %5990 = vmatpush1.bf16.msra.mxu0 %v4699
    %5991 = vmatprep.subr.bf16.mxu0 %v4704
    %5992 = vmatpush1.bf16.msra.mxu0 %v4703
    %5993 = vmatprep.subr.bf16.mxu0 %v4708
    %5994 = vmatpush1.bf16.msra.mxu0 %v4707
    %5995 = vmatprep.subr.bf16.mxu0 %v4712
    %5996 = vmatpush1.bf16.msra.mxu0 %v4711
    %5997 = vmatprep.subr.bf16.mxu0 %v4716
    %5998 = vmatpush1.bf16.msra.mxu0 %v4715
    %5999 = vmatprep.subr.bf16.mxu0 %v4720
    %6000 = vmatpush1.bf16.msra.mxu0 %v4719
    %6001 = vmatprep.subr.bf16.mxu0 %v4724
    %6002 = vmatpush1.bf16.msra.mxu0 %v4723
    %6003 = vmatprep.subr.bf16.mxu0 %v4728
    %6004 = vmatpush1.bf16.msra.mxu0 %v4727
    %6005 = vmatprep.subr.bf16.mxu0 %v4732
    %6006 = vmatpush1.bf16.msra.mxu0 %v4731
    %6007 = vmatprep.subr.bf16.mxu0 %v4736
    %6008 = vmatpush1.bf16.msra.mxu0 %v4735
    %6009 = vmatprep.mubr.bf16.mxu0 %v2655
    %6010 = vmatmul.mubr.bf16.gmra.mrb[0].mxu0 %v2654
    %v6011 = vpop.f32.mrb[0].mxu0
    %v6012 = vadd.f32 0.0, %v6011
    %v6013 = vpop.f32.mrb[0].mxu0
    %v6014 = vadd.f32 0.0, %v6013
    %v6015 = vpop.f32.mrb[0].mxu0
    %v6016 = vadd.f32 0.0, %v6015
    %v6017 = vpop.f32.mrb[0].mxu0
    %v6018 = vadd.f32 0.0, %v6017
    %6019 = vdwg.mxu0
    %6020 = vmatprep.subr.bf16.mxu0 %v4740
    %6021 = vmatpush1.bf16.msra.mxu0 %v4739
    %6022 = vmatprep.subr.bf16.mxu0 %v4744
    %6023 = vmatpush1.bf16.msra.mxu0 %v4743
    %6024 = vmatprep.subr.bf16.mxu0 %v4748
    %6025 = vmatpush1.bf16.msra.mxu0 %v4747
    %6026 = vmatprep.subr.bf16.mxu0 %v4752
    %6027 = vmatpush1.bf16.msra.mxu0 %v4751
    %6028 = vmatprep.subr.bf16.mxu0 %v4756
    %6029 = vmatpush1.bf16.msra.mxu0 %v4755
    %6030 = vmatprep.subr.bf16.mxu0 %v4760
    %6031 = vmatpush1.bf16.msra.mxu0 %v4759
    %6032 = vmatprep.subr.bf16.mxu0 %v4764
    %6033 = vmatpush1.bf16.msra.mxu0 %v4763
    %6034 = vmatprep.subr.bf16.mxu0 %v4768
    %6035 = vmatpush1.bf16.msra.mxu0 %v4767
    %6036 = vmatprep.subr.bf16.mxu0 %v4772
    %6037 = vmatpush1.bf16.msra.mxu0 %v4771
    %6038 = vmatprep.subr.bf16.mxu0 %v4776
    %6039 = vmatpush1.bf16.msra.mxu0 %v4775
    %6040 = vmatprep.subr.bf16.mxu0 %v4780
    %6041 = vmatpush1.bf16.msra.mxu0 %v4779
    %6042 = vmatprep.subr.bf16.mxu0 %v4784
    %6043 = vmatpush1.bf16.msra.mxu0 %v4783
    %6044 = vmatprep.subr.bf16.mxu0 %v4788
    %6045 = vmatpush1.bf16.msra.mxu0 %v4787
    %6046 = vmatprep.subr.bf16.mxu0 %v4792
    %6047 = vmatpush1.bf16.msra.mxu0 %v4791
    %6048 = vmatprep.subr.bf16.mxu0 %v4796
    %6049 = vmatpush1.bf16.msra.mxu0 %v4795
    %6050 = vmatprep.subr.bf16.mxu0 %v4800
    %6051 = vmatpush1.bf16.msra.mxu0 %v4799
    %6052 = vmatprep.mubr.bf16.mxu0 %v2684
    %6053 = vmatmul.mubr.bf16.gmra.mrb[0].mxu0 %v2656
    %v6054 = vpop.f32.mrb[0].mxu0
    %v6055 = vadd.f32 %v6012, %v6054
    %v6056 = vpop.f32.mrb[0].mxu0
    %v6057 = vadd.f32 %v6014, %v6056
    %v6058 = vpop.f32.mrb[0].mxu0
    %v6059 = vadd.f32 %v6016, %v6058
    %v6060 = vpop.f32.mrb[0].mxu0
    %v6061 = vadd.f32 %v6018, %v6060
    %6062 = vdwg.mxu0
    %6063 = vmatprep.subr.bf16.mxu0 %v4804
    %6064 = vmatpush1.bf16.msra.mxu0 %v4803
    %6065 = vmatprep.subr.bf16.mxu0 %v4808
    %6066 = vmatpush1.bf16.msra.mxu0 %v4807
    %6067 = vmatprep.subr.bf16.mxu0 %v4812
    %6068 = vmatpush1.bf16.msra.mxu0 %v4811
    %6069 = vmatprep.subr.bf16.mxu0 %v4816
    %6070 = vmatpush1.bf16.msra.mxu0 %v4815
    %6071 = vmatprep.subr.bf16.mxu0 %v4820
    %6072 = vmatpush1.bf16.msra.mxu0 %v4819
    %6073 = vmatprep.subr.bf16.mxu0 %v4824
    %6074 = vmatpush1.bf16.msra.mxu0 %v4823
    %6075 = vmatprep.subr.bf16.mxu0 %v4828
    %6076 = vmatpush1.bf16.msra.mxu0 %v4827
    %6077 = vmatprep.subr.bf16.mxu0 %v4832
    %6078 = vmatpush1.bf16.msra.mxu0 %v4831
    %6079 = vmatprep.subr.bf16.mxu0 %v4836
    %6080 = vmatpush1.bf16.msra.mxu0 %v4835
    %6081 = vmatprep.subr.bf16.mxu0 %v4840
    %6082 = vmatpush1.bf16.msra.mxu0 %v4839
    %6083 = vmatprep.subr.bf16.mxu0 %v4844
    %6084 = vmatpush1.bf16.msra.mxu0 %v4843
    %6085 = vmatprep.subr.bf16.mxu0 %v4848
    %6086 = vmatpush1.bf16.msra.mxu0 %v4847
    %6087 = vmatprep.subr.bf16.mxu0 %v4852
    %6088 = vmatpush1.bf16.msra.mxu0 %v4851
    %6089 = vmatprep.subr.bf16.mxu0 %v4856
    %6090 = vmatpush1.bf16.msra.mxu0 %v4855
    %6091 = vmatprep.subr.bf16.mxu0 %v4860
    %6092 = vmatpush1.bf16.msra.mxu0 %v4859
    %6093 = vmatprep.subr.bf16.mxu0 %v4864
    %6094 = vmatpush1.bf16.msra.mxu0 %v4863
    %6095 = vmatprep.mubr.bf16.mxu0 %v2686
    %6096 = vmatmul.mubr.bf16.gmra.mrb[0].mxu0 %v2685
    %v6097 = vpop.f32.mrb[0].mxu0
    %v6098 = vadd.f32 %v6055, %v6097
    %v6099 = vpop.f32.mrb[0].mxu0
    %v6100 = vadd.f32 %v6057, %v6099
    %v6101 = vpop.f32.mrb[0].mxu0
    %v6102 = vadd.f32 %v6059, %v6101
    %v6103 = vpop.f32.mrb[0].mxu0
    %v6104 = vadd.f32 %v6061, %v6103
    %6105 = vdwg.mxu0
    %6106 = vmatprep.subr.bf16.mxu0 %v4868
    %6107 = vmatpush1.bf16.msra.mxu0 %v4867
    %6108 = vmatprep.subr.bf16.mxu0 %v4872
    %6109 = vmatpush1.bf16.msra.mxu0 %v4871
    %6110 = vmatprep.subr.bf16.mxu0 %v4876
    %6111 = vmatpush1.bf16.msra.mxu0 %v4875
    %6112 = vmatprep.subr.bf16.mxu0 %v4880
    %6113 = vmatpush1.bf16.msra.mxu0 %v4879
    %6114 = vmatprep.subr.bf16.mxu0 %v4884
    %6115 = vmatpush1.bf16.msra.mxu0 %v4883
    %6116 = vmatprep.subr.bf16.mxu0 %v4888
    %6117 = vmatpush1.bf16.msra.mxu0 %v4887
    %6118 = vmatprep.subr.bf16.mxu0 %v4892
    %6119 = vmatpush1.bf16.msra.mxu0 %v4891
    %6120 = vmatprep.subr.bf16.mxu0 %v4896
    %6121 = vmatpush1.bf16.msra.mxu0 %v4895
    %6122 = vmatprep.subr.bf16.mxu0 %v4900
    %6123 = vmatpush1.bf16.msra.mxu0 %v4899
    %6124 = vmatprep.subr.bf16.mxu0 %v4904
    %6125 = vmatpush1.bf16.msra.mxu0 %v4903
    %6126 = vmatprep.subr.bf16.mxu0 %v4908
    %6127 = vmatpush1.bf16.msra.mxu0 %v4907
    %6128 = vmatprep.subr.bf16.mxu0 %v4912
    %6129 = vmatpush1.bf16.msra.mxu0 %v4911
    %6130 = vmatprep.subr.bf16.mxu0 %v4916
    %6131 = vmatpush1.bf16.msra.mxu0 %v4915
    %6132 = vmatprep.subr.bf16.mxu0 %v4920
    %6133 = vmatpush1.bf16.msra.mxu0 %v4919
    %6134 = vmatprep.subr.bf16.mxu0 %v4924
    %6135 = vmatpush1.bf16.msra.mxu0 %v4923
    %6136 = vmatprep.subr.bf16.mxu0 %v4928
    %6137 = vmatpush1.bf16.msra.mxu0 %v4927
    %6138 = vmatprep.mubr.bf16.mxu0 %v2712
    %6139 = vmatmul.mubr.bf16.gmra.mrb[0].mxu0 %v2711
    %v6140 = vpop.f32.mrb[0].mxu0
    %v6141 = vadd.f32 %v6098, %v6140
    %v6142 = vpop.f32.mrb[0].mxu0
    %v6143 = vadd.f32 %v6100, %v6142
    %v6144 = vpop.f32.mrb[0].mxu0
    %v6145 = vadd.f32 %v6102, %v6144
    %v6146 = vpop.f32.mrb[0].mxu0
    %v6147 = vadd.f32 %v6104, %v6146
    %6148 = vdwg.mxu0
    %6149 = vmatprep.subr.bf16.mxu0 %v4932
    %6150 = vmatpush1.bf16.msra.mxu0 %v4931
    %6151 = vmatprep.subr.bf16.mxu0 %v4936
    %6152 = vmatpush1.bf16.msra.mxu0 %v4935
    %6153 = vmatprep.subr.bf16.mxu0 %v4940
    %6154 = vmatpush1.bf16.msra.mxu0 %v4939
    %6155 = vmatprep.subr.bf16.mxu0 %v4944
    %6156 = vmatpush1.bf16.msra.mxu0 %v4943
    %6157 = vmatprep.subr.bf16.mxu0 %v4948
    %6158 = vmatpush1.bf16.msra.mxu0 %v4947
    %6159 = vmatprep.subr.bf16.mxu0 %v4952
    %6160 = vmatpush1.bf16.msra.mxu0 %v4951
    %6161 = vmatprep.subr.bf16.mxu0 %v4956
    %6162 = vmatpush1.bf16.msra.mxu0 %v4955
    %6163 = vmatprep.subr.bf16.mxu0 %v4960
    %6164 = vmatpush1.bf16.msra.mxu0 %v4959
    %6165 = vmatprep.subr.bf16.mxu0 %v4964
    %6166 = vmatpush1.bf16.msra.mxu0 %v4963
    %6167 = vmatprep.subr.bf16.mxu0 %v4968
    %6168 = vmatpush1.bf16.msra.mxu0 %v4967
    %6169 = vmatprep.subr.bf16.mxu0 %v4972
    %6170 = vmatpush1.bf16.msra.mxu0 %v4971
    %6171 = vmatprep.subr.bf16.mxu0 %v4976
    %6172 = vmatpush1.bf16.msra.mxu0 %v4975
    %6173 = vmatprep.subr.bf16.mxu0 %v4980
    %6174 = vmatpush1.bf16.msra.mxu0 %v4979
    %6175 = vmatprep.subr.bf16.mxu0 %v4984
    %6176 = vmatpush1.bf16.msra.mxu0 %v4983
    %6177 = vmatprep.subr.bf16.mxu0 %v4988
    %6178 = vmatpush1.bf16.msra.mxu0 %v4987
    %6179 = vmatprep.subr.bf16.mxu0 %v4992
    %6180 = vmatpush1.bf16.msra.mxu0 %v4991
    %6181 = vmatprep.mubr.bf16.mxu0 %v2738
    %6182 = vmatmul.mubr.bf16.gmra.mrb[0].mxu0 %v2713
    %v6183 = vpop.f32.mrb[0].mxu0
    %v6184 = vadd.f32 %v6141, %v6183
    %v6185 = vpop.f32.mrb[0].mxu0
    %v6186 = vadd.f32 %v6143, %v6185
    %v6187 = vpop.f32.mrb[0].mxu0
    %v6188 = vadd.f32 %v6145, %v6187
    %v6189 = vpop.f32.mrb[0].mxu0
    %v6190 = vadd.f32 %v6147, %v6189
    %6191 = vdwg.mxu0
    %6192 = vmatprep.subr.bf16.mxu0 %v4996
    %6193 = vmatpush1.bf16.msra.mxu0 %v4995
    %6194 = vmatprep.subr.bf16.mxu0 %v5000
    %6195 = vmatpush1.bf16.msra.mxu0 %v4999
    %6196 = vmatprep.subr.bf16.mxu0 %v5004
    %6197 = vmatpush1.bf16.msra.mxu0 %v5003
    %6198 = vmatprep.subr.bf16.mxu0 %v5008
    %6199 = vmatpush1.bf16.msra.mxu0 %v5007
    %6200 = vmatprep.subr.bf16.mxu0 %v5012
    %6201 = vmatpush1.bf16.msra.mxu0 %v5011
    %6202 = vmatprep.subr.bf16.mxu0 %v5016
    %6203 = vmatpush1.bf16.msra.mxu0 %v5015
    %6204 = vmatprep.subr.bf16.mxu0 %v5020
    %6205 = vmatpush1.bf16.msra.mxu0 %v5019
    %6206 = vmatprep.subr.bf16.mxu0 %v5024
    %6207 = vmatpush1.bf16.msra.mxu0 %v5023
    %6208 = vmatprep.subr.bf16.mxu0 %v5028
    %6209 = vmatpush1.bf16.msra.mxu0 %v5027
    %6210 = vmatprep.subr.bf16.mxu0 %v5032
    %6211 = vmatpush1.bf16.msra.mxu0 %v5031
    %6212 = vmatprep.subr.bf16.mxu0 %v5036
    %6213 = vmatpush1.bf16.msra.mxu0 %v5035
    %6214 = vmatprep.subr.bf16.mxu0 %v5040
    %6215 = vmatpush1.bf16.msra.mxu0 %v5039
    %6216 = vmatprep.subr.bf16.mxu0 %v5044
    %6217 = vmatpush1.bf16.msra.mxu0 %v5043
    %6218 = vmatprep.subr.bf16.mxu0 %v5048
    %6219 = vmatpush1.bf16.msra.mxu0 %v5047
    %6220 = vmatprep.subr.bf16.mxu0 %v5052
    %6221 = vmatpush1.bf16.msra.mxu0 %v5051
    %6222 = vmatprep.subr.bf16.mxu0 %v5056
    %6223 = vmatpush1.bf16.msra.mxu0 %v5055
    %6224 = vmatprep.mubr.bf16.mxu0 %v2740
    %6225 = vmatmul.mubr.bf16.gmra.mrb[0].mxu0 %v2739
    %v6226 = vpop.f32.mrb[0].mxu0
    %v6227 = vadd.f32 %v6184, %v6226
    %v6228 = vpop.f32.mrb[0].mxu0
    %v6229 = vadd.f32 %v6186, %v6228
    %v6230 = vpop.f32.mrb[0].mxu0
    %v6231 = vadd.f32 %v6188, %v6230
    %v6232 = vpop.f32.mrb[0].mxu0
    %v6233 = vadd.f32 %v6190, %v6232
    %6234 = vdwg.mxu0
    %6235 = vmatprep.subr.bf16.mxu0 %v5060
    %6236 = vmatpush1.bf16.msra.mxu0 %v5059
    %6237 = vmatprep.subr.bf16.mxu0 %v5064
    %6238 = vmatpush1.bf16.msra.mxu0 %v5063
    %6239 = vmatprep.subr.bf16.mxu0 %v5068
    %6240 = vmatpush1.bf16.msra.mxu0 %v5067
    %6241 = vmatprep.subr.bf16.mxu0 %v5072
    %6242 = vmatpush1.bf16.msra.mxu0 %v5071
    %6243 = vmatprep.subr.bf16.mxu0 %v5076
    %6244 = vmatpush1.bf16.msra.mxu0 %v5075
    %6245 = vmatprep.subr.bf16.mxu0 %v5080
    %6246 = vmatpush1.bf16.msra.mxu0 %v5079
    %6247 = vmatprep.subr.bf16.mxu0 %v5084
    %6248 = vmatpush1.bf16.msra.mxu0 %v5083
    %6249 = vmatprep.subr.bf16.mxu0 %v5088
    %6250 = vmatpush1.bf16.msra.mxu0 %v5087
    %6251 = vmatprep.subr.bf16.mxu0 %v5092
    %6252 = vmatpush1.bf16.msra.mxu0 %v5091
    %6253 = vmatprep.subr.bf16.mxu0 %v5096
    %6254 = vmatpush1.bf16.msra.mxu0 %v5095
    %6255 = vmatprep.subr.bf16.mxu0 %v5100
    %6256 = vmatpush1.bf16.msra.mxu0 %v5099
    %6257 = vmatprep.subr.bf16.mxu0 %v5104
    %6258 = vmatpush1.bf16.msra.mxu0 %v5103
    %6259 = vmatprep.subr.bf16.mxu0 %v5108
    %6260 = vmatpush1.bf16.msra.mxu0 %v5107
    %6261 = vmatprep.subr.bf16.mxu0 %v5112
    %6262 = vmatpush1.bf16.msra.mxu0 %v5111
    %6263 = vmatprep.subr.bf16.mxu0 %v5116
    %6264 = vmatpush1.bf16.msra.mxu0 %v5115
    %6265 = vmatprep.subr.bf16.mxu0 %v5120
    %6266 = vmatpush1.bf16.msra.mxu0 %v5119
    %6267 = vmatprep.mubr.bf16.mxu0 %v2751
    %6268 = vmatmul.mubr.bf16.gmra.mrb[0].mxu0 %v2750
    %v6269 = vpop.f32.mrb[0].mxu0
    %v6270 = vadd.f32 %v6227, %v6269
    %v6271 = vpop.f32.mrb[0].mxu0
    %v6272 = vadd.f32 %v6229, %v6271
    %v6273 = vpop.f32.mrb[0].mxu0
    %v6274 = vadd.f32 %v6231, %v6273
    %v6275 = vpop.f32.mrb[0].mxu0
    %v6276 = vadd.f32 %v6233, %v6275
    %6277 = vdwg.mxu0
    %6278 = vmatprep.subr.bf16.mxu0 %v5124
    %6279 = vmatpush1.bf16.msra.mxu0 %v5123
    %6280 = vmatprep.subr.bf16.mxu0 %v5128
    %6281 = vmatpush1.bf16.msra.mxu0 %v5127
    %6282 = vmatprep.subr.bf16.mxu0 %v5132
    %6283 = vmatpush1.bf16.msra.mxu0 %v5131
    %6284 = vmatprep.subr.bf16.mxu0 %v5136
    %6285 = vmatpush1.bf16.msra.mxu0 %v5135
    %6286 = vmatprep.subr.bf16.mxu0 %v5140
    %6287 = vmatpush1.bf16.msra.mxu0 %v5139
    %6288 = vmatprep.subr.bf16.mxu0 %v5144
    %6289 = vmatpush1.bf16.msra.mxu0 %v5143
    %6290 = vmatprep.subr.bf16.mxu0 %v5148
    %6291 = vmatpush1.bf16.msra.mxu0 %v5147
    %6292 = vmatprep.subr.bf16.mxu0 %v5152
    %6293 = vmatpush1.bf16.msra.mxu0 %v5151
    %6294 = vmatprep.subr.bf16.mxu0 0
    %6295 = vmatpush1.bf16.msra.mxu0 0
    %6296 = vmatprep.subr.bf16.mxu0 0
    %6297 = vmatpush1.bf16.msra.mxu0 0
    %6298 = vmatprep.subr.bf16.mxu0 0
    %6299 = vmatpush1.bf16.msra.mxu0 0
    %6300 = vmatprep.subr.bf16.mxu0 0
    %6301 = vmatpush1.bf16.msra.mxu0 0
    %6302 = vmatprep.subr.bf16.mxu0 0
    %6303 = vmatpush1.bf16.msra.mxu0 0
    %6304 = vmatprep.subr.bf16.mxu0 0
    %6305 = vmatpush1.bf16.msra.mxu0 0
    %6306 = vmatprep.subr.bf16.mxu0 0
    %6307 = vmatpush1.bf16.msra.mxu0 0
    %6308 = vmatprep.subr.bf16.mxu0 0
    %6309 = vmatpush1.bf16.msra.mxu0 0
    %6310 = vmatprep.mubr.bf16.mxu0 0
    %6311 = vmatmul.mubr.bf16.gmra.mrb[0].mxu0 %v2752
    %v6312 = vpop.f32.mrb[0].mxu0
    %v6313 = vadd.f32 %v6270, %v6312
    %v6314 = vpop.f32.mrb[0].mxu0
    %v6315 = vadd.f32 %v6272, %v6314
    %v6316 = vpop.f32.mrb[0].mxu0
    %v6317 = vadd.f32 %v6274, %v6316
    %v6318 = vpop.f32.mrb[0].mxu0
    %v6319 = vadd.f32 %v6276, %v6318
    %6320 = vdwg.mxu0
    %v6321 = vld [vmem:[#allocation8] sm:$0x3]
    %v6322 = vadd.f32 %v5969, %v5973
    %v6323 = vrot.slane %v6322, 4
    %v6324 = vadd.f32 %v6322, %v6323
    %v6325 = vrot.slane %v6324, 2
    %v6326 = vadd.f32 %v6324, %v6325
    %v6327 = vrot.slane %v6326, 1
    %v6328 = vadd.f32 %v6326, %v6327
    %v6329 = vadd.f32 %v5971, %v5975
    %v6330 = vrot.slane %v6329, 4
    %v6331 = vadd.f32 %v6329, %v6330
    %v6332 = vrot.slane %v6331, 2
    %v6333 = vadd.f32 %v6331, %v6332
    %v6334 = vrot.slane %v6333, 1
    %v6335 = vadd.f32 %v6333, %v6334
    %v6336 = vadd.f32 %v6313, %v6317
    %v6337 = vrot.slane %v6336, 4
    %v6338 = vadd.f32 %v6336, %v6337
    %v6339 = vrot.slane %v6338, 2
    %v6340 = vadd.f32 %v6338, %v6339
    %v6341 = vrot.slane %v6340, 1
    %v6342 = vadd.f32 %v6340, %v6341
    %v6343 = vadd.f32 %v6315, %v6319
    %v6344 = vrot.slane %v6343, 4
    %v6345 = vadd.f32 %v6343, %v6344
    %v6346 = vrot.slane %v6345, 2
    %v6347 = vadd.f32 %v6345, %v6346
    %v6348 = vrot.slane %v6347, 1
    %v6349 = vadd.f32 %v6347, %v6348
    %v6350 = vmul.f32 %v5969, %v5969
    %v6351 = vmul.f32 %v5971, %v5971
    %v6352 = vmul.f32 %v6313, %v6313
    %v6353 = vmul.f32 %v6315, %v6315
    %v6354 = vmul.f32 %v5973, %v5973
    %v6355 = vmul.f32 %v5975, %v5975
    %v6356 = vmul.f32 %v6317, %v6317
    %v6357 = vmul.f32 %v6319, %v6319
    %v6358 = vadd.f32 %v6350, %v6354
    %v6359 = vrot.slane %v6358, 4
    %v6360 = vadd.f32 %v6358, %v6359
    %v6361 = vrot.slane %v6360, 2
    %v6362 = vadd.f32 %v6360, %v6361
    %v6363 = vrot.slane %v6362, 1
    %v6364 = vadd.f32 %v6362, %v6363
    %v6365 = vadd.f32 %v6351, %v6355
    %v6366 = vrot.slane %v6365, 4
    %v6367 = vadd.f32 %v6365, %v6366
    %v6368 = vrot.slane %v6367, 2
    %v6369 = vadd.f32 %v6367, %v6368
    %v6370 = vrot.slane %v6369, 1
    %v6371 = vadd.f32 %v6369, %v6370
    %v6372 = vadd.f32 %v6352, %v6356
    %v6373 = vrot.slane %v6372, 4
    %v6374 = vadd.f32 %v6372, %v6373
    %v6375 = vrot.slane %v6374, 2
    %v6376 = vadd.f32 %v6374, %v6375
    %v6377 = vrot.slane %v6376, 1
    %v6378 = vadd.f32 %v6376, %v6377
    %v6379 = vadd.f32 %v6353, %v6357
    %v6380 = vrot.slane %v6379, 4
    %v6381 = vadd.f32 %v6379, %v6380
    %v6382 = vrot.slane %v6381, 2
    %v6383 = vadd.f32 %v6381, %v6382
    %v6384 = vrot.slane %v6383, 1
    %v6385 = vadd.f32 %v6383, %v6384
    %6387 = vrot.lane.b32.xlu0 %v6328, 64
    %v6388 = vpop.permute.xlu0 %6387
    %v6390 = vadd.f32 %v6328, %v6388
    %6392 = vrot.lane.b32.xlu0 %v6364, 64
    %v6393 = vpop.permute.xlu0 %6392
    %v6395 = vadd.f32 %v6364, %v6393
    %v6396 = vadd.f32 %v6390, %v6335
    %v6397 = vadd.f32 %v6395, %v6371
    %6399 = vrot.lane.b32.xlu0 %v6335, 64
    %v6400 = vpop.permute.xlu0 %6399
    %v6402 = vadd.f32 %v6396, %v6400
    %6404 = vrot.lane.b32.xlu0 %v6371, 64
    %v6405 = vpop.permute.xlu0 %6404
    %v6407 = vadd.f32 %v6397, %v6405
    %v6408 = vadd.f32 %v6402, %v6342
    %v6409 = vadd.f32 %v6407, %v6378
    %6411 = vrot.lane.b32.xlu0 %v6342, 64
    %v6412 = vpop.permute.xlu0 %6411
    %v6414 = vadd.f32 %v6408, %v6412
    %6416 = vrot.lane.b32.xlu0 %v6378, 64
    %v6417 = vpop.permute.xlu0 %6416
    %v6419 = vadd.f32 %v6409, %v6417
    %v6420 = vadd.f32 %v6414, %v6349
    %v6421 = vadd.f32 %v6419, %v6385
    %6423 = vrot.lane.b32.xlu0 %v6349, 64
    %v6424 = vpop.permute.xlu0 %6423
    %v6426 = vadd.f32 %v6420, %v6424
    %6428 = vrot.lane.b32.xlu0 %v6385, 64
    %v6429 = vpop.permute.xlu0 %6428
    %v6431 = vadd.f32 %v6421, %v6429
    %v6432 = vrcp.pop 128.0
    %v6433 = vmul.f32 %v6426, %v6432
    %v6434 = vmul.f32 %v6431, %v6432
    %v6435 = vmul.f32 %v6433, %v6433
    %v6436 = vsub.f32 %v6434, %v6435
    %v6437 = vmax.f32 %v6436, 0.0
    %v6438 = vadd.f32 %v6437, 1e-05
    %v6439 = vrsqrt.pop %v6438
    %v6440 = vmul.f32 %v6321, %v6439
    %v6441 = vmul.f32 %v6433, %v6440
    %v6443 = vrot.slane %v6441, 7
    %v6445 = vsub.f32 %v6321, %v6443
    %6447 = vrot.lane.b32.xlu0 %v6440, 64
    %v6448 = vpop.permute.xlu0 %6447
    %v6450 = vsel %vm2467, %v6440, %v6448
    %6452 = vrot.lane.b32.xlu0 %v6445, 64
    %v6453 = vpop.permute.xlu0 %6452
    %v6455 = vsel %vm2467, %v6445, %v6453
    %v6456 = vlaneseq
    %v6457 = vshrl.u32 %v6456, 7
    %v6458 = vsub.s32 0, %v6457
    %v6459 = vrot.slane %v6450, %v6458
    %v6460 = vmul.f32 %v5969, %v6459
    %v6461 = vmul.f32 %v5971, %v6459
    %v6462 = vmul.f32 %v6313, %v6459
    %v6463 = vmul.f32 %v5973, %v6459
    %v6464 = vmul.f32 %v5975, %v6459
    %v6465 = vmul.f32 %v6317, %v6459
    %v6466 = vlaneseq
    %v6467 = vshrl.u32 %v6466, 7
    %v6468 = vsub.s32 1, %v6467
    %v6469 = vrot.slane %v6455, %v6468
    %v6470 = vadd.f32 %v6460, %v6469
    %v6471 = vadd.f32 %v6461, %v6469
    %v6472 = vadd.f32 %v6462, %v6469
    %v6473 = vadd.f32 %v6463, %v6469
    %v6474 = vadd.f32 %v6464, %v6469
    %v6475 = vadd.f32 %v6465, %v6469
    %v6476 = vsel %vm162, %v6470, -inf
    %v6477 = vrot.slane %v6476, 4
    %v6478 = vmax.f32 %v6476, %v6477
    %v6479 = vrot.slane %v6478, 2
    %v6480 = vmax.f32 %v6478, %v6479
    %v6481 = vrot.slane %v6480, 1
    %v6482 = vmax.f32 %v6480, %v6481
    %v6483 = vsel %vm162, %v6471, -inf
    %v6484 = vrot.slane %v6483, 4
    %v6485 = vmax.f32 %v6483, %v6484
    %v6486 = vrot.slane %v6485, 2
    %v6487 = vmax.f32 %v6485, %v6486
    %v6488 = vrot.slane %v6487, 1
    %v6489 = vmax.f32 %v6487, %v6488
    %v6490 = vsel %vm162, %v6472, -inf
    %v6491 = vrot.slane %v6490, 4
    %v6492 = vmax.f32 %v6490, %v6491
    %v6493 = vrot.slane %v6492, 2
    %v6494 = vmax.f32 %v6492, %v6493
    %v6495 = vrot.slane %v6494, 1
    %v6496 = vmax.f32 %v6494, %v6495
    %6499 = vrot.lane.b32.xlu0 %v6482, 64
    %v6500 = vpop.permute.xlu0 %6499
    %6501 = vrot.lane.b32.xlu0 %v6489, 64
    %v6502 = vpop.permute.xlu0 %6501
    %v6503 = vsel %vm2467, %v6500, %v6502
    %v6505 = vmax.f32 %v6482, %v6503
    %v6506 = vmax.f32 %v6505, %v6489
    %6508 = vrot.lane.b32.xlu0 %v6496, 64
    %v6509 = vpop.permute.xlu0 %6508
    %v6510 = vsel %vm2467, %v6502, %v6509
    %v6512 = vmax.f32 %v6506, %v6510
    %v6513 = vmax.f32 %v6512, %v6496
    %vm6514 = vcmp.gt.f32.partialorder %v6513, 20.0
    %v6515 = vmin.f32 %v6513, 20.0
    %v6516 = vmul.f32 %v6515, 1.442695
    %v6517 = vpow.pop %v6516
    %v6518 = vadd.f32 %v6517, 1.0
    %v6519 = vlog2.pop %v6518
    %v6520 = vmul.f32 %v6519, 0.6931472
    %v6521 = vmul.f32 -0.5, %v6517
    %v6522 = vadd.f32 %v6521, 1.0
    %v6523 = vmul.f32 %v6522, %v6517
    %v6524 = vand.u32 2147483647, %v6517
    %vm6525 = vcmp.lt.f32.partialorder %v6524, 0.0004427343
    %v6526 = vsel %vm6525, %v6523, %v6520
    %v6527 = vsel %vm6514, %v6513, %v6526
    %v6528 = vsel %vm162, %v6473, -inf
    %v6529 = vrot.slane %v6528, 4
    %v6530 = vmax.f32 %v6528, %v6529
    %v6531 = vrot.slane %v6530, 2
    %v6532 = vmax.f32 %v6530, %v6531
    %v6533 = vrot.slane %v6532, 1
    %v6534 = vmax.f32 %v6532, %v6533
    %v6535 = vsel %vm162, %v6474, -inf
    %v6536 = vrot.slane %v6535, 4
    %v6537 = vmax.f32 %v6535, %v6536
    %v6538 = vrot.slane %v6537, 2
    %v6539 = vmax.f32 %v6537, %v6538
    %v6540 = vrot.slane %v6539, 1
    %v6541 = vmax.f32 %v6539, %v6540
    %v6542 = vsel %vm162, %v6475, -inf
    %v6543 = vrot.slane %v6542, 4
    %v6544 = vmax.f32 %v6542, %v6543
    %v6545 = vrot.slane %v6544, 2
    %v6546 = vmax.f32 %v6544, %v6545
    %v6547 = vrot.slane %v6546, 1
    %v6548 = vmax.f32 %v6546, %v6547
    %6551 = vrot.lane.b32.xlu0 %v6534, 64
    %v6552 = vpop.permute.xlu0 %6551
    %6553 = vrot.lane.b32.xlu0 %v6541, 64
    %v6554 = vpop.permute.xlu0 %6553
    %v6555 = vsel %vm2467, %v6552, %v6554
    %v6557 = vmax.f32 %v6534, %v6555
    %v6558 = vmax.f32 %v6557, %v6541
    %6560 = vrot.lane.b32.xlu0 %v6548, 64
    %v6561 = vpop.permute.xlu0 %6560
    %v6562 = vsel %vm2467, %v6554, %v6561
    %v6564 = vmax.f32 %v6558, %v6562
    %v6565 = vmax.f32 %v6564, %v6548
    %vm6566 = vcmp.gt.f32.partialorder %v6565, 20.0
    %v6567 = vmin.f32 %v6565, 20.0
    %v6568 = vmul.f32 %v6567, 1.442695
    %v6569 = vpow.pop %v6568
    %v6570 = vadd.f32 %v6569, 1.0
    %v6571 = vlog2.pop %v6570
    %v6572 = vmul.f32 %v6571, 0.6931472
    %v6573 = vmul.f32 -0.5, %v6569
    %v6574 = vadd.f32 %v6573, 1.0
    %v6575 = vmul.f32 %v6574, %v6569
    %v6576 = vand.u32 2147483647, %v6569
    %vm6577 = vcmp.lt.f32.partialorder %v6576, 0.0004427343
    %v6578 = vsel %vm6577, %v6575, %v6572
    %v6579 = vsel %vm6566, %v6565, %v6578
    %v6581 = vrot.slane %v6579, 7
    %v6583 = vsel %vm173, %v6527, %v6581
    %vm6584 = vcmask 517120
    %6585 = vst.msk [vmem:[#allocation10] sm:$0x3] %vm6584, %v6583
    // Predicated region
    $region38: #{space_feature_forward.1} parent=1 // pred_check
      _
    $region39: #{space_feature_forward.1} parent=1 // pred_check_branch
      %6587 = sbr.rel (0) target = $region41
    $region40: #{space_feature_forward.1} parent=1 // pred_region
      %s6589 = ssub.s32 32, 32
      %6590 = vsyncadd [#allocation4], %s6589
      %s6592 = sshll.u32 [#allocation10], 4
      %s6593 = int_to_ptr.vmem [resolvable:$true] %s6592
      %6595 = dma.vmem_to_hbm [thread:$0]  %s6593, 32, %s5, [#allocation4]
    $region41: #{space_feature_forward.1} parent=1 // pred_fallthru
      _
    // Predicated region
    $region42: #{space_feature_forward.1} parent=1 // pred_check
      _
    $region43: #{space_feature_forward.1} parent=1 // pred_check_branch
      %6597 = sbr.rel (0) target = $region45
    $region44: #{space_feature_forward.1} parent=1 // pred_region
      %6598 = dma.done [#allocation4], 32
    $region45: #{space_feature_forward.1} parent=1 // pred_fallthru
      _
    %6599 = vsyncpa [#allocation3], 1
    %6600 = vsyncpa [#allocation6], 1
    %6601 = vsyncpa [#allocation9], 1
    %6602 = vsyncpa [#allocation4], 1

</llo_original>
